<compile_context>
chip_gen: v6e
topology: v6e:2x2x1
jax: 0.10.0
libtpu: 0.0.40
codegen_flags: <defaults>
</compile_context>

<pallas_src>
import jax
import jax.numpy as jnp
from jax.experimental import pallas as pl
from jax.experimental.pallas import tpu as pltpu


LANE = 128          # pad every feature axis to a multiple of the lane width
BATCH_ALIGN = 16    # bf16 sublane-pack granularity for the batch axis


def _round_up(n, m):
    return ((n + m - 1) // m) * m


def _pick_batch_tile(batch, *, max_tile=256, target_steps=4):
    """Tile the batch into ~target_steps grid steps (>=2 per v7x TensorCore,
    2-4 on single-TC v5e/v6e) with >=128-row tiles when the batch allows,
    deriving the tile from the actual batch to keep padding waste small."""
    bt = _round_up(max(1, -(-batch // target_steps)), BATCH_ALIGN)
    full = _round_up(batch, BATCH_ALIGN)
    bt = max(min(bt, max_tile), min(128, full))
    return min(bt, full)


def _generic_block_kernel(
    x_ref,                       # (bt, B_p)                 bf16
    w1_ref, b1_ref,              # (B_p, U_p) bf16 / (1, U_p) f32
    w2_ref, b2_ref,
    w3_ref, b3_ref,
    w4_ref, b4_ref,
    wth_ref,                     # (U_p, TH_P) bf16          packed [theta_b|theta_f]
    wproj_ref, bproj_ref,        # (TH_P, B_p+F_p) bf16 block-diag / (1, B_p+F_p) f32
    out_ref,                     # (bt, B_p+F_p) bf16        [backcast | forecast]
):
    """Whole GenericBlock forward for one batch tile, fully in VMEM."""

    def linear_relu(h_bf16, w_ref, b_ref):
        # bf16 operands on the MXU, f32 accumulation; bias add + ReLU in f32 (VPU).
        y = jnp.dot(h_bf16, w_ref[...], preferred_element_type=jnp.float32)
        return jnp.maximum(y + b_ref[...], 0.0)

    h = linear_relu(x_ref[...], w1_ref, b1_ref)
    h = linear_relu(h.astype(jnp.bfloat16), w2_ref, b2_ref)
    h = linear_relu(h.astype(jnp.bfloat16), w3_ref, b3_ref)
    h = linear_relu(h.astype(jnp.bfloat16), w4_ref, b4_ref)

    # Fused theta projection: one dot producing the packed [theta_b | theta_f]
    # slab (both halves inside 128 lanes for thetas_dim=8), then ReLU.
    theta = jnp.maximum(
        jnp.dot(h.astype(jnp.bfloat16), wth_ref[...],
                preferred_element_type=jnp.float32), 0.0)

    # Fused block-diagonal output projection: [backcast | forecast] in one dot.
    out = jnp.dot(theta.astype(jnp.bfloat16), wproj_ref[...],
                  preferred_element_type=jnp.float32) + bproj_ref[...]
    out_ref[...] = out.astype(out_ref.dtype)


def pack_params(params, backcast_length, forecast_length):
    """Pad feature axes to 128 lanes, pack theta_b/theta_f into one lane slab,
    fuse the two output projections block-diagonally, cast weights to bf16."""
    (w1, b1, w2, b2, w3, b3, w4, b4,
     wtb, wtf, wback, bback, wfore, bfore) = params
    units = w1.shape[1]
    td = wtb.shape[1]

    B_p = _round_up(backcast_length, LANE)
    U_p = _round_up(units, LANE)
    TH_P = _round_up(2 * td, LANE)        # packed theta slab (128 for td<=64)
    F_p = _round_up(forecast_length, LANE)

    bf16, f32 = jnp.bfloat16, jnp.float32

    def pad2(a, rows, cols):
        return jnp.pad(a, ((0, rows - a.shape[0]), (0, cols - a.shape[1])))

    w1p = pad2(w1, B_p, U_p).astype(bf16)
    w2p = pad2(w2, U_p, U_p).astype(bf16)
    w3p = pad2(w3, U_p, U_p).astype(bf16)
    w4p = pad2(w4, U_p, U_p).astype(bf16)
    b1p = pad2(b1, 1, U_p).astype(f32)
    b2p = pad2(b2, 1, U_p).astype(f32)
    b3p = pad2(b3, 1, U_p).astype(f32)
    b4p = pad2(b4, 1, U_p).astype(f32)

    # Packed theta weight: theta_b in lanes [0, td), theta_f in lanes [td, 2*td),
    # remaining lanes zero.  One (U_p, TH_P) dot replaces two tiny U->td dots.
    wth = jnp.zeros((U_p, TH_P), f32)
    wth = wth.at[:units, :td].set(wtb)
    wth = wth.at[:units, td:2 * td].set(wtf)
    wth = wth.astype(bf16)

    # Block-diagonal fused projection producing [backcast | forecast]:
    # rows [0, td)   * lanes [0, backcast_length)       <- wback
    # rows [td, 2td) * lanes [B_p, B_p+forecast_length) <- wfore
    wproj = jnp.zeros((TH_P, B_p + F_p), f32)
    wproj = wproj.at[:td, :backcast_length].set(wback)
    wproj = wproj.at[td:2 * td, B_p:B_p + forecast_length].set(wfore)
    wproj = wproj.astype(bf16)

    bproj = jnp.zeros((1, B_p + F_p), f32)
    bproj = bproj.at[:, :backcast_length].set(bback)
    bproj = bproj.at[:, B_p:B_p + forecast_length].set(bfore)

    packed = (w1p, b1p, w2p, b2p, w3p, b3p, w4p, b4p, wth, wproj, bproj)
    return packed, (B_p, U_p, TH_P, F_p)


def generic_block_forward(x, params, *, max_batch_tile=256,
                          out_dtype=jnp.bfloat16):
    """x: (batch, backcast_length) float32. Returns (backcast, forecast)."""
    batch, backcast_length = x.shape
    forecast_length = params[12].shape[1]          # wfore: (thetas_dim, forecast_length)

    packed, (B_p, U_p, TH_P, F_p) = pack_params(params, backcast_length,
                                                forecast_length)
    OUT_p = B_p + F_p

    bt = _pick_batch_tile(batch, max_tile=max_batch_tile)
    batch_p = _round_up(batch, bt)
    grid = (batch_p // bt,)

    # Pad + cast x; with allow_input_fusion on operand 0 this fuses into the
    # pallas_call under jit instead of materializing a padded bf16 copy in HBM.
    x_p = jnp.pad(x, ((0, batch_p - batch), (0, B_p - backcast_length)))
    x_p = x_p.astype(jnp.bfloat16)

    def const_spec(shape):
        # Grid-invariant parameter: whole array is one block, same block index
        # every step (Pallas keeps it resident, no re-DMA).
        # TODO(synk): pipeline_mode=pl.Buffered(1) would drop the unused second
        # VMEM buffer; skipped for lowering portability (footprint is tiny).
        return pl.BlockSpec(shape, lambda i: (0, 0))

    in_specs = [pl.BlockSpec((bt, B_p), lambda i: (i, 0))]          # x tile
    in_specs += [const_spec(p.shape) for p in packed]               # weights/biases

    out_specs = pl.BlockSpec((bt, OUT_p), lambda i: (i, 0))
    out_shape = jax.ShapeDtypeStruct((batch_p, OUT_p), out_dtype)

    # Advisory cost estimate so XLA schedules neighbors around this short call.
    param_bytes = sum(int(p.size) * p.dtype.itemsize for p in packed)
    out_itemsize = jnp.finfo(out_dtype).bits // 8
    flops = 2 * batch_p * (B_p * U_p + 3 * U_p * U_p + U_p * TH_P + TH_P * OUT_p)
    bytes_accessed = (batch_p * B_p * 2 + param_bytes
                      + batch_p * OUT_p * out_itemsize)

    fn = pl.pallas_call(
        _generic_block_kernel,
        out_shape=out_shape,
        grid_spec=pltpu.PrefetchScalarGridSpec(
            num_scalar_prefetch=0,
            grid=grid,
            in_specs=in_specs,
            out_specs=out_specs,
        ),
        compiler_params=pltpu.CompilerParams(
            dimension_semantics=("parallel",),
            allow_input_fusion=[True] + [False] * len(packed),
        ),
        cost_estimate=pl.CostEstimate(
            flops=flops, transcendentals=0, bytes_accessed=bytes_accessed),
    )
    out = fn(x_p, *packed)                          # (batch_p, B_p + F_p) bf16

    # TODO(synk): a fused N-BEATS stack would consume the padded slab directly
    # (keeping the residual chain in VMEM) instead of slicing it back out here.
    backcast = out[:batch, :backcast_length]
    forecast = out[:batch, B_p:B_p + forecast_length]
    return backcast, forecast


def init_params(key, backcast_length, forecast_length, units, thetas_dim):
    """Deterministic synthetic parameters. Weights stored as (in, out), f32."""
    keys = jax.random.split(key, 14)
    s = 0.05

    def w(k, i, o):
        return s * jax.random.normal(k, (i, o), dtype=jnp.float32)

    def b(k, o):
        return s * jax.random.normal(k, (1, o), dtype=jnp.float32)

    w1 = w(keys[0], backcast_length, units); b1 = b(keys[1], units)
    w2 = w(keys[2], units, units);           b2 = b(keys[3], units)
    w3 = w(keys[4], units, units);           b3 = b(keys[5], units)
    w4 = w(keys[6], units, units);           b4 = b(keys[7], units)
    wtb = w(keys[8], units, thetas_dim)      # no bias (share_thetas=False)
    wtf = w(keys[9], units, thetas_dim)      # no bias
    wback = w(keys[10], thetas_dim, backcast_length)
    bback = b(keys[11], backcast_length)
    wfore = w(keys[12], thetas_dim, forecast_length)
    bfore = b(keys[13], forecast_length)
    return (w1, b1, w2, b2, w3, b3, w4, b4,
            wtb, wtf, wback, bback, wfore, bfore)


def reference_forward(x, params, *, matmul_dtype=jnp.float32):
    """Pure-JAX reference.  matmul_dtype=bf16 mimics the kernel's MXU numerics."""
    (w1, b1, w2, b2, w3, b3, w4, b4,
     wtb, wtf, wback, bback, wfore, bfore) = params

    def mm(a, b):
        return jnp.dot(a.astype(matmul_dtype), b.astype(matmul_dtype),
                       preferred_element_type=jnp.float32)

    h = jnp.maximum(mm(x, w1) + b1, 0.0)
    h = jnp.maximum(mm(h, w2) + b2, 0.0)
    h = jnp.maximum(mm(h, w3) + b3, 0.0)
    h = jnp.maximum(mm(h, w4) + b4, 0.0)
    tb = jnp.maximum(mm(h, wtb), 0.0)
    tf = jnp.maximum(mm(h, wtf), 0.0)
    return mm(tb, wback) + bback, mm(tf, wfore) + bfore


if __name__ == "__main__":
    # Module-consistent dims: backcast_length = 7*96, forecast_length = 96.
    # batch=512 -> 4 "parallel" grid steps of 128 rows (>=2 per v7x TC,
    # 4 steps on single-TC v5e/v6e so DMA overlaps compute).
    batch = 512
    backcast_length = 7 * 96        # 672
    forecast_length = 96
    units = 128
    thetas_dim = 8

    key = jax.random.PRNGKey(0)
    k_x, k_p = jax.random.split(key)
    x = jax.random.normal(k_x, (batch, backcast_length), dtype=jnp.float32)
    params = init_params(k_p, backcast_length, forecast_length, units, thetas_dim)

    fwd = jax.jit(generic_block_forward)   # jit so pad/cast fuses into the call
    backcast, forecast = fwd(x, params)
    backcast = jax.block_until_ready(backcast)
    forecast = jax.block_until_ready(forecast)

    assert backcast.shape == (batch, backcast_length)
    assert forecast.shape == (batch, forecast_length)

    backcast_f32 = backcast.astype(jnp.float32)
    forecast_f32 = forecast.astype(jnp.float32)

    # Tight check vs a bf16-matmul reference (same MXU numerics; kernel output
    # is bf16, hence the small extra absolute slack) ...
    rb_bf, rf_bf = reference_forward(x, params, matmul_dtype=jnp.bfloat16)
    assert jnp.allclose(backcast_f32, rb_bf, atol=3e-3, rtol=2e-2)
    assert jnp.allclose(forecast_f32, rf_bf, atol=3e-3, rtol=2e-2)
    # ... and a loose sanity check vs the pure-f32 reference (bf16 matmuls and
    # bf16 output change numerics slightly, as expected for inference).
    rb_f32, rf_f32 = reference_forward(x, params, matmul_dtype=jnp.float32)
    assert jnp.allclose(backcast_f32, rb_f32, atol=1e-2, rtol=1e-1)
    assert jnp.allclose(forecast_f32, rf_f32, atol=1e-2, rtol=1e-1)

    print("KERNEL_OK")
</pallas_src>

<mosaic_0001>
module attributes {stable_mosaic.version = 11 : i64} {
  func.func @_generic_block_kernel(%arg0: i32, %arg1: memref<128x768xbf16, #tpu.memory_space<vmem>>, %arg2: memref<768x128xbf16, #tpu.memory_space<vmem>>, %arg3: memref<1x128xf32, #tpu.memory_space<vmem>>, %arg4: memref<128x128xbf16, #tpu.memory_space<vmem>>, %arg5: memref<1x128xf32, #tpu.memory_space<vmem>>, %arg6: memref<128x128xbf16, #tpu.memory_space<vmem>>, %arg7: memref<1x128xf32, #tpu.memory_space<vmem>>, %arg8: memref<128x128xbf16, #tpu.memory_space<vmem>>, %arg9: memref<1x128xf32, #tpu.memory_space<vmem>>, %arg10: memref<128x128xbf16, #tpu.memory_space<vmem>>, %arg11: memref<128x896xbf16, #tpu.memory_space<vmem>>, %arg12: memref<1x896xf32, #tpu.memory_space<vmem>>, %arg13: memref<128x896xbf16, #tpu.memory_space<vmem>>) attributes {dimension_semantics = [#tpu.dimension_semantics<parallel>], iteration_bounds = array<i64: 4>, scalar_prefetch = 0 : i64, scratch_operands = 0 : i64, tpu.core_type = #tpu.core_type<tc>, window_params = [{transform_indices = @transform_0, window_bounds = array<i64: 128, 768>}, {pipeline_mode = #tpu.pipeline_mode<synchronous>, transform_indices = @transform_1, window_bounds = array<i64: 768, 128>}, {pipeline_mode = #tpu.pipeline_mode<synchronous>, transform_indices = @transform_2, window_bounds = array<i64: 1, 128>}, {pipeline_mode = #tpu.pipeline_mode<synchronous>, transform_indices = @transform_3, window_bounds = array<i64: 128, 128>}, {pipeline_mode = #tpu.pipeline_mode<synchronous>, transform_indices = @transform_4, window_bounds = array<i64: 1, 128>}, {pipeline_mode = #tpu.pipeline_mode<synchronous>, transform_indices = @transform_5, window_bounds = array<i64: 128, 128>}, {pipeline_mode = #tpu.pipeline_mode<synchronous>, transform_indices = @transform_6, window_bounds = array<i64: 1, 128>}, {pipeline_mode = #tpu.pipeline_mode<synchronous>, transform_indices = @transform_7, window_bounds = array<i64: 128, 128>}, {pipeline_mode = #tpu.pipeline_mode<synchronous>, transform_indices = @transform_8, window_bounds = array<i64: 1, 128>}, {pipeline_mode = #tpu.pipeline_mode<synchronous>, transform_indices = @transform_9, window_bounds = array<i64: 128, 128>}, {pipeline_mode = #tpu.pipeline_mode<synchronous>, transform_indices = @transform_10, window_bounds = array<i64: 128, 896>}, {pipeline_mode = #tpu.pipeline_mode<synchronous>, transform_indices = @transform_11, window_bounds = array<i64: 1, 896>}, {transform_indices = @transform_12, window_bounds = array<i64: 128, 896>}]} {
    %c0 = arith.constant 0 : index
    %c0_0 = arith.constant 0 : index
    %0 = vector.load %arg1[%c0, %c0_0] : memref<128x768xbf16, #tpu.memory_space<vmem>>, vector<128x768xbf16>
    %c0_1 = arith.constant 0 : index
    %c0_2 = arith.constant 0 : index
    %1 = vector.load %arg2[%c0_1, %c0_2] : memref<768x128xbf16, #tpu.memory_space<vmem>>, vector<768x128xbf16>
    %cst = arith.constant dense<0.000000e+00> : vector<128x128xf32>
    %2 = tpu.matmul %0, %1, %cst {dimension_numbers = #tpu.dot_dimension_numbers<[1], [0], [0], [1], [0, 0, 1, 1], [], []>} : vector<128x768xbf16>, vector<768x128xbf16>, vector<128x128xf32> -> vector<128x128xf32>
    %c0_3 = arith.constant 0 : index
    %c0_4 = arith.constant 0 : index
    %3 = vector.load %arg3[%c0_3, %c0_4] : memref<1x128xf32, #tpu.memory_space<vmem>>, vector<1x128xf32>
    %4 = vector.broadcast %3 : vector<1x128xf32> to vector<128x128xf32>
    %5 = arith.addf %2, %4 : vector<128x128xf32>
    %cst_5 = arith.constant 0.000000e+00 : f32
    %6 = vector.broadcast %cst_5 : f32 to vector<128x128xf32>
    %7 = arith.maximumf %5, %6 : vector<128x128xf32>
    %8 = arith.truncf %7 : vector<128x128xf32> to vector<128x128xbf16>
    %c0_6 = arith.constant 0 : index
    %c0_7 = arith.constant 0 : index
    %9 = vector.load %arg4[%c0_6, %c0_7] : memref<128x128xbf16, #tpu.memory_space<vmem>>, vector<128x128xbf16>
    %cst_8 = arith.constant dense<0.000000e+00> : vector<128x128xf32>
    %10 = tpu.matmul %8, %9, %cst_8 {dimension_numbers = #tpu.dot_dimension_numbers<[1], [0], [0], [1], [0, 0, 1, 1], [], []>} : vector<128x128xbf16>, vector<128x128xbf16>, vector<128x128xf32> -> vector<128x128xf32>
    %c0_9 = arith.constant 0 : index
    %c0_10 = arith.constant 0 : index
    %11 = vector.load %arg5[%c0_9, %c0_10] : memref<1x128xf32, #tpu.memory_space<vmem>>, vector<1x128xf32>
    %12 = vector.broadcast %11 : vector<1x128xf32> to vector<128x128xf32>
    %13 = arith.addf %10, %12 : vector<128x128xf32>
    %cst_11 = arith.constant 0.000000e+00 : f32
    %14 = vector.broadcast %cst_11 : f32 to vector<128x128xf32>
    %15 = arith.maximumf %13, %14 : vector<128x128xf32>
    %16 = arith.truncf %15 : vector<128x128xf32> to vector<128x128xbf16>
    %c0_12 = arith.constant 0 : index
    %c0_13 = arith.constant 0 : index
    %17 = vector.load %arg6[%c0_12, %c0_13] : memref<128x128xbf16, #tpu.memory_space<vmem>>, vector<128x128xbf16>
    %cst_14 = arith.constant dense<0.000000e+00> : vector<128x128xf32>
    %18 = tpu.matmul %16, %17, %cst_14 {dimension_numbers = #tpu.dot_dimension_numbers<[1], [0], [0], [1], [0, 0, 1, 1], [], []>} : vector<128x128xbf16>, vector<128x128xbf16>, vector<128x128xf32> -> vector<128x128xf32>
    %c0_15 = arith.constant 0 : index
    %c0_16 = arith.constant 0 : index
    %19 = vector.load %arg7[%c0_15, %c0_16] : memref<1x128xf32, #tpu.memory_space<vmem>>, vector<1x128xf32>
    %20 = vector.broadcast %19 : vector<1x128xf32> to vector<128x128xf32>
    %21 = arith.addf %18, %20 : vector<128x128xf32>
    %cst_17 = arith.constant 0.000000e+00 : f32
    %22 = vector.broadcast %cst_17 : f32 to vector<128x128xf32>
    %23 = arith.maximumf %21, %22 : vector<128x128xf32>
    %24 = arith.truncf %23 : vector<128x128xf32> to vector<128x128xbf16>
    %c0_18 = arith.constant 0 : index
    %c0_19 = arith.constant 0 : index
    %25 = vector.load %arg8[%c0_18, %c0_19] : memref<128x128xbf16, #tpu.memory_space<vmem>>, vector<128x128xbf16>
    %cst_20 = arith.constant dense<0.000000e+00> : vector<128x128xf32>
    %26 = tpu.matmul %24, %25, %cst_20 {dimension_numbers = #tpu.dot_dimension_numbers<[1], [0], [0], [1], [0, 0, 1, 1], [], []>} : vector<128x128xbf16>, vector<128x128xbf16>, vector<128x128xf32> -> vector<128x128xf32>
    %c0_21 = arith.constant 0 : index
    %c0_22 = arith.constant 0 : index
    %27 = vector.load %arg9[%c0_21, %c0_22] : memref<1x128xf32, #tpu.memory_space<vmem>>, vector<1x128xf32>
    %28 = vector.broadcast %27 : vector<1x128xf32> to vector<128x128xf32>
    %29 = arith.addf %26, %28 : vector<128x128xf32>
    %cst_23 = arith.constant 0.000000e+00 : f32
    %30 = vector.broadcast %cst_23 : f32 to vector<128x128xf32>
    %31 = arith.maximumf %29, %30 : vector<128x128xf32>
    %32 = arith.truncf %31 : vector<128x128xf32> to vector<128x128xbf16>
    %c0_24 = arith.constant 0 : index
    %c0_25 = arith.constant 0 : index
    %33 = vector.load %arg10[%c0_24, %c0_25] : memref<128x128xbf16, #tpu.memory_space<vmem>>, vector<128x128xbf16>
    %cst_26 = arith.constant dense<0.000000e+00> : vector<128x128xf32>
    %34 = tpu.matmul %32, %33, %cst_26 {dimension_numbers = #tpu.dot_dimension_numbers<[1], [0], [0], [1], [0, 0, 1, 1], [], []>} : vector<128x128xbf16>, vector<128x128xbf16>, vector<128x128xf32> -> vector<128x128xf32>
    %cst_27 = arith.constant 0.000000e+00 : f32
    %35 = vector.broadcast %cst_27 : f32 to vector<128x128xf32>
    %36 = arith.maximumf %34, %35 : vector<128x128xf32>
    %37 = arith.truncf %36 : vector<128x128xf32> to vector<128x128xbf16>
    %c0_28 = arith.constant 0 : index
    %c0_29 = arith.constant 0 : index
    %38 = vector.load %arg11[%c0_28, %c0_29] : memref<128x896xbf16, #tpu.memory_space<vmem>>, vector<128x896xbf16>
    %cst_30 = arith.constant dense<0.000000e+00> : vector<128x896xf32>
    %39 = tpu.matmul %37, %38, %cst_30 {dimension_numbers = #tpu.dot_dimension_numbers<[1], [0], [0], [1], [0, 0, 1, 1], [], []>} : vector<128x128xbf16>, vector<128x896xbf16>, vector<128x896xf32> -> vector<128x896xf32>
    %c0_31 = arith.constant 0 : index
    %c0_32 = arith.constant 0 : index
    %40 = vector.load %arg12[%c0_31, %c0_32] : memref<1x896xf32, #tpu.memory_space<vmem>>, vector<1x896xf32>
    %41 = vector.broadcast %40 : vector<1x896xf32> to vector<128x896xf32>
    %42 = arith.addf %39, %41 : vector<128x896xf32>
    %43 = arith.truncf %42 : vector<128x896xf32> to vector<128x896xbf16>
    %c0_33 = arith.constant 0 : index
    %c0_34 = arith.constant 0 : index
    %44 = vector.load %arg13[%c0_33, %c0_34] : memref<128x896xbf16, #tpu.memory_space<vmem>>, vector<128x896xbf16>
    tpu.vector_store %arg13[%c0_33, %c0_34], %43 {strides = array<i32>} : memref<128x896xbf16, #tpu.memory_space<vmem>>, vector<128x896xbf16>,
    return
  }
  func.func @transform_0(%arg0: i32) -> (i32, i32) {
    %c0_i32 = arith.constant 0 : i32
    %c0_i32_0 = arith.constant 0 : i32
    return %arg0, %c0_i32 : i32, i32
  }
  func.func @transform_1(%arg0: i32) -> (i32, i32) {
    %c0_i32 = arith.constant 0 : i32
    %c0_i32_0 = arith.constant 0 : i32
    %c0_i32_1 = arith.constant 0 : i32
    return %c0_i32, %c0_i32_0 : i32, i32
  }
  func.func @transform_2(%arg0: i32) -> (i32, i32) {
    %c0_i32 = arith.constant 0 : i32
    %c0_i32_0 = arith.constant 0 : i32
    %c0_i32_1 = arith.constant 0 : i32
    return %c0_i32, %c0_i32_0 : i32, i32
  }
  func.func @transform_3(%arg0: i32) -> (i32, i32) {
    %c0_i32 = arith.constant 0 : i32
    %c0_i32_0 = arith.constant 0 : i32
    %c0_i32_1 = arith.constant 0 : i32
    return %c0_i32, %c0_i32_0 : i32, i32
  }
  func.func @transform_4(%arg0: i32) -> (i32, i32) {
    %c0_i32 = arith.constant 0 : i32
    %c0_i32_0 = arith.constant 0 : i32
    %c0_i32_1 = arith.constant 0 : i32
    return %c0_i32, %c0_i32_0 : i32, i32
  }
  func.func @transform_5(%arg0: i32) -> (i32, i32) {
    %c0_i32 = arith.constant 0 : i32
    %c0_i32_0 = arith.constant 0 : i32
    %c0_i32_1 = arith.constant 0 : i32
    return %c0_i32, %c0_i32_0 : i32, i32
  }
  func.func @transform_6(%arg0: i32) -> (i32, i32) {
    %c0_i32 = arith.constant 0 : i32
    %c0_i32_0 = arith.constant 0 : i32
    %c0_i32_1 = arith.constant 0 : i32
    return %c0_i32, %c0_i32_0 : i32, i32
  }
  func.func @transform_7(%arg0: i32) -> (i32, i32) {
    %c0_i32 = arith.constant 0 : i32
    %c0_i32_0 = arith.constant 0 : i32
    %c0_i32_1 = arith.constant 0 : i32
    return %c0_i32, %c0_i32_0 : i32, i32
  }
  func.func @transform_8(%arg0: i32) -> (i32, i32) {
    %c0_i32 = arith.constant 0 : i32
    %c0_i32_0 = arith.constant 0 : i32
    %c0_i32_1 = arith.constant 0 : i32
    return %c0_i32, %c0_i32_0 : i32, i32
  }
  func.func @transform_9(%arg0: i32) -> (i32, i32) {
    %c0_i32 = arith.constant 0 : i32
    %c0_i32_0 = arith.constant 0 : i32
    %c0_i32_1 = arith.constant 0 : i32
    return %c0_i32, %c0_i32_0 : i32, i32
  }
  func.func @transform_10(%arg0: i32) -> (i32, i32) {
    %c0_i32 = arith.constant 0 : i32
    %c0_i32_0 = arith.constant 0 : i32
    %c0_i32_1 = arith.constant 0 : i32
    return %c0_i32, %c0_i32_0 : i32, i32
  }
  func.func @transform_11(%arg0: i32) -> (i32, i32) {
    %c0_i32 = arith.constant 0 : i32
    %c0_i32_0 = arith.constant 0 : i32
    %c0_i32_1 = arith.constant 0 : i32
    return %c0_i32, %c0_i32_0 : i32, i32
  }
  func.func @transform_12(%arg0: i32) -> (i32, i32) {
    %c0_i32 = arith.constant 0 : i32
    %c0_i32_0 = arith.constant 0 : i32
    return %arg0, %c0_i32 : i32, i32
  }
}

</mosaic_0001>

<llo_original>
// kernel: generic_block_forward.2
$region0: #{generic_block_forward.2}
  #allocation0 [shape = 'u32[]', space=smem, size = 0x4, offset = 0x4, fixed_abs, tag = 'smem constant byte address 0x4 - core index']
  #allocation1 [shape = 'u32[144,128]{1,0:T(1,128)}', space=vmem, size = 0x12000, scoped, tag = 'internal scratch']
  #allocation2 [shape = 'u32[2048]{0}', space=vmem, size = 0x2000, scoped, tag = 'scoped memory for generic_block_forward.2']
  #allocation3 [shape = 'u32[2048]{0}', space=vmem, size = 0x2000, scoped, tag = 'scoped memory for generic_block_forward.2']
  #allocation4 [shape = 'u32[2048]{0}', space=vmem, size = 0x2000, scoped, tag = 'scoped memory for generic_block_forward.2']
  #allocation5 [shape = 'u32[2048]{0}', space=vmem, size = 0x2000, scoped, tag = 'scoped memory for generic_block_forward.2']
  #allocation6 [shape = 'u32[2048]{0}', space=vmem, size = 0x2000, scoped, tag = 'scoped memory for generic_block_forward.2']
  %s0 = inlined_call_operand.vmem [shape: bf16[768,128], index: 0, kind: input, shape index: {}]
  %s1 = inlined_call_operand.vmem [shape: f32[1,128], index: 1, kind: input, shape index: {}]
  %s2 = inlined_call_operand.vmem [shape: bf16[128,128], index: 2, kind: input, shape index: {}]
  %s3 = inlined_call_operand.vmem [shape: f32[1,128], index: 3, kind: input, shape index: {}]
  %s4 = inlined_call_operand.vmem [shape: bf16[128,128], index: 4, kind: input, shape index: {}]
  %s5 = inlined_call_operand.vmem [shape: f32[1,128], index: 5, kind: input, shape index: {}]
  %s6 = inlined_call_operand.vmem [shape: bf16[128,128], index: 6, kind: input, shape index: {}]
  %s7 = inlined_call_operand.vmem [shape: f32[1,128], index: 7, kind: input, shape index: {}]
  %s8 = inlined_call_operand.vmem [shape: bf16[128,128], index: 8, kind: input, shape index: {}]
  %s9 = inlined_call_operand.vmem [shape: bf16[128,896], index: 9, kind: input, shape index: {}]
  %s10 = inlined_call_operand.vmem [shape: f32[1,896], index: 10, kind: input, shape index: {}]
  %s11 = inlined_call_operand.vmem [shape: bf16[512,672], index: 11, kind: input, shape index: {}]
  %s12 = inlined_call_operand.<no memory space> [shape: bf16[], index: 12, kind: input, shape index: {}]
  %s13 = inlined_call_operand.vmem [shape: bf16[512,896], index: 13, kind: output, shape index: {}]
  %s14 = sld [smem:[#allocation0]]
  $region81: #{generic_block_forward.2} parent=0
    _
  %s16 = ssub.s32 1, %s14
  %s17 = scalar_select 0, %s16, %s14
  %v18 = vstv %s12
  %v19 = vunpack.i.l.bf16 %v18
  %v21 = vunpack.i.h.bf16 %v18
  loop: start=0, step=1, limit=6
  $region2: #{generic_block_forward.2} parent=0 // loop_pre_header
    _
  $region3: #{generic_block_forward.2} parent=0 // loop_header
    %s24 = sphi 0, %s28
    %p25 = scmp.ge.s32.totalorder %s24, 6
    %s34 = sphi 0, %s36
    %s37 = sphi 0, %s34
    %s38 = sphi 0, %s37
    %s54 = sphi 0, %s38
    %s58 = sphi 0, %s58
    %s60 = sphi 0, %s58
    %s61 = sphi 0, %s60
    %s75 = sphi 0, %s61
    %s79 = sphi 0, %s79
    %s81 = sphi 0, %s79
    %s82 = sphi 0, %s81
    %s96 = sphi 0, %s82
    %s100 = sphi 0, %s100
    %s102 = sphi 0, %s100
    %s103 = sphi 0, %s102
    %s117 = sphi 0, %s103
    %s121 = sphi 0, %s121
    %s123 = sphi 0, %s121
    %s124 = sphi 0, %s123
    %s138 = sphi 0, %s124
    %s142 = sphi 0, %s142
    %s144 = sphi 0, %s142
    %s145 = sphi 0, %s144
    %s159 = sphi 0, %s145
    %s163 = sphi 0, %s163
    %s165 = sphi 0, %s163
    %s166 = sphi 0, %s165
    %s180 = sphi 0, %s166
    %s184 = sphi 0, %s184
    %s186 = sphi 0, %s184
    %s187 = sphi 0, %s186
    %s201 = sphi 0, %s187
    %s205 = sphi 0, %s205
    %s207 = sphi 0, %s205
    %s208 = sphi 0, %s207
    %s222 = sphi 0, %s208
    %s226 = sphi 0, %s226
    %s228 = sphi 0, %s226
    %s229 = sphi 0, %s228
    %s243 = sphi 0, %s229
    %s247 = sphi 0, %s247
    %s249 = sphi 0, %s247
    %s250 = sphi 0, %s249
    %s264 = sphi 0, %s250
    %s268 = sphi 0, %s268
    %s270 = sphi 0, %s268
    %s271 = sphi 0, %s270
    %s285 = sphi 0, %s271
    %s291 = sphi 0, %s293
    %s294 = sphi 0, %s291
    %s295 = sphi 0, %s294
    %s311 = sphi 0, %s295
  $region4: #{generic_block_forward.2} parent=0 // loop_header_branch
    %27 = sbr.rel (%p25) target = $region8
  $region5: #{generic_block_forward.2} parent=0 // loop_body
    %s29 = ssub.s32 %s24, 1
    %s30 = ssub.s32 %s24, 2
    %s31 = sadd.s32 %s24, 1
    %s32 = ssub.s32 %s24, %s31
    %p33 = scmp.eq.s32.totalorder %s32, 0
    %s35 = sadd.s32 %s34, 1
    %s36 = scalar_select %p33, %s34, %s35
    %p39 = pneg %p33
    %p40 = scmp.eq.s32.totalorder %s24, 3
    %p41 = por %p39, %p40
    %p42 = scmp.ne.s32.totalorder %s34, %s37
    %p43 = scmp.eq.s32.totalorder %s24, 0
    %p44 = por %p42, %p43
    %p45 = scmp.ne.s32.totalorder %s34, %s37
    %p46 = scmp.eq.s32.totalorder %s29, 3
    %p47 = por %p45, %p46
    %p48 = scmp.ne.s32.totalorder %s37, %s38
    %p49 = scmp.eq.s32.totalorder %s29, 0
    %p50 = por %p48, %p49
    %p51 = scmp.ne.s32.totalorder %s37, %s38
    %p52 = scmp.eq.s32.totalorder %s30, 3
    %p53 = por %p51, %p52
    %p55 = scmp.ne.s32.totalorder %s38, %s54
    %p56 = scmp.eq.s32.totalorder %s30, 0
    %p57 = por %p55, %p56
    %s59 = sadd.s32 %s58, 1
    %p62 = scmp.eq.s32.totalorder %s24, 3
    %p63 = scmp.ne.s32.totalorder %s58, %s60
    %p64 = scmp.eq.s32.totalorder %s24, 0
    %p65 = por %p63, %p64
    %p66 = scmp.ne.s32.totalorder %s58, %s60
    %p67 = scmp.eq.s32.totalorder %s29, 3
    %p68 = por %p66, %p67
    %p69 = scmp.ne.s32.totalorder %s60, %s61
    %p70 = scmp.eq.s32.totalorder %s29, 0
    %p71 = por %p69, %p70
    %p72 = scmp.ne.s32.totalorder %s60, %s61
    %p73 = scmp.eq.s32.totalorder %s30, 3
    %p74 = por %p72, %p73
    %p76 = scmp.ne.s32.totalorder %s61, %s75
    %p77 = scmp.eq.s32.totalorder %s30, 0
    %p78 = por %p76, %p77
    %s80 = sadd.s32 %s79, 1
    %p83 = scmp.eq.s32.totalorder %s24, 3
    %p84 = scmp.ne.s32.totalorder %s79, %s81
    %p85 = scmp.eq.s32.totalorder %s24, 0
    %p86 = por %p84, %p85
    %p87 = scmp.ne.s32.totalorder %s79, %s81
    %p88 = scmp.eq.s32.totalorder %s29, 3
    %p89 = por %p87, %p88
    %p90 = scmp.ne.s32.totalorder %s81, %s82
    %p91 = scmp.eq.s32.totalorder %s29, 0
    %p92 = por %p90, %p91
    %p93 = scmp.ne.s32.totalorder %s81, %s82
    %p94 = scmp.eq.s32.totalorder %s30, 3
    %p95 = por %p93, %p94
    %p97 = scmp.ne.s32.totalorder %s82, %s96
    %p98 = scmp.eq.s32.totalorder %s30, 0
    %p99 = por %p97, %p98
    %s101 = sadd.s32 %s100, 1
    %p104 = scmp.eq.s32.totalorder %s24, 3
    %p105 = scmp.ne.s32.totalorder %s100, %s102
    %p106 = scmp.eq.s32.totalorder %s24, 0
    %p107 = por %p105, %p106
    %p108 = scmp.ne.s32.totalorder %s100, %s102
    %p109 = scmp.eq.s32.totalorder %s29, 3
    %p110 = por %p108, %p109
    %p111 = scmp.ne.s32.totalorder %s102, %s103
    %p112 = scmp.eq.s32.totalorder %s29, 0
    %p113 = por %p111, %p112
    %p114 = scmp.ne.s32.totalorder %s102, %s103
    %p115 = scmp.eq.s32.totalorder %s30, 3
    %p116 = por %p114, %p115
    %p118 = scmp.ne.s32.totalorder %s103, %s117
    %p119 = scmp.eq.s32.totalorder %s30, 0
    %p120 = por %p118, %p119
    %s122 = sadd.s32 %s121, 1
    %p125 = scmp.eq.s32.totalorder %s24, 3
    %p126 = scmp.ne.s32.totalorder %s121, %s123
    %p127 = scmp.eq.s32.totalorder %s24, 0
    %p128 = por %p126, %p127
    %p129 = scmp.ne.s32.totalorder %s121, %s123
    %p130 = scmp.eq.s32.totalorder %s29, 3
    %p131 = por %p129, %p130
    %p132 = scmp.ne.s32.totalorder %s123, %s124
    %p133 = scmp.eq.s32.totalorder %s29, 0
    %p134 = por %p132, %p133
    %p135 = scmp.ne.s32.totalorder %s123, %s124
    %p136 = scmp.eq.s32.totalorder %s30, 3
    %p137 = por %p135, %p136
    %p139 = scmp.ne.s32.totalorder %s124, %s138
    %p140 = scmp.eq.s32.totalorder %s30, 0
    %p141 = por %p139, %p140
    %s143 = sadd.s32 %s142, 1
    %p146 = scmp.eq.s32.totalorder %s24, 3
    %p147 = scmp.ne.s32.totalorder %s142, %s144
    %p148 = scmp.eq.s32.totalorder %s24, 0
    %p149 = por %p147, %p148
    %p150 = scmp.ne.s32.totalorder %s142, %s144
    %p151 = scmp.eq.s32.totalorder %s29, 3
    %p152 = por %p150, %p151
    %p153 = scmp.ne.s32.totalorder %s144, %s145
    %p154 = scmp.eq.s32.totalorder %s29, 0
    %p155 = por %p153, %p154
    %p156 = scmp.ne.s32.totalorder %s144, %s145
    %p157 = scmp.eq.s32.totalorder %s30, 3
    %p158 = por %p156, %p157
    %p160 = scmp.ne.s32.totalorder %s145, %s159
    %p161 = scmp.eq.s32.totalorder %s30, 0
    %p162 = por %p160, %p161
    %s164 = sadd.s32 %s163, 1
    %p167 = scmp.eq.s32.totalorder %s24, 3
    %p168 = scmp.ne.s32.totalorder %s163, %s165
    %p169 = scmp.eq.s32.totalorder %s24, 0
    %p170 = por %p168, %p169
    %p171 = scmp.ne.s32.totalorder %s163, %s165
    %p172 = scmp.eq.s32.totalorder %s29, 3
    %p173 = por %p171, %p172
    %p174 = scmp.ne.s32.totalorder %s165, %s166
    %p175 = scmp.eq.s32.totalorder %s29, 0
    %p176 = por %p174, %p175
    %p177 = scmp.ne.s32.totalorder %s165, %s166
    %p178 = scmp.eq.s32.totalorder %s30, 3
    %p179 = por %p177, %p178
    %p181 = scmp.ne.s32.totalorder %s166, %s180
    %p182 = scmp.eq.s32.totalorder %s30, 0
    %p183 = por %p181, %p182
    %s185 = sadd.s32 %s184, 1
    %p188 = scmp.eq.s32.totalorder %s24, 3
    %p189 = scmp.ne.s32.totalorder %s184, %s186
    %p190 = scmp.eq.s32.totalorder %s24, 0
    %p191 = por %p189, %p190
    %p192 = scmp.ne.s32.totalorder %s184, %s186
    %p193 = scmp.eq.s32.totalorder %s29, 3
    %p194 = por %p192, %p193
    %p195 = scmp.ne.s32.totalorder %s186, %s187
    %p196 = scmp.eq.s32.totalorder %s29, 0
    %p197 = por %p195, %p196
    %p198 = scmp.ne.s32.totalorder %s186, %s187
    %p199 = scmp.eq.s32.totalorder %s30, 3
    %p200 = por %p198, %p199
    %p202 = scmp.ne.s32.totalorder %s187, %s201
    %p203 = scmp.eq.s32.totalorder %s30, 0
    %p204 = por %p202, %p203
    %s206 = sadd.s32 %s205, 1
    %p209 = scmp.eq.s32.totalorder %s24, 3
    %p210 = scmp.ne.s32.totalorder %s205, %s207
    %p211 = scmp.eq.s32.totalorder %s24, 0
    %p212 = por %p210, %p211
    %p213 = scmp.ne.s32.totalorder %s205, %s207
    %p214 = scmp.eq.s32.totalorder %s29, 3
    %p215 = por %p213, %p214
    %p216 = scmp.ne.s32.totalorder %s207, %s208
    %p217 = scmp.eq.s32.totalorder %s29, 0
    %p218 = por %p216, %p217
    %p219 = scmp.ne.s32.totalorder %s207, %s208
    %p220 = scmp.eq.s32.totalorder %s30, 3
    %p221 = por %p219, %p220
    %p223 = scmp.ne.s32.totalorder %s208, %s222
    %p224 = scmp.eq.s32.totalorder %s30, 0
    %p225 = por %p223, %p224
    %s227 = sadd.s32 %s226, 1
    %p230 = scmp.eq.s32.totalorder %s24, 3
    %p231 = scmp.ne.s32.totalorder %s226, %s228
    %p232 = scmp.eq.s32.totalorder %s24, 0
    %p233 = por %p231, %p232
    %p234 = scmp.ne.s32.totalorder %s226, %s228
    %p235 = scmp.eq.s32.totalorder %s29, 3
    %p236 = por %p234, %p235
    %p237 = scmp.ne.s32.totalorder %s228, %s229
    %p238 = scmp.eq.s32.totalorder %s29, 0
    %p239 = por %p237, %p238
    %p240 = scmp.ne.s32.totalorder %s228, %s229
    %p241 = scmp.eq.s32.totalorder %s30, 3
    %p242 = por %p240, %p241
    %p244 = scmp.ne.s32.totalorder %s229, %s243
    %p245 = scmp.eq.s32.totalorder %s30, 0
    %p246 = por %p244, %p245
    %s248 = sadd.s32 %s247, 1
    %p251 = scmp.eq.s32.totalorder %s24, 3
    %p252 = scmp.ne.s32.totalorder %s247, %s249
    %p253 = scmp.eq.s32.totalorder %s24, 0
    %p254 = por %p252, %p253
    %p255 = scmp.ne.s32.totalorder %s247, %s249
    %p256 = scmp.eq.s32.totalorder %s29, 3
    %p257 = por %p255, %p256
    %p258 = scmp.ne.s32.totalorder %s249, %s250
    %p259 = scmp.eq.s32.totalorder %s29, 0
    %p260 = por %p258, %p259
    %p261 = scmp.ne.s32.totalorder %s249, %s250
    %p262 = scmp.eq.s32.totalorder %s30, 3
    %p263 = por %p261, %p262
    %p265 = scmp.ne.s32.totalorder %s250, %s264
    %p266 = scmp.eq.s32.totalorder %s30, 0
    %p267 = por %p265, %p266
    %s269 = sadd.s32 %s268, 1
    %p272 = scmp.eq.s32.totalorder %s24, 3
    %p273 = scmp.ne.s32.totalorder %s268, %s270
    %p274 = scmp.eq.s32.totalorder %s24, 0
    %p275 = por %p273, %p274
    %p276 = scmp.ne.s32.totalorder %s268, %s270
    %p277 = scmp.eq.s32.totalorder %s29, 3
    %p278 = por %p276, %p277
    %p279 = scmp.ne.s32.totalorder %s270, %s271
    %p280 = scmp.eq.s32.totalorder %s29, 0
    %p281 = por %p279, %p280
    %p282 = scmp.ne.s32.totalorder %s270, %s271
    %p283 = scmp.eq.s32.totalorder %s30, 3
    %p284 = por %p282, %p283
    %p286 = scmp.ne.s32.totalorder %s271, %s285
    %p287 = scmp.eq.s32.totalorder %s30, 0
    %p288 = por %p286, %p287
    %s289 = ssub.s32 %s24, %s31
    %p290 = scmp.eq.s32.totalorder %s289, 0
    %s292 = sadd.s32 %s291, 1
    %s293 = scalar_select %p290, %s291, %s292
    %p296 = pneg %p290
    %p297 = scmp.eq.s32.totalorder %s24, 3
    %p298 = por %p296, %p297
    %p299 = scmp.ne.s32.totalorder %s291, %s294
    %p300 = scmp.eq.s32.totalorder %s24, 0
    %p301 = por %p299, %p300
    %p302 = scmp.ne.s32.totalorder %s291, %s294
    %p303 = scmp.eq.s32.totalorder %s29, 3
    %p304 = por %p302, %p303
    %p305 = scmp.ne.s32.totalorder %s294, %s295
    %p306 = scmp.eq.s32.totalorder %s29, 0
    %p307 = por %p305, %p306
    %p308 = scmp.ne.s32.totalorder %s294, %s295
    %p309 = scmp.eq.s32.totalorder %s30, 3
    %p310 = por %p308, %p309
    %p312 = scmp.ne.s32.totalorder %s295, %s311
    %p313 = scmp.eq.s32.totalorder %s30, 0
    %p314 = por %p312, %p313
    %p315 = scmp.le.s32.totalorder 1, %s24
    %p316 = scmp.lt.s32.totalorder %s24, 5
    %p317 = pnand %p315, %p316
    %p318 = pneg %p317
    // Predicated region
    $region9: #{generic_block_forward.2} parent=5 // pred_check
      _
    $region10: #{generic_block_forward.2} parent=5 // pred_check_branch
      %320 = sbr.rel (%p317) target = $region12
    $region11: #{generic_block_forward.2} parent=5 // pred_region
      %s321 = ssub.s32 %s24, 1
      // Predicated region
      $region13: #{generic_block_forward.2} parent=11 // pred_check
        %p322 = pneg %p71
      $region14: #{generic_block_forward.2} parent=11 // pred_check_branch
        %324 = sbr.rel (%p322) target = $region16
      $region15: #{generic_block_forward.2} parent=11 // pred_region
        _
      $region16: #{generic_block_forward.2} parent=11 // pred_fallthru
        _
      // Predicated region
      $region17: #{generic_block_forward.2} parent=11 // pred_check
        %p325 = pneg %p92
      $region18: #{generic_block_forward.2} parent=11 // pred_check_branch
        %327 = sbr.rel (%p325) target = $region20
      $region19: #{generic_block_forward.2} parent=11 // pred_region
        _
      $region20: #{generic_block_forward.2} parent=11 // pred_fallthru
        _
      // Predicated region
      $region21: #{generic_block_forward.2} parent=11 // pred_check
        %p328 = pneg %p113
      $region22: #{generic_block_forward.2} parent=11 // pred_check_branch
        %330 = sbr.rel (%p328) target = $region24
      $region23: #{generic_block_forward.2} parent=11 // pred_region
        _
      $region24: #{generic_block_forward.2} parent=11 // pred_fallthru
        _
      // Predicated region
      $region25: #{generic_block_forward.2} parent=11 // pred_check
        %p331 = pneg %p134
      $region26: #{generic_block_forward.2} parent=11 // pred_check_branch
        %333 = sbr.rel (%p331) target = $region28
      $region27: #{generic_block_forward.2} parent=11 // pred_region
        _
      $region28: #{generic_block_forward.2} parent=11 // pred_fallthru
        _
      // Predicated region
      $region29: #{generic_block_forward.2} parent=11 // pred_check
        %p334 = pneg %p155
      $region30: #{generic_block_forward.2} parent=11 // pred_check_branch
        %336 = sbr.rel (%p334) target = $region32
      $region31: #{generic_block_forward.2} parent=11 // pred_region
        _
      $region32: #{generic_block_forward.2} parent=11 // pred_fallthru
        _
      // Predicated region
      $region33: #{generic_block_forward.2} parent=11 // pred_check
        %p337 = pneg %p176
      $region34: #{generic_block_forward.2} parent=11 // pred_check_branch
        %339 = sbr.rel (%p337) target = $region36
      $region35: #{generic_block_forward.2} parent=11 // pred_region
        _
      $region36: #{generic_block_forward.2} parent=11 // pred_fallthru
        _
      // Predicated region
      $region37: #{generic_block_forward.2} parent=11 // pred_check
        %p340 = pneg %p197
      $region38: #{generic_block_forward.2} parent=11 // pred_check_branch
        %342 = sbr.rel (%p340) target = $region40
      $region39: #{generic_block_forward.2} parent=11 // pred_region
        _
      $region40: #{generic_block_forward.2} parent=11 // pred_fallthru
        _
      // Predicated region
      $region41: #{generic_block_forward.2} parent=11 // pred_check
        %p343 = pneg %p218
      $region42: #{generic_block_forward.2} parent=11 // pred_check_branch
        %345 = sbr.rel (%p343) target = $region44
      $region43: #{generic_block_forward.2} parent=11 // pred_region
        _
      $region44: #{generic_block_forward.2} parent=11 // pred_fallthru
        _
      // Predicated region
      $region45: #{generic_block_forward.2} parent=11 // pred_check
        %p346 = pneg %p239
      $region46: #{generic_block_forward.2} parent=11 // pred_check_branch
        %348 = sbr.rel (%p346) target = $region48
      $region47: #{generic_block_forward.2} parent=11 // pred_region
        _
      $region48: #{generic_block_forward.2} parent=11 // pred_fallthru
        _
      // Predicated region
      $region49: #{generic_block_forward.2} parent=11 // pred_check
        %p349 = pneg %p260
      $region50: #{generic_block_forward.2} parent=11 // pred_check_branch
        %351 = sbr.rel (%p349) target = $region52
      $region51: #{generic_block_forward.2} parent=11 // pred_region
        _
      $region52: #{generic_block_forward.2} parent=11 // pred_fallthru
        _
      // Predicated region
      $region53: #{generic_block_forward.2} parent=11 // pred_check
        %p352 = pneg %p281
      $region54: #{generic_block_forward.2} parent=11 // pred_check_branch
        %354 = sbr.rel (%p352) target = $region56
      $region55: #{generic_block_forward.2} parent=11 // pred_region
        _
      $region56: #{generic_block_forward.2} parent=11 // pred_fallthru
        _
    $region12: #{generic_block_forward.2} parent=5 // pred_fallthru
      _
    %p355 = scmp.lt.s32.totalorder %s24, 4
    // Predicated region
    $region57: #{generic_block_forward.2} parent=5 // pred_check
      %p356 = pneg %p355
    $region58: #{generic_block_forward.2} parent=5 // pred_check_branch
      %358 = sbr.rel (%p356) target = $region60
    $region59: #{generic_block_forward.2} parent=5 // pred_region
      // Predicated region
      $region61: #{generic_block_forward.2} parent=59 // pred_check
        %p359 = pneg %p44
      $region62: #{generic_block_forward.2} parent=59 // pred_check_branch
        %361 = sbr.rel (%p359) target = $region64
      $region63: #{generic_block_forward.2} parent=59 // pred_region
        %s362 = smul.u32 16, %s24
        %p363 = scmp.lt.s32.totalorder %s362, 63
        %s364 = scalar_select %p363, %s362, 63
        %s365 = smul.addr %s364, 6
        %s366 = smul.addr %s365, 4
        %s367 = scalar_lea.vmem %s11, %s366
        %s368 = smul.u32 16, %s24
      $region64: #{generic_block_forward.2} parent=59 // pred_fallthru
        _
    $region60: #{generic_block_forward.2} parent=5 // pred_fallthru
      _
    %p369 = scmp.le.s32.totalorder 1, %s24
    %p370 = scmp.lt.s32.totalorder %s24, 5
    %p371 = pnand %p369, %p370
    %p372 = pneg %p371
    // Predicated region
    $region65: #{generic_block_forward.2} parent=5 // pred_check
      _
    $region66: #{generic_block_forward.2} parent=5 // pred_check_branch
      %374 = sbr.rel (%p371) target = $region68
    $region67: #{generic_block_forward.2} parent=5 // pred_region
      #allocation7 [shape = 'u8[196608]{0}', space=vmem, size = 0x30000, dematerialized = true, scoped, tag = 'FusionAdapter Buffer %fusion.1 = bf16[512,768]{1,0:T(8,128)(2,1)} fusion(%param_11.1, %param_12), kind=kLoop, calls=%fused_computation.1.clone, metadata={op_name="jit(generic_block_forward)/jit(_pad)/pad" stack_frame_id=40}']
      %s375 = ssub.s32 %s24, 1
      %s376 = smul.u32 16, %s29
      %p377 = scmp.lt.s32.totalorder %s376, 63
      %s378 = scalar_select %p377, %s376, 63
      %s379 = smul.addr %s378, 6
      %s380 = smul.addr %s379, 4
      %s381 = scalar_lea.vmem %s11, %s380
      %p382 = pneg %p50
      %p383 = pneg %p47
      %p384 = pneg %p71
      %p385 = pneg %p68
      %p386 = pneg %p92
      %p387 = pneg %p89
      %p388 = pneg %p113
      %p389 = pneg %p110
      %p390 = pneg %p134
      %p391 = pneg %p131
      %p392 = pneg %p155
      %p393 = pneg %p152
      %p394 = pneg %p176
      %p395 = pneg %p173
      %p396 = pneg %p197
      %p397 = pneg %p194
      %p398 = pneg %p218
      %p399 = pneg %p215
      %p400 = pneg %p239
      %p401 = pneg %p236
      %p402 = pneg %p260
      %p403 = pneg %p257
      %p404 = pneg %p281
      %p405 = pneg %p278
      %p406 = pneg %p307
      %p407 = pneg %p304
      %s408 = smul.u32 16, %s29
      %p409 = scmp.lt.s32.totalorder %s408, 63
      %s410 = scalar_select %p409, %s408, 63
      %s411 = smul.addr %s410, 7
      %s412 = smul.addr %s411, 4
      %s413 = scalar_lea.vmem %s13, %s412
      %s414 = smul.u32 16, %s29
      %p415 = scmp.lt.s32.totalorder %s414, 63
      %s416 = scalar_select %p415, %s414, 63
      %s417 = smul.addr %s416, 6
      %s418 = smul.addr %s417, 4
      %s419 = scalar_lea.vmem %s11, %s418
      %s420 = smul.u32 16, %s29
      %s421 = smul.u32 16, %s29
      %p422 = scmp.lt.s32.totalorder %s421, 63
      %s423 = scalar_select %p422, %s421, 63
      %s424 = smul.addr %s423, 7
      %s425 = smul.addr %s424, 4
      %s426 = scalar_lea.vmem %s13, %s425
      %s427 = smul.u32 16, %s29
      %v428 = vld [vmem:[%s419] sm:$0xf]
      %v429 = vunpack.c.l.bf16 %v428
      %v430 = vunpack.c.h.bf16 %v428
      %v431 = vlaneseq
      %v432 = vand.u32 %v431, 127
      %vm434 = vcmp.lt.s32.totalorder %v432, 672
      %v435 = vsel %vm434, %v429, %v19
      %v436 = vpack.c.bf16 0.0, %v435
      %s438 = ssub.s32 16, 1
      %439 = vst [vmem:[#allocation7] sm:%s438] %v436
      %s440 = scalar_lea.vmem %s419, 4
      %v441 = vld [vmem:[%s440] sm:$0xf]
      %v442 = vunpack.c.l.bf16 %v441
      %v443 = vunpack.c.h.bf16 %v441
      %v444 = vlaneseq
      %v445 = vand.u32 %v444, 127
      %v446 = vadd.s32 %v445, 128
      %vm447 = vcmp.lt.s32.totalorder %v446, 672
      %v448 = vsel %vm447, %v442, %v19
      %s449 = scalar_lea.vmem [#allocation7], 4
      %v450 = vpack.c.bf16 0.0, %v448
      %s452 = ssub.s32 16, 1
      %453 = vst [vmem:[%s449] sm:%s452] %v450
      %s454 = scalar_lea.vmem %s419, 8
      %v455 = vld [vmem:[%s454] sm:$0xf]
      %v456 = vunpack.c.l.bf16 %v455
      %v457 = vunpack.c.h.bf16 %v455
      %v458 = vlaneseq
      %v459 = vand.u32 %v458, 127
      %v460 = vadd.s32 %v459, 256
      %vm461 = vcmp.lt.s32.totalorder %v460, 672
      %v462 = vsel %vm461, %v456, %v19
      %s463 = scalar_lea.vmem [#allocation7], 8
      %v464 = vpack.c.bf16 0.0, %v462
      %s466 = ssub.s32 16, 1
      %467 = vst [vmem:[%s463] sm:%s466] %v464
      %s468 = scalar_lea.vmem %s419, 12
      %v469 = vld [vmem:[%s468] sm:$0xf]
      %v470 = vunpack.c.l.bf16 %v469
      %v471 = vunpack.c.h.bf16 %v469
      %v472 = vlaneseq
      %v473 = vand.u32 %v472, 127
      %v474 = vadd.s32 %v473, 384
      %vm475 = vcmp.lt.s32.totalorder %v474, 672
      %v476 = vsel %vm475, %v470, %v19
      %s477 = scalar_lea.vmem [#allocation7], 12
      %v478 = vpack.c.bf16 0.0, %v476
      %s480 = ssub.s32 16, 1
      %481 = vst [vmem:[%s477] sm:%s480] %v478
      %s482 = scalar_lea.vmem %s419, 16
      %v483 = vld [vmem:[%s482] sm:$0xf]
      %v484 = vunpack.c.l.bf16 %v483
      %v485 = vunpack.c.h.bf16 %v483
      %v486 = vlaneseq
      %v487 = vand.u32 %v486, 127
      %v488 = vadd.s32 %v487, 512
      %vm489 = vcmp.lt.s32.totalorder %v488, 672
      %v490 = vsel %vm489, %v484, %v19
      %s491 = scalar_lea.vmem [#allocation7], 16
      %v492 = vpack.c.bf16 0.0, %v490
      %s494 = ssub.s32 16, 1
      %495 = vst [vmem:[%s491] sm:%s494] %v492
      %s496 = scalar_lea.vmem %s419, 20
      %s498 = sor.u32 255, 127
      %s499 = sand.u32 %s498, 85
      %s500 = sshrl.u32 %s499, 1
      %s501 = sor.u32 %s499, %s500
      %s502 = sand.u32 51, %s501
      %s503 = sshrl.u32 %s502, 2
      %s504 = sor.u32 %s502, %s503
      %s505 = sand.u32 15, %s504
      %v506 = vld [vmem:[%s496] sm:%s505]
      %v507 = vunpack.c.l.bf16 %v506
      %v508 = vunpack.c.h.bf16 %v506
      %v509 = vlaneseq
      %v510 = vand.u32 %v509, 127
      %v511 = vadd.s32 %v510, 640
      %vm512 = vcmp.lt.s32.totalorder %v511, 672
      %v513 = vsel %vm512, %v507, %v19
      %s514 = scalar_lea.vmem [#allocation7], 20
      %v515 = vpack.c.bf16 0.0, %v513
      %s517 = ssub.s32 16, 1
      %518 = vst [vmem:[%s514] sm:%s517] %v515
      %s519 = scalar_lea.vmem %s419, 24
      %v520 = vld [vmem:[%s519] sm:$0xf]
      %v521 = vunpack.c.l.bf16 %v520
      %v522 = vunpack.c.h.bf16 %v520
      %v523 = vlaneseq
      %v524 = vand.u32 %v523, 127
      %vm526 = vcmp.lt.s32.totalorder %v524, 672
      %v527 = vsel %vm526, %v521, %v19
      %s528 = scalar_lea.vmem [#allocation7], 24
      %v529 = vpack.c.bf16 0.0, %v527
      %s531 = ssub.s32 16, 1
      %532 = vst [vmem:[%s528] sm:%s531] %v529
      %s533 = scalar_lea.vmem %s419, 28
      %v534 = vld [vmem:[%s533] sm:$0xf]
      %v535 = vunpack.c.l.bf16 %v534
      %v536 = vunpack.c.h.bf16 %v534
      %v537 = vlaneseq
      %v538 = vand.u32 %v537, 127
      %v539 = vadd.s32 %v538, 128
      %vm540 = vcmp.lt.s32.totalorder %v539, 672
      %v541 = vsel %vm540, %v535, %v19
      %s542 = scalar_lea.vmem [#allocation7], 28
      %v543 = vpack.c.bf16 0.0, %v541
      %s545 = ssub.s32 16, 1
      %546 = vst [vmem:[%s542] sm:%s545] %v543
      %s547 = scalar_lea.vmem %s419, 32
      %v548 = vld [vmem:[%s547] sm:$0xf]
      %v549 = vunpack.c.l.bf16 %v548
      %v550 = vunpack.c.h.bf16 %v548
      %v551 = vlaneseq
      %v552 = vand.u32 %v551, 127
      %v553 = vadd.s32 %v552, 256
      %vm554 = vcmp.lt.s32.totalorder %v553, 672
      %v555 = vsel %vm554, %v549, %v19
      %s556 = scalar_lea.vmem [#allocation7], 32
      %v557 = vpack.c.bf16 0.0, %v555
      %s559 = ssub.s32 16, 1
      %560 = vst [vmem:[%s556] sm:%s559] %v557
      %s561 = scalar_lea.vmem %s419, 36
      %v562 = vld [vmem:[%s561] sm:$0xf]
      %v563 = vunpack.c.l.bf16 %v562
      %v564 = vunpack.c.h.bf16 %v562
      %v565 = vlaneseq
      %v566 = vand.u32 %v565, 127
      %v567 = vadd.s32 %v566, 384
      %vm568 = vcmp.lt.s32.totalorder %v567, 672
      %v569 = vsel %vm568, %v563, %v19
      %s570 = scalar_lea.vmem [#allocation7], 36
      %v571 = vpack.c.bf16 0.0, %v569
      %s573 = ssub.s32 16, 1
      %574 = vst [vmem:[%s570] sm:%s573] %v571
      %s575 = scalar_lea.vmem %s419, 40
      %v576 = vld [vmem:[%s575] sm:$0xf]
      %v577 = vunpack.c.l.bf16 %v576
      %v578 = vunpack.c.h.bf16 %v576
      %v579 = vlaneseq
      %v580 = vand.u32 %v579, 127
      %v581 = vadd.s32 %v580, 512
      %vm582 = vcmp.lt.s32.totalorder %v581, 672
      %v583 = vsel %vm582, %v577, %v19
      %s584 = scalar_lea.vmem [#allocation7], 40
      %v585 = vpack.c.bf16 0.0, %v583
      %s587 = ssub.s32 16, 1
      %588 = vst [vmem:[%s584] sm:%s587] %v585
      %s589 = scalar_lea.vmem %s419, 44
      %s591 = sor.u32 255, 127
      %s592 = sand.u32 %s591, 85
      %s593 = sshrl.u32 %s592, 1
      %s594 = sor.u32 %s592, %s593
      %s595 = sand.u32 51, %s594
      %s596 = sshrl.u32 %s595, 2
      %s597 = sor.u32 %s595, %s596
      %s598 = sand.u32 15, %s597
      %v599 = vld [vmem:[%s589] sm:%s598]
      %v600 = vunpack.c.l.bf16 %v599
      %v601 = vunpack.c.h.bf16 %v599
      %v602 = vlaneseq
      %v603 = vand.u32 %v602, 127
      %v604 = vadd.s32 %v603, 640
      %vm605 = vcmp.lt.s32.totalorder %v604, 672
      %v606 = vsel %vm605, %v600, %v19
      %s607 = scalar_lea.vmem [#allocation7], 44
      %v608 = vpack.c.bf16 0.0, %v606
      %s610 = ssub.s32 16, 1
      %611 = vst [vmem:[%s607] sm:%s610] %v608
      %s612 = scalar_lea.vmem %s419, 48
      %v613 = vld [vmem:[%s612] sm:$0xf]
      %v614 = vunpack.c.l.bf16 %v613
      %v615 = vunpack.c.h.bf16 %v613
      %v616 = vlaneseq
      %v617 = vand.u32 %v616, 127
      %vm619 = vcmp.lt.s32.totalorder %v617, 672
      %v620 = vsel %vm619, %v614, %v19
      %s621 = scalar_lea.vmem [#allocation7], 48
      %v622 = vpack.c.bf16 0.0, %v620
      %s624 = ssub.s32 16, 1
      %625 = vst [vmem:[%s621] sm:%s624] %v622
      %s626 = scalar_lea.vmem %s419, 52
      %v627 = vld [vmem:[%s626] sm:$0xf]
      %v628 = vunpack.c.l.bf16 %v627
      %v629 = vunpack.c.h.bf16 %v627
      %v630 = vlaneseq
      %v631 = vand.u32 %v630, 127
      %v632 = vadd.s32 %v631, 128
      %vm633 = vcmp.lt.s32.totalorder %v632, 672
      %v634 = vsel %vm633, %v628, %v19
      %s635 = scalar_lea.vmem [#allocation7], 52
      %v636 = vpack.c.bf16 0.0, %v634
      %s638 = ssub.s32 16, 1
      %639 = vst [vmem:[%s635] sm:%s638] %v636
      %s640 = scalar_lea.vmem %s419, 56
      %v641 = vld [vmem:[%s640] sm:$0xf]
      %v642 = vunpack.c.l.bf16 %v641
      %v643 = vunpack.c.h.bf16 %v641
      %v644 = vlaneseq
      %v645 = vand.u32 %v644, 127
      %v646 = vadd.s32 %v645, 256
      %vm647 = vcmp.lt.s32.totalorder %v646, 672
      %v648 = vsel %vm647, %v642, %v19
      %s649 = scalar_lea.vmem [#allocation7], 56
      %v650 = vpack.c.bf16 0.0, %v648
      %s652 = ssub.s32 16, 1
      %653 = vst [vmem:[%s649] sm:%s652] %v650
      %s654 = scalar_lea.vmem %s419, 60
      %v655 = vld [vmem:[%s654] sm:$0xf]
      %v656 = vunpack.c.l.bf16 %v655
      %v657 = vunpack.c.h.bf16 %v655
      %v658 = vlaneseq
      %v659 = vand.u32 %v658, 127
      %v660 = vadd.s32 %v659, 384
      %vm661 = vcmp.lt.s32.totalorder %v660, 672
      %v662 = vsel %vm661, %v656, %v19
      %s663 = scalar_lea.vmem [#allocation7], 60
      %v664 = vpack.c.bf16 0.0, %v662
      %s666 = ssub.s32 16, 1
      %667 = vst [vmem:[%s663] sm:%s666] %v664
      %s668 = scalar_lea.vmem %s419, 64
      %v669 = vld [vmem:[%s668] sm:$0xf]
      %v670 = vunpack.c.l.bf16 %v669
      %v671 = vunpack.c.h.bf16 %v669
      %v672 = vlaneseq
      %v673 = vand.u32 %v672, 127
      %v674 = vadd.s32 %v673, 512
      %vm675 = vcmp.lt.s32.totalorder %v674, 672
      %v676 = vsel %vm675, %v670, %v19
      %s677 = scalar_lea.vmem [#allocation7], 64
      %v678 = vpack.c.bf16 0.0, %v676
      %s680 = ssub.s32 16, 1
      %681 = vst [vmem:[%s677] sm:%s680] %v678
      %s682 = scalar_lea.vmem %s419, 68
      %s684 = sor.u32 255, 127
      %s685 = sand.u32 %s684, 85
      %s686 = sshrl.u32 %s685, 1
      %s687 = sor.u32 %s685, %s686
      %s688 = sand.u32 51, %s687
      %s689 = sshrl.u32 %s688, 2
      %s690 = sor.u32 %s688, %s689
      %s691 = sand.u32 15, %s690
      %v692 = vld [vmem:[%s682] sm:%s691]
      %v693 = vunpack.c.l.bf16 %v692
      %v694 = vunpack.c.h.bf16 %v692
      %v695 = vlaneseq
      %v696 = vand.u32 %v695, 127
      %v697 = vadd.s32 %v696, 640
      %vm698 = vcmp.lt.s32.totalorder %v697, 672
      %v699 = vsel %vm698, %v693, %v19
      %s700 = scalar_lea.vmem [#allocation7], 68
      %v701 = vpack.c.bf16 0.0, %v699
      %s703 = ssub.s32 16, 1
      %704 = vst [vmem:[%s700] sm:%s703] %v701
      %s705 = scalar_lea.vmem %s419, 72
      %v706 = vld [vmem:[%s705] sm:$0xf]
      %v707 = vunpack.c.l.bf16 %v706
      %v708 = vunpack.c.h.bf16 %v706
      %v709 = vlaneseq
      %v710 = vand.u32 %v709, 127
      %vm712 = vcmp.lt.s32.totalorder %v710, 672
      %v713 = vsel %vm712, %v707, %v19
      %s714 = scalar_lea.vmem [#allocation7], 72
      %v715 = vpack.c.bf16 0.0, %v713
      %s717 = ssub.s32 16, 1
      %718 = vst [vmem:[%s714] sm:%s717] %v715
      %s719 = scalar_lea.vmem %s419, 76
      %v720 = vld [vmem:[%s719] sm:$0xf]
      %v721 = vunpack.c.l.bf16 %v720
      %v722 = vunpack.c.h.bf16 %v720
      %v723 = vlaneseq
      %v724 = vand.u32 %v723, 127
      %v725 = vadd.s32 %v724, 128
      %vm726 = vcmp.lt.s32.totalorder %v725, 672
      %v727 = vsel %vm726, %v721, %v19
      %s728 = scalar_lea.vmem [#allocation7], 76
      %v729 = vpack.c.bf16 0.0, %v727
      %s731 = ssub.s32 16, 1
      %732 = vst [vmem:[%s728] sm:%s731] %v729
      %s733 = scalar_lea.vmem %s419, 80
      %v734 = vld [vmem:[%s733] sm:$0xf]
      %v735 = vunpack.c.l.bf16 %v734
      %v736 = vunpack.c.h.bf16 %v734
      %v737 = vlaneseq
      %v738 = vand.u32 %v737, 127
      %v739 = vadd.s32 %v738, 256
      %vm740 = vcmp.lt.s32.totalorder %v739, 672
      %v741 = vsel %vm740, %v735, %v19
      %s742 = scalar_lea.vmem [#allocation7], 80
      %v743 = vpack.c.bf16 0.0, %v741
      %s745 = ssub.s32 16, 1
      %746 = vst [vmem:[%s742] sm:%s745] %v743
      %s747 = scalar_lea.vmem %s419, 84
      %v748 = vld [vmem:[%s747] sm:$0xf]
      %v749 = vunpack.c.l.bf16 %v748
      %v750 = vunpack.c.h.bf16 %v748
      %v751 = vlaneseq
      %v752 = vand.u32 %v751, 127
      %v753 = vadd.s32 %v752, 384
      %vm754 = vcmp.lt.s32.totalorder %v753, 672
      %v755 = vsel %vm754, %v749, %v19
      %s756 = scalar_lea.vmem [#allocation7], 84
      %v757 = vpack.c.bf16 0.0, %v755
      %s759 = ssub.s32 16, 1
      %760 = vst [vmem:[%s756] sm:%s759] %v757
      %s761 = scalar_lea.vmem %s419, 88
      %v762 = vld [vmem:[%s761] sm:$0xf]
      %v763 = vunpack.c.l.bf16 %v762
      %v764 = vunpack.c.h.bf16 %v762
      %v765 = vlaneseq
      %v766 = vand.u32 %v765, 127
      %v767 = vadd.s32 %v766, 512
      %vm768 = vcmp.lt.s32.totalorder %v767, 672
      %v769 = vsel %vm768, %v763, %v19
      %s770 = scalar_lea.vmem [#allocation7], 88
      %v771 = vpack.c.bf16 0.0, %v769
      %s773 = ssub.s32 16, 1
      %774 = vst [vmem:[%s770] sm:%s773] %v771
      %s775 = scalar_lea.vmem %s419, 92
      %s777 = sor.u32 255, 127
      %s778 = sand.u32 %s777, 85
      %s779 = sshrl.u32 %s778, 1
      %s780 = sor.u32 %s778, %s779
      %s781 = sand.u32 51, %s780
      %s782 = sshrl.u32 %s781, 2
      %s783 = sor.u32 %s781, %s782
      %s784 = sand.u32 15, %s783
      %v785 = vld [vmem:[%s775] sm:%s784]
      %v786 = vunpack.c.l.bf16 %v785
      %v787 = vunpack.c.h.bf16 %v785
      %v788 = vlaneseq
      %v789 = vand.u32 %v788, 127
      %v790 = vadd.s32 %v789, 640
      %vm791 = vcmp.lt.s32.totalorder %v790, 672
      %v792 = vsel %vm791, %v786, %v19
      %s793 = scalar_lea.vmem [#allocation7], 92
      %v794 = vpack.c.bf16 0.0, %v792
      %s796 = ssub.s32 16, 1
      %797 = vst [vmem:[%s793] sm:%s796] %v794
      %s798 = scalar_lea.vmem %s419, 96
      %v799 = vld [vmem:[%s798] sm:$0xf]
      %v800 = vunpack.c.l.bf16 %v799
      %v801 = vunpack.c.h.bf16 %v799
      %v802 = vlaneseq
      %v803 = vand.u32 %v802, 127
      %vm805 = vcmp.lt.s32.totalorder %v803, 672
      %v806 = vsel %vm805, %v800, %v19
      %s807 = scalar_lea.vmem [#allocation7], 96
      %v808 = vpack.c.bf16 0.0, %v806
      %s810 = ssub.s32 16, 1
      %811 = vst [vmem:[%s807] sm:%s810] %v808
      %s812 = scalar_lea.vmem %s419, 100
      %v813 = vld [vmem:[%s812] sm:$0xf]
      %v814 = vunpack.c.l.bf16 %v813
      %v815 = vunpack.c.h.bf16 %v813
      %v816 = vlaneseq
      %v817 = vand.u32 %v816, 127
      %v818 = vadd.s32 %v817, 128
      %vm819 = vcmp.lt.s32.totalorder %v818, 672
      %v820 = vsel %vm819, %v814, %v19
      %s821 = scalar_lea.vmem [#allocation7], 100
      %v822 = vpack.c.bf16 0.0, %v820
      %s824 = ssub.s32 16, 1
      %825 = vst [vmem:[%s821] sm:%s824] %v822
      %s826 = scalar_lea.vmem %s419, 104
      %v827 = vld [vmem:[%s826] sm:$0xf]
      %v828 = vunpack.c.l.bf16 %v827
      %v829 = vunpack.c.h.bf16 %v827
      %v830 = vlaneseq
      %v831 = vand.u32 %v830, 127
      %v832 = vadd.s32 %v831, 256
      %vm833 = vcmp.lt.s32.totalorder %v832, 672
      %v834 = vsel %vm833, %v828, %v19
      %s835 = scalar_lea.vmem [#allocation7], 104
      %v836 = vpack.c.bf16 0.0, %v834
      %s838 = ssub.s32 16, 1
      %839 = vst [vmem:[%s835] sm:%s838] %v836
      %s840 = scalar_lea.vmem %s419, 108
      %v841 = vld [vmem:[%s840] sm:$0xf]
      %v842 = vunpack.c.l.bf16 %v841
      %v843 = vunpack.c.h.bf16 %v841
      %v844 = vlaneseq
      %v845 = vand.u32 %v844, 127
      %v846 = vadd.s32 %v845, 384
      %vm847 = vcmp.lt.s32.totalorder %v846, 672
      %v848 = vsel %vm847, %v842, %v19
      %s849 = scalar_lea.vmem [#allocation7], 108
      %v850 = vpack.c.bf16 0.0, %v848
      %s852 = ssub.s32 16, 1
      %853 = vst [vmem:[%s849] sm:%s852] %v850
      %s854 = scalar_lea.vmem %s419, 112
      %v855 = vld [vmem:[%s854] sm:$0xf]
      %v856 = vunpack.c.l.bf16 %v855
      %v857 = vunpack.c.h.bf16 %v855
      %v858 = vlaneseq
      %v859 = vand.u32 %v858, 127
      %v860 = vadd.s32 %v859, 512
      %vm861 = vcmp.lt.s32.totalorder %v860, 672
      %v862 = vsel %vm861, %v856, %v19
      %s863 = scalar_lea.vmem [#allocation7], 112
      %v864 = vpack.c.bf16 0.0, %v862
      %s866 = ssub.s32 16, 1
      %867 = vst [vmem:[%s863] sm:%s866] %v864
      %s868 = scalar_lea.vmem %s419, 116
      %s870 = sor.u32 255, 127
      %s871 = sand.u32 %s870, 85
      %s872 = sshrl.u32 %s871, 1
      %s873 = sor.u32 %s871, %s872
      %s874 = sand.u32 51, %s873
      %s875 = sshrl.u32 %s874, 2
      %s876 = sor.u32 %s874, %s875
      %s877 = sand.u32 15, %s876
      %v878 = vld [vmem:[%s868] sm:%s877]
      %v879 = vunpack.c.l.bf16 %v878
      %v880 = vunpack.c.h.bf16 %v878
      %v881 = vlaneseq
      %v882 = vand.u32 %v881, 127
      %v883 = vadd.s32 %v882, 640
      %vm884 = vcmp.lt.s32.totalorder %v883, 672
      %v885 = vsel %vm884, %v879, %v19
      %s886 = scalar_lea.vmem [#allocation7], 116
      %v887 = vpack.c.bf16 0.0, %v885
      %s889 = ssub.s32 16, 1
      %890 = vst [vmem:[%s886] sm:%s889] %v887
      %s891 = scalar_lea.vmem %s419, 120
      %v892 = vld [vmem:[%s891] sm:$0xf]
      %v893 = vunpack.c.l.bf16 %v892
      %v894 = vunpack.c.h.bf16 %v892
      %v895 = vlaneseq
      %v896 = vand.u32 %v895, 127
      %vm898 = vcmp.lt.s32.totalorder %v896, 672
      %v899 = vsel %vm898, %v893, %v19
      %s900 = scalar_lea.vmem [#allocation7], 120
      %v901 = vpack.c.bf16 0.0, %v899
      %s903 = ssub.s32 16, 1
      %904 = vst [vmem:[%s900] sm:%s903] %v901
      %s905 = scalar_lea.vmem %s419, 124
      %v906 = vld [vmem:[%s905] sm:$0xf]
      %v907 = vunpack.c.l.bf16 %v906
      %v908 = vunpack.c.h.bf16 %v906
      %v909 = vlaneseq
      %v910 = vand.u32 %v909, 127
      %v911 = vadd.s32 %v910, 128
      %vm912 = vcmp.lt.s32.totalorder %v911, 672
      %v913 = vsel %vm912, %v907, %v19
      %s914 = scalar_lea.vmem [#allocation7], 124
      %v915 = vpack.c.bf16 0.0, %v913
      %s917 = ssub.s32 16, 1
      %918 = vst [vmem:[%s914] sm:%s917] %v915
      %s919 = scalar_lea.vmem %s419, 128
      %v920 = vld [vmem:[%s919] sm:$0xf]
      %v921 = vunpack.c.l.bf16 %v920
      %v922 = vunpack.c.h.bf16 %v920
      %v923 = vlaneseq
      %v924 = vand.u32 %v923, 127
      %v925 = vadd.s32 %v924, 256
      %vm926 = vcmp.lt.s32.totalorder %v925, 672
      %v927 = vsel %vm926, %v921, %v19
      %s928 = scalar_lea.vmem [#allocation7], 128
      %v929 = vpack.c.bf16 0.0, %v927
      %s931 = ssub.s32 16, 1
      %932 = vst [vmem:[%s928] sm:%s931] %v929
      %s933 = scalar_lea.vmem %s419, 132
      %v934 = vld [vmem:[%s933] sm:$0xf]
      %v935 = vunpack.c.l.bf16 %v934
      %v936 = vunpack.c.h.bf16 %v934
      %v937 = vlaneseq
      %v938 = vand.u32 %v937, 127
      %v939 = vadd.s32 %v938, 384
      %vm940 = vcmp.lt.s32.totalorder %v939, 672
      %v941 = vsel %vm940, %v935, %v19
      %s942 = scalar_lea.vmem [#allocation7], 132
      %v943 = vpack.c.bf16 0.0, %v941
      %s945 = ssub.s32 16, 1
      %946 = vst [vmem:[%s942] sm:%s945] %v943
      %s947 = scalar_lea.vmem %s419, 136
      %v948 = vld [vmem:[%s947] sm:$0xf]
      %v949 = vunpack.c.l.bf16 %v948
      %v950 = vunpack.c.h.bf16 %v948
      %v951 = vlaneseq
      %v952 = vand.u32 %v951, 127
      %v953 = vadd.s32 %v952, 512
      %vm954 = vcmp.lt.s32.totalorder %v953, 672
      %v955 = vsel %vm954, %v949, %v19
      %s956 = scalar_lea.vmem [#allocation7], 136
      %v957 = vpack.c.bf16 0.0, %v955
      %s959 = ssub.s32 16, 1
      %960 = vst [vmem:[%s956] sm:%s959] %v957
      %s961 = scalar_lea.vmem %s419, 140
      %s963 = sor.u32 255, 127
      %s964 = sand.u32 %s963, 85
      %s965 = sshrl.u32 %s964, 1
      %s966 = sor.u32 %s964, %s965
      %s967 = sand.u32 51, %s966
      %s968 = sshrl.u32 %s967, 2
      %s969 = sor.u32 %s967, %s968
      %s970 = sand.u32 15, %s969
      %v971 = vld [vmem:[%s961] sm:%s970]
      %v972 = vunpack.c.l.bf16 %v971
      %v973 = vunpack.c.h.bf16 %v971
      %v974 = vlaneseq
      %v975 = vand.u32 %v974, 127
      %v976 = vadd.s32 %v975, 640
      %vm977 = vcmp.lt.s32.totalorder %v976, 672
      %v978 = vsel %vm977, %v972, %v19
      %s979 = scalar_lea.vmem [#allocation7], 140
      %v980 = vpack.c.bf16 0.0, %v978
      %s982 = ssub.s32 16, 1
      %983 = vst [vmem:[%s979] sm:%s982] %v980
      %s984 = scalar_lea.vmem %s419, 144
      %v985 = vld [vmem:[%s984] sm:$0xf]
      %v986 = vunpack.c.l.bf16 %v985
      %v987 = vunpack.c.h.bf16 %v985
      %v988 = vlaneseq
      %v989 = vand.u32 %v988, 127
      %vm991 = vcmp.lt.s32.totalorder %v989, 672
      %v992 = vsel %vm991, %v986, %v19
      %s993 = scalar_lea.vmem [#allocation7], 144
      %v994 = vpack.c.bf16 0.0, %v992
      %s996 = ssub.s32 16, 1
      %997 = vst [vmem:[%s993] sm:%s996] %v994
      %s998 = scalar_lea.vmem %s419, 148
      %v999 = vld [vmem:[%s998] sm:$0xf]
      %v1000 = vunpack.c.l.bf16 %v999
      %v1001 = vunpack.c.h.bf16 %v999
      %v1002 = vlaneseq
      %v1003 = vand.u32 %v1002, 127
      %v1004 = vadd.s32 %v1003, 128
      %vm1005 = vcmp.lt.s32.totalorder %v1004, 672
      %v1006 = vsel %vm1005, %v1000, %v19
      %s1007 = scalar_lea.vmem [#allocation7], 148
      %v1008 = vpack.c.bf16 0.0, %v1006
      %s1010 = ssub.s32 16, 1
      %1011 = vst [vmem:[%s1007] sm:%s1010] %v1008
      %s1012 = scalar_lea.vmem %s419, 152
      %v1013 = vld [vmem:[%s1012] sm:$0xf]
      %v1014 = vunpack.c.l.bf16 %v1013
      %v1015 = vunpack.c.h.bf16 %v1013
      %v1016 = vlaneseq
      %v1017 = vand.u32 %v1016, 127
      %v1018 = vadd.s32 %v1017, 256
      %vm1019 = vcmp.lt.s32.totalorder %v1018, 672
      %v1020 = vsel %vm1019, %v1014, %v19
      %s1021 = scalar_lea.vmem [#allocation7], 152
      %v1022 = vpack.c.bf16 0.0, %v1020
      %s1024 = ssub.s32 16, 1
      %1025 = vst [vmem:[%s1021] sm:%s1024] %v1022
      %s1026 = scalar_lea.vmem %s419, 156
      %v1027 = vld [vmem:[%s1026] sm:$0xf]
      %v1028 = vunpack.c.l.bf16 %v1027
      %v1029 = vunpack.c.h.bf16 %v1027
      %v1030 = vlaneseq
      %v1031 = vand.u32 %v1030, 127
      %v1032 = vadd.s32 %v1031, 384
      %vm1033 = vcmp.lt.s32.totalorder %v1032, 672
      %v1034 = vsel %vm1033, %v1028, %v19
      %s1035 = scalar_lea.vmem [#allocation7], 156
      %v1036 = vpack.c.bf16 0.0, %v1034
      %s1038 = ssub.s32 16, 1
      %1039 = vst [vmem:[%s1035] sm:%s1038] %v1036
      %s1040 = scalar_lea.vmem %s419, 160
      %v1041 = vld [vmem:[%s1040] sm:$0xf]
      %v1042 = vunpack.c.l.bf16 %v1041
      %v1043 = vunpack.c.h.bf16 %v1041
      %v1044 = vlaneseq
      %v1045 = vand.u32 %v1044, 127
      %v1046 = vadd.s32 %v1045, 512
      %vm1047 = vcmp.lt.s32.totalorder %v1046, 672
      %v1048 = vsel %vm1047, %v1042, %v19
      %s1049 = scalar_lea.vmem [#allocation7], 160
      %v1050 = vpack.c.bf16 0.0, %v1048
      %s1052 = ssub.s32 16, 1
      %1053 = vst [vmem:[%s1049] sm:%s1052] %v1050
      %s1054 = scalar_lea.vmem %s419, 164
      %s1056 = sor.u32 255, 127
      %s1057 = sand.u32 %s1056, 85
      %s1058 = sshrl.u32 %s1057, 1
      %s1059 = sor.u32 %s1057, %s1058
      %s1060 = sand.u32 51, %s1059
      %s1061 = sshrl.u32 %s1060, 2
      %s1062 = sor.u32 %s1060, %s1061
      %s1063 = sand.u32 15, %s1062
      %v1064 = vld [vmem:[%s1054] sm:%s1063]
      %v1065 = vunpack.c.l.bf16 %v1064
      %v1066 = vunpack.c.h.bf16 %v1064
      %v1067 = vlaneseq
      %v1068 = vand.u32 %v1067, 127
      %v1069 = vadd.s32 %v1068, 640
      %vm1070 = vcmp.lt.s32.totalorder %v1069, 672
      %v1071 = vsel %vm1070, %v1065, %v19
      %s1072 = scalar_lea.vmem [#allocation7], 164
      %v1073 = vpack.c.bf16 0.0, %v1071
      %s1075 = ssub.s32 16, 1
      %1076 = vst [vmem:[%s1072] sm:%s1075] %v1073
      %s1077 = scalar_lea.vmem %s419, 168
      %v1078 = vld [vmem:[%s1077] sm:$0xf]
      %v1079 = vunpack.c.l.bf16 %v1078
      %v1080 = vunpack.c.h.bf16 %v1078
      %v1081 = vlaneseq
      %v1082 = vand.u32 %v1081, 127
      %vm1084 = vcmp.lt.s32.totalorder %v1082, 672
      %v1085 = vsel %vm1084, %v1079, %v19
      %s1086 = scalar_lea.vmem [#allocation7], 168
      %v1087 = vpack.c.bf16 0.0, %v1085
      %s1089 = ssub.s32 16, 1
      %1090 = vst [vmem:[%s1086] sm:%s1089] %v1087
      %s1091 = scalar_lea.vmem %s419, 172
      %v1092 = vld [vmem:[%s1091] sm:$0xf]
      %v1093 = vunpack.c.l.bf16 %v1092
      %v1094 = vunpack.c.h.bf16 %v1092
      %v1095 = vlaneseq
      %v1096 = vand.u32 %v1095, 127
      %v1097 = vadd.s32 %v1096, 128
      %vm1098 = vcmp.lt.s32.totalorder %v1097, 672
      %v1099 = vsel %vm1098, %v1093, %v19
      %s1100 = scalar_lea.vmem [#allocation7], 172
      %v1101 = vpack.c.bf16 0.0, %v1099
      %s1103 = ssub.s32 16, 1
      %1104 = vst [vmem:[%s1100] sm:%s1103] %v1101
      %s1105 = scalar_lea.vmem %s419, 176
      %v1106 = vld [vmem:[%s1105] sm:$0xf]
      %v1107 = vunpack.c.l.bf16 %v1106
      %v1108 = vunpack.c.h.bf16 %v1106
      %v1109 = vlaneseq
      %v1110 = vand.u32 %v1109, 127
      %v1111 = vadd.s32 %v1110, 256
      %vm1112 = vcmp.lt.s32.totalorder %v1111, 672
      %v1113 = vsel %vm1112, %v1107, %v19
      %s1114 = scalar_lea.vmem [#allocation7], 176
      %v1115 = vpack.c.bf16 0.0, %v1113
      %s1117 = ssub.s32 16, 1
      %1118 = vst [vmem:[%s1114] sm:%s1117] %v1115
      %s1119 = scalar_lea.vmem %s419, 180
      %v1120 = vld [vmem:[%s1119] sm:$0xf]
      %v1121 = vunpack.c.l.bf16 %v1120
      %v1122 = vunpack.c.h.bf16 %v1120
      %v1123 = vlaneseq
      %v1124 = vand.u32 %v1123, 127
      %v1125 = vadd.s32 %v1124, 384
      %vm1126 = vcmp.lt.s32.totalorder %v1125, 672
      %v1127 = vsel %vm1126, %v1121, %v19
      %s1128 = scalar_lea.vmem [#allocation7], 180
      %v1129 = vpack.c.bf16 0.0, %v1127
      %s1131 = ssub.s32 16, 1
      %1132 = vst [vmem:[%s1128] sm:%s1131] %v1129
      %s1133 = scalar_lea.vmem %s419, 184
      %v1134 = vld [vmem:[%s1133] sm:$0xf]
      %v1135 = vunpack.c.l.bf16 %v1134
      %v1136 = vunpack.c.h.bf16 %v1134
      %v1137 = vlaneseq
      %v1138 = vand.u32 %v1137, 127
      %v1139 = vadd.s32 %v1138, 512
      %vm1140 = vcmp.lt.s32.totalorder %v1139, 672
      %v1141 = vsel %vm1140, %v1135, %v19
      %s1142 = scalar_lea.vmem [#allocation7], 184
      %v1143 = vpack.c.bf16 0.0, %v1141
      %s1145 = ssub.s32 16, 1
      %1146 = vst [vmem:[%s1142] sm:%s1145] %v1143
      %s1147 = scalar_lea.vmem %s419, 188
      %s1149 = sor.u32 255, 127
      %s1150 = sand.u32 %s1149, 85
      %s1151 = sshrl.u32 %s1150, 1
      %s1152 = sor.u32 %s1150, %s1151
      %s1153 = sand.u32 51, %s1152
      %s1154 = sshrl.u32 %s1153, 2
      %s1155 = sor.u32 %s1153, %s1154
      %s1156 = sand.u32 15, %s1155
      %v1157 = vld [vmem:[%s1147] sm:%s1156]
      %v1158 = vunpack.c.l.bf16 %v1157
      %v1159 = vunpack.c.h.bf16 %v1157
      %v1160 = vlaneseq
      %v1161 = vand.u32 %v1160, 127
      %v1162 = vadd.s32 %v1161, 640
      %vm1163 = vcmp.lt.s32.totalorder %v1162, 672
      %v1164 = vsel %vm1163, %v1158, %v19
      %s1165 = scalar_lea.vmem [#allocation7], 188
      %v1166 = vpack.c.bf16 0.0, %v1164
      %s1168 = ssub.s32 16, 1
      %1169 = vst [vmem:[%s1165] sm:%s1168] %v1166
      %s1170 = scalar_lea.vmem %s419, 192
      %v1171 = vld [vmem:[%s1170] sm:$0xf]
      %v1172 = vunpack.c.l.bf16 %v1171
      %v1173 = vunpack.c.h.bf16 %v1171
      %v1174 = vlaneseq
      %v1175 = vand.u32 %v1174, 127
      %vm1177 = vcmp.lt.s32.totalorder %v1175, 672
      %v1178 = vsel %vm1177, %v1172, %v19
      %s1179 = scalar_lea.vmem [#allocation7], 192
      %v1180 = vpack.c.bf16 0.0, %v1178
      %s1182 = ssub.s32 16, 1
      %1183 = vst [vmem:[%s1179] sm:%s1182] %v1180
      %s1184 = scalar_lea.vmem %s419, 196
      %v1185 = vld [vmem:[%s1184] sm:$0xf]
      %v1186 = vunpack.c.l.bf16 %v1185
      %v1187 = vunpack.c.h.bf16 %v1185
      %v1188 = vlaneseq
      %v1189 = vand.u32 %v1188, 127
      %v1190 = vadd.s32 %v1189, 128
      %vm1191 = vcmp.lt.s32.totalorder %v1190, 672
      %v1192 = vsel %vm1191, %v1186, %v19
      %s1193 = scalar_lea.vmem [#allocation7], 196
      %v1194 = vpack.c.bf16 0.0, %v1192
      %s1196 = ssub.s32 16, 1
      %1197 = vst [vmem:[%s1193] sm:%s1196] %v1194
      %s1198 = scalar_lea.vmem %s419, 200
      %v1199 = vld [vmem:[%s1198] sm:$0xf]
      %v1200 = vunpack.c.l.bf16 %v1199
      %v1201 = vunpack.c.h.bf16 %v1199
      %v1202 = vlaneseq
      %v1203 = vand.u32 %v1202, 127
      %v1204 = vadd.s32 %v1203, 256
      %vm1205 = vcmp.lt.s32.totalorder %v1204, 672
      %v1206 = vsel %vm1205, %v1200, %v19
      %s1207 = scalar_lea.vmem [#allocation7], 200
      %v1208 = vpack.c.bf16 0.0, %v1206
      %s1210 = ssub.s32 16, 1
      %1211 = vst [vmem:[%s1207] sm:%s1210] %v1208
      %s1212 = scalar_lea.vmem %s419, 204
      %v1213 = vld [vmem:[%s1212] sm:$0xf]
      %v1214 = vunpack.c.l.bf16 %v1213
      %v1215 = vunpack.c.h.bf16 %v1213
      %v1216 = vlaneseq
      %v1217 = vand.u32 %v1216, 127
      %v1218 = vadd.s32 %v1217, 384
      %vm1219 = vcmp.lt.s32.totalorder %v1218, 672
      %v1220 = vsel %vm1219, %v1214, %v19
      %s1221 = scalar_lea.vmem [#allocation7], 204
      %v1222 = vpack.c.bf16 0.0, %v1220
      %s1224 = ssub.s32 16, 1
      %1225 = vst [vmem:[%s1221] sm:%s1224] %v1222
      %s1226 = scalar_lea.vmem %s419, 208
      %v1227 = vld [vmem:[%s1226] sm:$0xf]
      %v1228 = vunpack.c.l.bf16 %v1227
      %v1229 = vunpack.c.h.bf16 %v1227
      %v1230 = vlaneseq
      %v1231 = vand.u32 %v1230, 127
      %v1232 = vadd.s32 %v1231, 512
      %vm1233 = vcmp.lt.s32.totalorder %v1232, 672
      %v1234 = vsel %vm1233, %v1228, %v19
      %s1235 = scalar_lea.vmem [#allocation7], 208
      %v1236 = vpack.c.bf16 0.0, %v1234
      %s1238 = ssub.s32 16, 1
      %1239 = vst [vmem:[%s1235] sm:%s1238] %v1236
      %s1240 = scalar_lea.vmem %s419, 212
      %s1242 = sor.u32 255, 127
      %s1243 = sand.u32 %s1242, 85
      %s1244 = sshrl.u32 %s1243, 1
      %s1245 = sor.u32 %s1243, %s1244
      %s1246 = sand.u32 51, %s1245
      %s1247 = sshrl.u32 %s1246, 2
      %s1248 = sor.u32 %s1246, %s1247
      %s1249 = sand.u32 15, %s1248
      %v1250 = vld [vmem:[%s1240] sm:%s1249]
      %v1251 = vunpack.c.l.bf16 %v1250
      %v1252 = vunpack.c.h.bf16 %v1250
      %v1253 = vlaneseq
      %v1254 = vand.u32 %v1253, 127
      %v1255 = vadd.s32 %v1254, 640
      %vm1256 = vcmp.lt.s32.totalorder %v1255, 672
      %v1257 = vsel %vm1256, %v1251, %v19
      %s1258 = scalar_lea.vmem [#allocation7], 212
      %v1259 = vpack.c.bf16 0.0, %v1257
      %s1261 = ssub.s32 16, 1
      %1262 = vst [vmem:[%s1258] sm:%s1261] %v1259
      %s1263 = scalar_lea.vmem %s419, 216
      %v1264 = vld [vmem:[%s1263] sm:$0xf]
      %v1265 = vunpack.c.l.bf16 %v1264
      %v1266 = vunpack.c.h.bf16 %v1264
      %v1267 = vlaneseq
      %v1268 = vand.u32 %v1267, 127
      %vm1270 = vcmp.lt.s32.totalorder %v1268, 672
      %v1271 = vsel %vm1270, %v1265, %v19
      %s1272 = scalar_lea.vmem [#allocation7], 216
      %v1273 = vpack.c.bf16 0.0, %v1271
      %s1275 = ssub.s32 16, 1
      %1276 = vst [vmem:[%s1272] sm:%s1275] %v1273
      %s1277 = scalar_lea.vmem %s419, 220
      %v1278 = vld [vmem:[%s1277] sm:$0xf]
      %v1279 = vunpack.c.l.bf16 %v1278
      %v1280 = vunpack.c.h.bf16 %v1278
      %v1281 = vlaneseq
      %v1282 = vand.u32 %v1281, 127
      %v1283 = vadd.s32 %v1282, 128
      %vm1284 = vcmp.lt.s32.totalorder %v1283, 672
      %v1285 = vsel %vm1284, %v1279, %v19
      %s1286 = scalar_lea.vmem [#allocation7], 220
      %v1287 = vpack.c.bf16 0.0, %v1285
      %s1289 = ssub.s32 16, 1
      %1290 = vst [vmem:[%s1286] sm:%s1289] %v1287
      %s1291 = scalar_lea.vmem %s419, 224
      %v1292 = vld [vmem:[%s1291] sm:$0xf]
      %v1293 = vunpack.c.l.bf16 %v1292
      %v1294 = vunpack.c.h.bf16 %v1292
      %v1295 = vlaneseq
      %v1296 = vand.u32 %v1295, 127
      %v1297 = vadd.s32 %v1296, 256
      %vm1298 = vcmp.lt.s32.totalorder %v1297, 672
      %v1299 = vsel %vm1298, %v1293, %v19
      %s1300 = scalar_lea.vmem [#allocation7], 224
      %v1301 = vpack.c.bf16 0.0, %v1299
      %s1303 = ssub.s32 16, 1
      %1304 = vst [vmem:[%s1300] sm:%s1303] %v1301
      %s1305 = scalar_lea.vmem %s419, 228
      %v1306 = vld [vmem:[%s1305] sm:$0xf]
      %v1307 = vunpack.c.l.bf16 %v1306
      %v1308 = vunpack.c.h.bf16 %v1306
      %v1309 = vlaneseq
      %v1310 = vand.u32 %v1309, 127
      %v1311 = vadd.s32 %v1310, 384
      %vm1312 = vcmp.lt.s32.totalorder %v1311, 672
      %v1313 = vsel %vm1312, %v1307, %v19
      %s1314 = scalar_lea.vmem [#allocation7], 228
      %v1315 = vpack.c.bf16 0.0, %v1313
      %s1317 = ssub.s32 16, 1
      %1318 = vst [vmem:[%s1314] sm:%s1317] %v1315
      %s1319 = scalar_lea.vmem %s419, 232
      %v1320 = vld [vmem:[%s1319] sm:$0xf]
      %v1321 = vunpack.c.l.bf16 %v1320
      %v1322 = vunpack.c.h.bf16 %v1320
      %v1323 = vlaneseq
      %v1324 = vand.u32 %v1323, 127
      %v1325 = vadd.s32 %v1324, 512
      %vm1326 = vcmp.lt.s32.totalorder %v1325, 672
      %v1327 = vsel %vm1326, %v1321, %v19
      %s1328 = scalar_lea.vmem [#allocation7], 232
      %v1329 = vpack.c.bf16 0.0, %v1327
      %s1331 = ssub.s32 16, 1
      %1332 = vst [vmem:[%s1328] sm:%s1331] %v1329
      %s1333 = scalar_lea.vmem %s419, 236
      %s1335 = sor.u32 255, 127
      %s1336 = sand.u32 %s1335, 85
      %s1337 = sshrl.u32 %s1336, 1
      %s1338 = sor.u32 %s1336, %s1337
      %s1339 = sand.u32 51, %s1338
      %s1340 = sshrl.u32 %s1339, 2
      %s1341 = sor.u32 %s1339, %s1340
      %s1342 = sand.u32 15, %s1341
      %v1343 = vld [vmem:[%s1333] sm:%s1342]
      %v1344 = vunpack.c.l.bf16 %v1343
      %v1345 = vunpack.c.h.bf16 %v1343
      %v1346 = vlaneseq
      %v1347 = vand.u32 %v1346, 127
      %v1348 = vadd.s32 %v1347, 640
      %vm1349 = vcmp.lt.s32.totalorder %v1348, 672
      %v1350 = vsel %vm1349, %v1344, %v19
      %s1351 = scalar_lea.vmem [#allocation7], 236
      %v1352 = vpack.c.bf16 0.0, %v1350
      %s1354 = ssub.s32 16, 1
      %1355 = vst [vmem:[%s1351] sm:%s1354] %v1352
      %s1356 = scalar_lea.vmem %s419, 240
      %v1357 = vld [vmem:[%s1356] sm:$0xf]
      %v1358 = vunpack.c.l.bf16 %v1357
      %v1359 = vunpack.c.h.bf16 %v1357
      %v1360 = vlaneseq
      %v1361 = vand.u32 %v1360, 127
      %vm1363 = vcmp.lt.s32.totalorder %v1361, 672
      %v1364 = vsel %vm1363, %v1358, %v19
      %s1365 = scalar_lea.vmem [#allocation7], 240
      %v1366 = vpack.c.bf16 0.0, %v1364
      %s1368 = ssub.s32 16, 1
      %1369 = vst [vmem:[%s1365] sm:%s1368] %v1366
      %s1370 = scalar_lea.vmem %s419, 244
      %v1371 = vld [vmem:[%s1370] sm:$0xf]
      %v1372 = vunpack.c.l.bf16 %v1371
      %v1373 = vunpack.c.h.bf16 %v1371
      %v1374 = vlaneseq
      %v1375 = vand.u32 %v1374, 127
      %v1376 = vadd.s32 %v1375, 128
      %vm1377 = vcmp.lt.s32.totalorder %v1376, 672
      %v1378 = vsel %vm1377, %v1372, %v19
      %s1379 = scalar_lea.vmem [#allocation7], 244
      %v1380 = vpack.c.bf16 0.0, %v1378
      %s1382 = ssub.s32 16, 1
      %1383 = vst [vmem:[%s1379] sm:%s1382] %v1380
      %s1384 = scalar_lea.vmem %s419, 248
      %v1385 = vld [vmem:[%s1384] sm:$0xf]
      %v1386 = vunpack.c.l.bf16 %v1385
      %v1387 = vunpack.c.h.bf16 %v1385
      %v1388 = vlaneseq
      %v1389 = vand.u32 %v1388, 127
      %v1390 = vadd.s32 %v1389, 256
      %vm1391 = vcmp.lt.s32.totalorder %v1390, 672
      %v1392 = vsel %vm1391, %v1386, %v19
      %s1393 = scalar_lea.vmem [#allocation7], 248
      %v1394 = vpack.c.bf16 0.0, %v1392
      %s1396 = ssub.s32 16, 1
      %1397 = vst [vmem:[%s1393] sm:%s1396] %v1394
      %s1398 = scalar_lea.vmem %s419, 252
      %v1399 = vld [vmem:[%s1398] sm:$0xf]
      %v1400 = vunpack.c.l.bf16 %v1399
      %v1401 = vunpack.c.h.bf16 %v1399
      %v1402 = vlaneseq
      %v1403 = vand.u32 %v1402, 127
      %v1404 = vadd.s32 %v1403, 384
      %vm1405 = vcmp.lt.s32.totalorder %v1404, 672
      %v1406 = vsel %vm1405, %v1400, %v19
      %s1407 = scalar_lea.vmem [#allocation7], 252
      %v1408 = vpack.c.bf16 0.0, %v1406
      %s1410 = ssub.s32 16, 1
      %1411 = vst [vmem:[%s1407] sm:%s1410] %v1408
      %s1412 = scalar_lea.vmem %s419, 256
      %v1413 = vld [vmem:[%s1412] sm:$0xf]
      %v1414 = vunpack.c.l.bf16 %v1413
      %v1415 = vunpack.c.h.bf16 %v1413
      %v1416 = vlaneseq
      %v1417 = vand.u32 %v1416, 127
      %v1418 = vadd.s32 %v1417, 512
      %vm1419 = vcmp.lt.s32.totalorder %v1418, 672
      %v1420 = vsel %vm1419, %v1414, %v19
      %s1421 = scalar_lea.vmem [#allocation7], 256
      %v1422 = vpack.c.bf16 0.0, %v1420
      %s1424 = ssub.s32 16, 1
      %1425 = vst [vmem:[%s1421] sm:%s1424] %v1422
      %s1426 = scalar_lea.vmem %s419, 260
      %s1428 = sor.u32 255, 127
      %s1429 = sand.u32 %s1428, 85
      %s1430 = sshrl.u32 %s1429, 1
      %s1431 = sor.u32 %s1429, %s1430
      %s1432 = sand.u32 51, %s1431
      %s1433 = sshrl.u32 %s1432, 2
      %s1434 = sor.u32 %s1432, %s1433
      %s1435 = sand.u32 15, %s1434
      %v1436 = vld [vmem:[%s1426] sm:%s1435]
      %v1437 = vunpack.c.l.bf16 %v1436
      %v1438 = vunpack.c.h.bf16 %v1436
      %v1439 = vlaneseq
      %v1440 = vand.u32 %v1439, 127
      %v1441 = vadd.s32 %v1440, 640
      %vm1442 = vcmp.lt.s32.totalorder %v1441, 672
      %v1443 = vsel %vm1442, %v1437, %v19
      %s1444 = scalar_lea.vmem [#allocation7], 260
      %v1445 = vpack.c.bf16 0.0, %v1443
      %s1447 = ssub.s32 16, 1
      %1448 = vst [vmem:[%s1444] sm:%s1447] %v1445
      %s1449 = scalar_lea.vmem %s419, 264
      %v1450 = vld [vmem:[%s1449] sm:$0xf]
      %v1451 = vunpack.c.l.bf16 %v1450
      %v1452 = vunpack.c.h.bf16 %v1450
      %v1453 = vlaneseq
      %v1454 = vand.u32 %v1453, 127
      %vm1456 = vcmp.lt.s32.totalorder %v1454, 672
      %v1457 = vsel %vm1456, %v1451, %v19
      %s1458 = scalar_lea.vmem [#allocation7], 264
      %v1459 = vpack.c.bf16 0.0, %v1457
      %s1461 = ssub.s32 16, 1
      %1462 = vst [vmem:[%s1458] sm:%s1461] %v1459
      %s1463 = scalar_lea.vmem %s419, 268
      %v1464 = vld [vmem:[%s1463] sm:$0xf]
      %v1465 = vunpack.c.l.bf16 %v1464
      %v1466 = vunpack.c.h.bf16 %v1464
      %v1467 = vlaneseq
      %v1468 = vand.u32 %v1467, 127
      %v1469 = vadd.s32 %v1468, 128
      %vm1470 = vcmp.lt.s32.totalorder %v1469, 672
      %v1471 = vsel %vm1470, %v1465, %v19
      %s1472 = scalar_lea.vmem [#allocation7], 268
      %v1473 = vpack.c.bf16 0.0, %v1471
      %s1475 = ssub.s32 16, 1
      %1476 = vst [vmem:[%s1472] sm:%s1475] %v1473
      %s1477 = scalar_lea.vmem %s419, 272
      %v1478 = vld [vmem:[%s1477] sm:$0xf]
      %v1479 = vunpack.c.l.bf16 %v1478
      %v1480 = vunpack.c.h.bf16 %v1478
      %v1481 = vlaneseq
      %v1482 = vand.u32 %v1481, 127
      %v1483 = vadd.s32 %v1482, 256
      %vm1484 = vcmp.lt.s32.totalorder %v1483, 672
      %v1485 = vsel %vm1484, %v1479, %v19
      %s1486 = scalar_lea.vmem [#allocation7], 272
      %v1487 = vpack.c.bf16 0.0, %v1485
      %s1489 = ssub.s32 16, 1
      %1490 = vst [vmem:[%s1486] sm:%s1489] %v1487
      %s1491 = scalar_lea.vmem %s419, 276
      %v1492 = vld [vmem:[%s1491] sm:$0xf]
      %v1493 = vunpack.c.l.bf16 %v1492
      %v1494 = vunpack.c.h.bf16 %v1492
      %v1495 = vlaneseq
      %v1496 = vand.u32 %v1495, 127
      %v1497 = vadd.s32 %v1496, 384
      %vm1498 = vcmp.lt.s32.totalorder %v1497, 672
      %v1499 = vsel %vm1498, %v1493, %v19
      %s1500 = scalar_lea.vmem [#allocation7], 276
      %v1501 = vpack.c.bf16 0.0, %v1499
      %s1503 = ssub.s32 16, 1
      %1504 = vst [vmem:[%s1500] sm:%s1503] %v1501
      %s1505 = scalar_lea.vmem %s419, 280
      %v1506 = vld [vmem:[%s1505] sm:$0xf]
      %v1507 = vunpack.c.l.bf16 %v1506
      %v1508 = vunpack.c.h.bf16 %v1506
      %v1509 = vlaneseq
      %v1510 = vand.u32 %v1509, 127
      %v1511 = vadd.s32 %v1510, 512
      %vm1512 = vcmp.lt.s32.totalorder %v1511, 672
      %v1513 = vsel %vm1512, %v1507, %v19
      %s1514 = scalar_lea.vmem [#allocation7], 280
      %v1515 = vpack.c.bf16 0.0, %v1513
      %s1517 = ssub.s32 16, 1
      %1518 = vst [vmem:[%s1514] sm:%s1517] %v1515
      %s1519 = scalar_lea.vmem %s419, 284
      %s1521 = sor.u32 255, 127
      %s1522 = sand.u32 %s1521, 85
      %s1523 = sshrl.u32 %s1522, 1
      %s1524 = sor.u32 %s1522, %s1523
      %s1525 = sand.u32 51, %s1524
      %s1526 = sshrl.u32 %s1525, 2
      %s1527 = sor.u32 %s1525, %s1526
      %s1528 = sand.u32 15, %s1527
      %v1529 = vld [vmem:[%s1519] sm:%s1528]
      %v1530 = vunpack.c.l.bf16 %v1529
      %v1531 = vunpack.c.h.bf16 %v1529
      %v1532 = vlaneseq
      %v1533 = vand.u32 %v1532, 127
      %v1534 = vadd.s32 %v1533, 640
      %vm1535 = vcmp.lt.s32.totalorder %v1534, 672
      %v1536 = vsel %vm1535, %v1530, %v19
      %s1537 = scalar_lea.vmem [#allocation7], 284
      %v1538 = vpack.c.bf16 0.0, %v1536
      %s1540 = ssub.s32 16, 1
      %1541 = vst [vmem:[%s1537] sm:%s1540] %v1538
      %s1542 = scalar_lea.vmem %s419, 288
      %v1543 = vld [vmem:[%s1542] sm:$0xf]
      %v1544 = vunpack.c.l.bf16 %v1543
      %v1545 = vunpack.c.h.bf16 %v1543
      %v1546 = vlaneseq
      %v1547 = vand.u32 %v1546, 127
      %vm1549 = vcmp.lt.s32.totalorder %v1547, 672
      %v1550 = vsel %vm1549, %v1544, %v19
      %s1551 = scalar_lea.vmem [#allocation7], 288
      %v1552 = vpack.c.bf16 0.0, %v1550
      %s1554 = ssub.s32 16, 1
      %1555 = vst [vmem:[%s1551] sm:%s1554] %v1552
      %s1556 = scalar_lea.vmem %s419, 292
      %v1557 = vld [vmem:[%s1556] sm:$0xf]
      %v1558 = vunpack.c.l.bf16 %v1557
      %v1559 = vunpack.c.h.bf16 %v1557
      %v1560 = vlaneseq
      %v1561 = vand.u32 %v1560, 127
      %v1562 = vadd.s32 %v1561, 128
      %vm1563 = vcmp.lt.s32.totalorder %v1562, 672
      %v1564 = vsel %vm1563, %v1558, %v19
      %s1565 = scalar_lea.vmem [#allocation7], 292
      %v1566 = vpack.c.bf16 0.0, %v1564
      %s1568 = ssub.s32 16, 1
      %1569 = vst [vmem:[%s1565] sm:%s1568] %v1566
      %s1570 = scalar_lea.vmem %s419, 296
      %v1571 = vld [vmem:[%s1570] sm:$0xf]
      %v1572 = vunpack.c.l.bf16 %v1571
      %v1573 = vunpack.c.h.bf16 %v1571
      %v1574 = vlaneseq
      %v1575 = vand.u32 %v1574, 127
      %v1576 = vadd.s32 %v1575, 256
      %vm1577 = vcmp.lt.s32.totalorder %v1576, 672
      %v1578 = vsel %vm1577, %v1572, %v19
      %s1579 = scalar_lea.vmem [#allocation7], 296
      %v1580 = vpack.c.bf16 0.0, %v1578
      %s1582 = ssub.s32 16, 1
      %1583 = vst [vmem:[%s1579] sm:%s1582] %v1580
      %s1584 = scalar_lea.vmem %s419, 300
      %v1585 = vld [vmem:[%s1584] sm:$0xf]
      %v1586 = vunpack.c.l.bf16 %v1585
      %v1587 = vunpack.c.h.bf16 %v1585
      %v1588 = vlaneseq
      %v1589 = vand.u32 %v1588, 127
      %v1590 = vadd.s32 %v1589, 384
      %vm1591 = vcmp.lt.s32.totalorder %v1590, 672
      %v1592 = vsel %vm1591, %v1586, %v19
      %s1593 = scalar_lea.vmem [#allocation7], 300
      %v1594 = vpack.c.bf16 0.0, %v1592
      %s1596 = ssub.s32 16, 1
      %1597 = vst [vmem:[%s1593] sm:%s1596] %v1594
      %s1598 = scalar_lea.vmem %s419, 304
      %v1599 = vld [vmem:[%s1598] sm:$0xf]
      %v1600 = vunpack.c.l.bf16 %v1599
      %v1601 = vunpack.c.h.bf16 %v1599
      %v1602 = vlaneseq
      %v1603 = vand.u32 %v1602, 127
      %v1604 = vadd.s32 %v1603, 512
      %vm1605 = vcmp.lt.s32.totalorder %v1604, 672
      %v1606 = vsel %vm1605, %v1600, %v19
      %s1607 = scalar_lea.vmem [#allocation7], 304
      %v1608 = vpack.c.bf16 0.0, %v1606
      %s1610 = ssub.s32 16, 1
      %1611 = vst [vmem:[%s1607] sm:%s1610] %v1608
      %s1612 = scalar_lea.vmem %s419, 308
      %s1614 = sor.u32 255, 127
      %s1615 = sand.u32 %s1614, 85
      %s1616 = sshrl.u32 %s1615, 1
      %s1617 = sor.u32 %s1615, %s1616
      %s1618 = sand.u32 51, %s1617
      %s1619 = sshrl.u32 %s1618, 2
      %s1620 = sor.u32 %s1618, %s1619
      %s1621 = sand.u32 15, %s1620
      %v1622 = vld [vmem:[%s1612] sm:%s1621]
      %v1623 = vunpack.c.l.bf16 %v1622
      %v1624 = vunpack.c.h.bf16 %v1622
      %v1625 = vlaneseq
      %v1626 = vand.u32 %v1625, 127
      %v1627 = vadd.s32 %v1626, 640
      %vm1628 = vcmp.lt.s32.totalorder %v1627, 672
      %v1629 = vsel %vm1628, %v1623, %v19
      %s1630 = scalar_lea.vmem [#allocation7], 308
      %v1631 = vpack.c.bf16 0.0, %v1629
      %s1633 = ssub.s32 16, 1
      %1634 = vst [vmem:[%s1630] sm:%s1633] %v1631
      %s1635 = scalar_lea.vmem %s419, 312
      %v1636 = vld [vmem:[%s1635] sm:$0xf]
      %v1637 = vunpack.c.l.bf16 %v1636
      %v1638 = vunpack.c.h.bf16 %v1636
      %v1639 = vlaneseq
      %v1640 = vand.u32 %v1639, 127
      %vm1642 = vcmp.lt.s32.totalorder %v1640, 672
      %v1643 = vsel %vm1642, %v1637, %v19
      %s1644 = scalar_lea.vmem [#allocation7], 312
      %v1645 = vpack.c.bf16 0.0, %v1643
      %s1647 = ssub.s32 16, 1
      %1648 = vst [vmem:[%s1644] sm:%s1647] %v1645
      %s1649 = scalar_lea.vmem %s419, 316
      %v1650 = vld [vmem:[%s1649] sm:$0xf]
      %v1651 = vunpack.c.l.bf16 %v1650
      %v1652 = vunpack.c.h.bf16 %v1650
      %v1653 = vlaneseq
      %v1654 = vand.u32 %v1653, 127
      %v1655 = vadd.s32 %v1654, 128
      %vm1656 = vcmp.lt.s32.totalorder %v1655, 672
      %v1657 = vsel %vm1656, %v1651, %v19
      %s1658 = scalar_lea.vmem [#allocation7], 316
      %v1659 = vpack.c.bf16 0.0, %v1657
      %s1661 = ssub.s32 16, 1
      %1662 = vst [vmem:[%s1658] sm:%s1661] %v1659
      %s1663 = scalar_lea.vmem %s419, 320
      %v1664 = vld [vmem:[%s1663] sm:$0xf]
      %v1665 = vunpack.c.l.bf16 %v1664
      %v1666 = vunpack.c.h.bf16 %v1664
      %v1667 = vlaneseq
      %v1668 = vand.u32 %v1667, 127
      %v1669 = vadd.s32 %v1668, 256
      %vm1670 = vcmp.lt.s32.totalorder %v1669, 672
      %v1671 = vsel %vm1670, %v1665, %v19
      %s1672 = scalar_lea.vmem [#allocation7], 320
      %v1673 = vpack.c.bf16 0.0, %v1671
      %s1675 = ssub.s32 16, 1
      %1676 = vst [vmem:[%s1672] sm:%s1675] %v1673
      %s1677 = scalar_lea.vmem %s419, 324
      %v1678 = vld [vmem:[%s1677] sm:$0xf]
      %v1679 = vunpack.c.l.bf16 %v1678
      %v1680 = vunpack.c.h.bf16 %v1678
      %v1681 = vlaneseq
      %v1682 = vand.u32 %v1681, 127
      %v1683 = vadd.s32 %v1682, 384
      %vm1684 = vcmp.lt.s32.totalorder %v1683, 672
      %v1685 = vsel %vm1684, %v1679, %v19
      %s1686 = scalar_lea.vmem [#allocation7], 324
      %v1687 = vpack.c.bf16 0.0, %v1685
      %s1689 = ssub.s32 16, 1
      %1690 = vst [vmem:[%s1686] sm:%s1689] %v1687
      %s1691 = scalar_lea.vmem %s419, 328
      %v1692 = vld [vmem:[%s1691] sm:$0xf]
      %v1693 = vunpack.c.l.bf16 %v1692
      %v1694 = vunpack.c.h.bf16 %v1692
      %v1695 = vlaneseq
      %v1696 = vand.u32 %v1695, 127
      %v1697 = vadd.s32 %v1696, 512
      %vm1698 = vcmp.lt.s32.totalorder %v1697, 672
      %v1699 = vsel %vm1698, %v1693, %v19
      %s1700 = scalar_lea.vmem [#allocation7], 328
      %v1701 = vpack.c.bf16 0.0, %v1699
      %s1703 = ssub.s32 16, 1
      %1704 = vst [vmem:[%s1700] sm:%s1703] %v1701
      %s1705 = scalar_lea.vmem %s419, 332
      %s1707 = sor.u32 255, 127
      %s1708 = sand.u32 %s1707, 85
      %s1709 = sshrl.u32 %s1708, 1
      %s1710 = sor.u32 %s1708, %s1709
      %s1711 = sand.u32 51, %s1710
      %s1712 = sshrl.u32 %s1711, 2
      %s1713 = sor.u32 %s1711, %s1712
      %s1714 = sand.u32 15, %s1713
      %v1715 = vld [vmem:[%s1705] sm:%s1714]
      %v1716 = vunpack.c.l.bf16 %v1715
      %v1717 = vunpack.c.h.bf16 %v1715
      %v1718 = vlaneseq
      %v1719 = vand.u32 %v1718, 127
      %v1720 = vadd.s32 %v1719, 640
      %vm1721 = vcmp.lt.s32.totalorder %v1720, 672
      %v1722 = vsel %vm1721, %v1716, %v19
      %s1723 = scalar_lea.vmem [#allocation7], 332
      %v1724 = vpack.c.bf16 0.0, %v1722
      %s1726 = ssub.s32 16, 1
      %1727 = vst [vmem:[%s1723] sm:%s1726] %v1724
      %s1728 = scalar_lea.vmem %s419, 336
      %v1729 = vld [vmem:[%s1728] sm:$0xf]
      %v1730 = vunpack.c.l.bf16 %v1729
      %v1731 = vunpack.c.h.bf16 %v1729
      %v1732 = vlaneseq
      %v1733 = vand.u32 %v1732, 127
      %vm1735 = vcmp.lt.s32.totalorder %v1733, 672
      %v1736 = vsel %vm1735, %v1730, %v19
      %s1737 = scalar_lea.vmem [#allocation7], 336
      %v1738 = vpack.c.bf16 0.0, %v1736
      %s1740 = ssub.s32 16, 1
      %1741 = vst [vmem:[%s1737] sm:%s1740] %v1738
      %s1742 = scalar_lea.vmem %s419, 340
      %v1743 = vld [vmem:[%s1742] sm:$0xf]
      %v1744 = vunpack.c.l.bf16 %v1743
      %v1745 = vunpack.c.h.bf16 %v1743
      %v1746 = vlaneseq
      %v1747 = vand.u32 %v1746, 127
      %v1748 = vadd.s32 %v1747, 128
      %vm1749 = vcmp.lt.s32.totalorder %v1748, 672
      %v1750 = vsel %vm1749, %v1744, %v19
      %s1751 = scalar_lea.vmem [#allocation7], 340
      %v1752 = vpack.c.bf16 0.0, %v1750
      %s1754 = ssub.s32 16, 1
      %1755 = vst [vmem:[%s1751] sm:%s1754] %v1752
      %s1756 = scalar_lea.vmem %s419, 344
      %v1757 = vld [vmem:[%s1756] sm:$0xf]
      %v1758 = vunpack.c.l.bf16 %v1757
      %v1759 = vunpack.c.h.bf16 %v1757
      %v1760 = vlaneseq
      %v1761 = vand.u32 %v1760, 127
      %v1762 = vadd.s32 %v1761, 256
      %vm1763 = vcmp.lt.s32.totalorder %v1762, 672
      %v1764 = vsel %vm1763, %v1758, %v19
      %s1765 = scalar_lea.vmem [#allocation7], 344
      %v1766 = vpack.c.bf16 0.0, %v1764
      %s1768 = ssub.s32 16, 1
      %1769 = vst [vmem:[%s1765] sm:%s1768] %v1766
      %s1770 = scalar_lea.vmem %s419, 348
      %v1771 = vld [vmem:[%s1770] sm:$0xf]
      %v1772 = vunpack.c.l.bf16 %v1771
      %v1773 = vunpack.c.h.bf16 %v1771
      %v1774 = vlaneseq
      %v1775 = vand.u32 %v1774, 127
      %v1776 = vadd.s32 %v1775, 384
      %vm1777 = vcmp.lt.s32.totalorder %v1776, 672
      %v1778 = vsel %vm1777, %v1772, %v19
      %s1779 = scalar_lea.vmem [#allocation7], 348
      %v1780 = vpack.c.bf16 0.0, %v1778
      %s1782 = ssub.s32 16, 1
      %1783 = vst [vmem:[%s1779] sm:%s1782] %v1780
      %s1784 = scalar_lea.vmem %s419, 352
      %v1785 = vld [vmem:[%s1784] sm:$0xf]
      %v1786 = vunpack.c.l.bf16 %v1785
      %v1787 = vunpack.c.h.bf16 %v1785
      %v1788 = vlaneseq
      %v1789 = vand.u32 %v1788, 127
      %v1790 = vadd.s32 %v1789, 512
      %vm1791 = vcmp.lt.s32.totalorder %v1790, 672
      %v1792 = vsel %vm1791, %v1786, %v19
      %s1793 = scalar_lea.vmem [#allocation7], 352
      %v1794 = vpack.c.bf16 0.0, %v1792
      %s1796 = ssub.s32 16, 1
      %1797 = vst [vmem:[%s1793] sm:%s1796] %v1794
      %s1798 = scalar_lea.vmem %s419, 356
      %s1800 = sor.u32 255, 127
      %s1801 = sand.u32 %s1800, 85
      %s1802 = sshrl.u32 %s1801, 1
      %s1803 = sor.u32 %s1801, %s1802
      %s1804 = sand.u32 51, %s1803
      %s1805 = sshrl.u32 %s1804, 2
      %s1806 = sor.u32 %s1804, %s1805
      %s1807 = sand.u32 15, %s1806
      %v1808 = vld [vmem:[%s1798] sm:%s1807]
      %v1809 = vunpack.c.l.bf16 %v1808
      %v1810 = vunpack.c.h.bf16 %v1808
      %v1811 = vlaneseq
      %v1812 = vand.u32 %v1811, 127
      %v1813 = vadd.s32 %v1812, 640
      %vm1814 = vcmp.lt.s32.totalorder %v1813, 672
      %v1815 = vsel %vm1814, %v1809, %v19
      %s1816 = scalar_lea.vmem [#allocation7], 356
      %v1817 = vpack.c.bf16 0.0, %v1815
      %s1819 = ssub.s32 16, 1
      %1820 = vst [vmem:[%s1816] sm:%s1819] %v1817
      %s1821 = scalar_lea.vmem %s419, 360
      %v1822 = vld [vmem:[%s1821] sm:$0xf]
      %v1823 = vunpack.c.l.bf16 %v1822
      %v1824 = vunpack.c.h.bf16 %v1822
      %v1825 = vlaneseq
      %v1826 = vand.u32 %v1825, 127
      %vm1828 = vcmp.lt.s32.totalorder %v1826, 672
      %v1829 = vsel %vm1828, %v1823, %v19
      %s1830 = scalar_lea.vmem [#allocation7], 360
      %v1831 = vpack.c.bf16 0.0, %v1829
      %s1833 = ssub.s32 16, 1
      %1834 = vst [vmem:[%s1830] sm:%s1833] %v1831
      %s1835 = scalar_lea.vmem %s419, 364
      %v1836 = vld [vmem:[%s1835] sm:$0xf]
      %v1837 = vunpack.c.l.bf16 %v1836
      %v1838 = vunpack.c.h.bf16 %v1836
      %v1839 = vlaneseq
      %v1840 = vand.u32 %v1839, 127
      %v1841 = vadd.s32 %v1840, 128
      %vm1842 = vcmp.lt.s32.totalorder %v1841, 672
      %v1843 = vsel %vm1842, %v1837, %v19
      %s1844 = scalar_lea.vmem [#allocation7], 364
      %v1845 = vpack.c.bf16 0.0, %v1843
      %s1847 = ssub.s32 16, 1
      %1848 = vst [vmem:[%s1844] sm:%s1847] %v1845
      %s1849 = scalar_lea.vmem %s419, 368
      %v1850 = vld [vmem:[%s1849] sm:$0xf]
      %v1851 = vunpack.c.l.bf16 %v1850
      %v1852 = vunpack.c.h.bf16 %v1850
      %v1853 = vlaneseq
      %v1854 = vand.u32 %v1853, 127
      %v1855 = vadd.s32 %v1854, 256
      %vm1856 = vcmp.lt.s32.totalorder %v1855, 672
      %v1857 = vsel %vm1856, %v1851, %v19
      %s1858 = scalar_lea.vmem [#allocation7], 368
      %v1859 = vpack.c.bf16 0.0, %v1857
      %s1861 = ssub.s32 16, 1
      %1862 = vst [vmem:[%s1858] sm:%s1861] %v1859
      %s1863 = scalar_lea.vmem %s419, 372
      %v1864 = vld [vmem:[%s1863] sm:$0xf]
      %v1865 = vunpack.c.l.bf16 %v1864
      %v1866 = vunpack.c.h.bf16 %v1864
      %v1867 = vlaneseq
      %v1868 = vand.u32 %v1867, 127
      %v1869 = vadd.s32 %v1868, 384
      %vm1870 = vcmp.lt.s32.totalorder %v1869, 672
      %v1871 = vsel %vm1870, %v1865, %v19
      %s1872 = scalar_lea.vmem [#allocation7], 372
      %v1873 = vpack.c.bf16 0.0, %v1871
      %s1875 = ssub.s32 16, 1
      %1876 = vst [vmem:[%s1872] sm:%s1875] %v1873
      %s1877 = scalar_lea.vmem %s419, 376
      %v1878 = vld [vmem:[%s1877] sm:$0xf]
      %v1879 = vunpack.c.l.bf16 %v1878
      %v1880 = vunpack.c.h.bf16 %v1878
      %v1881 = vlaneseq
      %v1882 = vand.u32 %v1881, 127
      %v1883 = vadd.s32 %v1882, 512
      %vm1884 = vcmp.lt.s32.totalorder %v1883, 672
      %v1885 = vsel %vm1884, %v1879, %v19
      %s1886 = scalar_lea.vmem [#allocation7], 376
      %v1887 = vpack.c.bf16 0.0, %v1885
      %s1889 = ssub.s32 16, 1
      %1890 = vst [vmem:[%s1886] sm:%s1889] %v1887
      %s1891 = scalar_lea.vmem %s419, 380
      %s1893 = sor.u32 255, 127
      %s1894 = sand.u32 %s1893, 85
      %s1895 = sshrl.u32 %s1894, 1
      %s1896 = sor.u32 %s1894, %s1895
      %s1897 = sand.u32 51, %s1896
      %s1898 = sshrl.u32 %s1897, 2
      %s1899 = sor.u32 %s1897, %s1898
      %s1900 = sand.u32 15, %s1899
      %v1901 = vld [vmem:[%s1891] sm:%s1900]
      %v1902 = vunpack.c.l.bf16 %v1901
      %v1903 = vunpack.c.h.bf16 %v1901
      %v1904 = vlaneseq
      %v1905 = vand.u32 %v1904, 127
      %v1906 = vadd.s32 %v1905, 640
      %vm1907 = vcmp.lt.s32.totalorder %v1906, 672
      %v1908 = vsel %vm1907, %v1902, %v19
      %s1909 = scalar_lea.vmem [#allocation7], 380
      %v1910 = vpack.c.bf16 0.0, %v1908
      %s1912 = ssub.s32 16, 1
      %1913 = vst [vmem:[%s1909] sm:%s1912] %v1910
      %v1915 = vld [vmem:[#allocation7] sm:$0xff]
      %v1916 = vld [vmem:[#allocation7 + $0x8] sm:$0xff]
      %v1917 = vld [vmem:[#allocation7 + $0x10] sm:$0xff]
      %v1918 = vld [vmem:[#allocation7 + $0x18] sm:$0xff]
      %v1919 = vld [vmem:[#allocation7 + $0x20] sm:$0xff]
      %v1920 = vld [vmem:[#allocation7 + $0x28] sm:$0xff]
      %v1921 = vld [vmem:[#allocation7 + $0x30] sm:$0xff]
      %v1922 = vld [vmem:[#allocation7 + $0x38] sm:$0xff]
      %v1923 = vld [vmem:[#allocation7 + $0x40] sm:$0xff]
      %v1924 = vld [vmem:[#allocation7 + $0x48] sm:$0xff]
      %v1925 = vld [vmem:[#allocation7 + $0x50] sm:$0xff]
      %v1926 = vld [vmem:[#allocation7 + $0x58] sm:$0xff]
      %v1927 = vld [vmem:[#allocation7 + $0x60] sm:$0xff]
      %v1928 = vld [vmem:[#allocation7 + $0x68] sm:$0xff]
      %v1929 = vld [vmem:[#allocation7 + $0x70] sm:$0xff]
      %v1930 = vld [vmem:[#allocation7 + $0x78] sm:$0xff]
      %v1931 = vld [vmem:[#allocation7 + $0x80] sm:$0xff]
      %v1932 = vld [vmem:[#allocation7 + $0x88] sm:$0xff]
      %v1933 = vld [vmem:[#allocation7 + $0x90] sm:$0xff]
      %v1934 = vld [vmem:[#allocation7 + $0x98] sm:$0xff]
      %v1935 = vld [vmem:[#allocation7 + $0xa0] sm:$0xff]
      %v1936 = vld [vmem:[#allocation7 + $0xa8] sm:$0xff]
      %v1937 = vld [vmem:[#allocation7 + $0xb0] sm:$0xff]
      %v1938 = vld [vmem:[#allocation7 + $0xb8] sm:$0xff]
      %v1939 = vld [vmem:[#allocation7 + $0xc0] sm:$0xff]
      %v1940 = vld [vmem:[#allocation7 + $0xc8] sm:$0xff]
      %v1941 = vld [vmem:[#allocation7 + $0xd0] sm:$0xff]
      %v1942 = vld [vmem:[#allocation7 + $0xd8] sm:$0xff]
      %v1943 = vld [vmem:[#allocation7 + $0xe0] sm:$0xff]
      %v1944 = vld [vmem:[#allocation7 + $0xe8] sm:$0xff]
      %v1945 = vld [vmem:[#allocation7 + $0xf0] sm:$0xff]
      %v1946 = vld [vmem:[#allocation7 + $0xf8] sm:$0xff]
      %v1947 = vld [vmem:[#allocation7 + $0x100] sm:$0xff]
      %v1948 = vld [vmem:[#allocation7 + $0x108] sm:$0xff]
      %v1949 = vld [vmem:[#allocation7 + $0x110] sm:$0xff]
      %v1950 = vld [vmem:[#allocation7 + $0x118] sm:$0xff]
      %v1951 = vld [vmem:[#allocation7 + $0x120] sm:$0xff]
      %v1952 = vld [vmem:[#allocation7 + $0x128] sm:$0xff]
      %v1953 = vld [vmem:[#allocation7 + $0x130] sm:$0xff]
      %v1954 = vld [vmem:[#allocation7 + $0x138] sm:$0xff]
      %v1955 = vld [vmem:[#allocation7 + $0x140] sm:$0xff]
      %v1956 = vld [vmem:[#allocation7 + $0x148] sm:$0xff]
      %v1957 = vld [vmem:[#allocation7 + $0x150] sm:$0xff]
      %v1958 = vld [vmem:[#allocation7 + $0x158] sm:$0xff]
      %v1959 = vld [vmem:[#allocation7 + $0x160] sm:$0xff]
      %v1960 = vld [vmem:[#allocation7 + $0x168] sm:$0xff]
      %v1961 = vld [vmem:[#allocation7 + $0x170] sm:$0xff]
      %v1962 = vld [vmem:[#allocation7 + $0x178] sm:$0xff]
      %v1963 = vld [vmem:[%s0] sm:$0xf]
      %v1964 = vld [vmem:[%s0 + $0x4] sm:$0xf]
      %v1965 = vld [vmem:[%s0 + $0x8] sm:$0xf]
      %v1966 = vld [vmem:[%s0 + $0xc] sm:$0xf]
      %v1967 = vld [vmem:[%s0 + $0x10] sm:$0xf]
      %v1968 = vld [vmem:[%s0 + $0x14] sm:$0xf]
      %v1969 = vld [vmem:[%s0 + $0x18] sm:$0xf]
      %v1970 = vld [vmem:[%s0 + $0x1c] sm:$0xf]
      %v1971 = vld [vmem:[%s0 + $0x20] sm:$0xf]
      %v1972 = vld [vmem:[%s0 + $0x24] sm:$0xf]
      %v1973 = vld [vmem:[%s0 + $0x28] sm:$0xf]
      %v1974 = vld [vmem:[%s0 + $0x2c] sm:$0xf]
      %v1975 = vld [vmem:[%s0 + $0x30] sm:$0xf]
      %v1976 = vld [vmem:[%s0 + $0x34] sm:$0xf]
      %v1977 = vld [vmem:[%s0 + $0x38] sm:$0xf]
      %v1978 = vld [vmem:[%s0 + $0x3c] sm:$0xf]
      %v1979 = vld [vmem:[%s0 + $0x40] sm:$0xf]
      %v1980 = vld [vmem:[%s0 + $0x44] sm:$0xf]
      %v1981 = vld [vmem:[%s0 + $0x48] sm:$0xf]
      %v1982 = vld [vmem:[%s0 + $0x4c] sm:$0xf]
      %v1983 = vld [vmem:[%s0 + $0x50] sm:$0xf]
      %v1984 = vld [vmem:[%s0 + $0x54] sm:$0xf]
      %v1985 = vld [vmem:[%s0 + $0x58] sm:$0xf]
      %v1986 = vld [vmem:[%s0 + $0x5c] sm:$0xf]
      %v1987 = vld [vmem:[%s0 + $0x60] sm:$0xf]
      %v1988 = vld [vmem:[%s0 + $0x64] sm:$0xf]
      %v1989 = vld [vmem:[%s0 + $0x68] sm:$0xf]
      %v1990 = vld [vmem:[%s0 + $0x6c] sm:$0xf]
      %v1991 = vld [vmem:[%s0 + $0x70] sm:$0xf]
      %v1992 = vld [vmem:[%s0 + $0x74] sm:$0xf]
      %v1993 = vld [vmem:[%s0 + $0x78] sm:$0xf]
      %v1994 = vld [vmem:[%s0 + $0x7c] sm:$0xf]
      %v1995 = vld [vmem:[%s0 + $0x80] sm:$0xf]
      %v1996 = vld [vmem:[%s0 + $0x84] sm:$0xf]
      %v1997 = vld [vmem:[%s0 + $0x88] sm:$0xf]
      %v1998 = vld [vmem:[%s0 + $0x8c] sm:$0xf]
      %v1999 = vld [vmem:[%s0 + $0x90] sm:$0xf]
      %v2000 = vld [vmem:[%s0 + $0x94] sm:$0xf]
      %v2001 = vld [vmem:[%s0 + $0x98] sm:$0xf]
      %v2002 = vld [vmem:[%s0 + $0x9c] sm:$0xf]
      %v2003 = vld [vmem:[%s0 + $0xa0] sm:$0xf]
      %v2004 = vld [vmem:[%s0 + $0xa4] sm:$0xf]
      %v2005 = vld [vmem:[%s0 + $0xa8] sm:$0xf]
      %v2006 = vld [vmem:[%s0 + $0xac] sm:$0xf]
      %v2007 = vld [vmem:[%s0 + $0xb0] sm:$0xf]
      %v2008 = vld [vmem:[%s0 + $0xb4] sm:$0xf]
      %v2009 = vld [vmem:[%s0 + $0xb8] sm:$0xf]
      %v2010 = vld [vmem:[%s0 + $0xbc] sm:$0xf]
      %v2011 = vld [vmem:[%s0 + $0xc0] sm:$0xf]
      %v2012 = vld [vmem:[%s0 + $0xc4] sm:$0xf]
      %v2013 = vld [vmem:[%s0 + $0xc8] sm:$0xf]
      %v2014 = vld [vmem:[%s0 + $0xcc] sm:$0xf]
      %v2015 = vld [vmem:[%s0 + $0xd0] sm:$0xf]
      %v2016 = vld [vmem:[%s0 + $0xd4] sm:$0xf]
      %v2017 = vld [vmem:[%s0 + $0xd8] sm:$0xf]
      %v2018 = vld [vmem:[%s0 + $0xdc] sm:$0xf]
      %v2019 = vld [vmem:[%s0 + $0xe0] sm:$0xf]
      %v2020 = vld [vmem:[%s0 + $0xe4] sm:$0xf]
      %v2021 = vld [vmem:[%s0 + $0xe8] sm:$0xf]
      %v2022 = vld [vmem:[%s0 + $0xec] sm:$0xf]
      %v2023 = vld [vmem:[%s0 + $0xf0] sm:$0xf]
      %v2024 = vld [vmem:[%s0 + $0xf4] sm:$0xf]
      %v2025 = vld [vmem:[%s0 + $0xf8] sm:$0xf]
      %v2026 = vld [vmem:[%s0 + $0xfc] sm:$0xf]
      %v2027 = vld [vmem:[%s0 + $0x100] sm:$0xf]
      %v2028 = vld [vmem:[%s0 + $0x104] sm:$0xf]
      %v2029 = vld [vmem:[%s0 + $0x108] sm:$0xf]
      %v2030 = vld [vmem:[%s0 + $0x10c] sm:$0xf]
      %v2031 = vld [vmem:[%s0 + $0x110] sm:$0xf]
      %v2032 = vld [vmem:[%s0 + $0x114] sm:$0xf]
      %v2033 = vld [vmem:[%s0 + $0x118] sm:$0xf]
      %v2034 = vld [vmem:[%s0 + $0x11c] sm:$0xf]
      %v2035 = vld [vmem:[%s0 + $0x120] sm:$0xf]
      %v2036 = vld [vmem:[%s0 + $0x124] sm:$0xf]
      %v2037 = vld [vmem:[%s0 + $0x128] sm:$0xf]
      %v2038 = vld [vmem:[%s0 + $0x12c] sm:$0xf]
      %v2039 = vld [vmem:[%s0 + $0x130] sm:$0xf]
      %v2040 = vld [vmem:[%s0 + $0x134] sm:$0xf]
      %v2041 = vld [vmem:[%s0 + $0x138] sm:$0xf]
      %v2042 = vld [vmem:[%s0 + $0x13c] sm:$0xf]
      %v2043 = vld [vmem:[%s0 + $0x140] sm:$0xf]
      %v2044 = vld [vmem:[%s0 + $0x144] sm:$0xf]
      %v2045 = vld [vmem:[%s0 + $0x148] sm:$0xf]
      %v2046 = vld [vmem:[%s0 + $0x14c] sm:$0xf]
      %v2047 = vld [vmem:[%s0 + $0x150] sm:$0xf]
      %v2048 = vld [vmem:[%s0 + $0x154] sm:$0xf]
      %v2049 = vld [vmem:[%s0 + $0x158] sm:$0xf]
      %v2050 = vld [vmem:[%s0 + $0x15c] sm:$0xf]
      %v2051 = vld [vmem:[%s0 + $0x160] sm:$0xf]
      %v2052 = vld [vmem:[%s0 + $0x164] sm:$0xf]
      %v2053 = vld [vmem:[%s0 + $0x168] sm:$0xf]
      %v2054 = vld [vmem:[%s0 + $0x16c] sm:$0xf]
      %v2055 = vld [vmem:[%s0 + $0x170] sm:$0xf]
      %v2056 = vld [vmem:[%s0 + $0x174] sm:$0xf]
      %v2057 = vld [vmem:[%s0 + $0x178] sm:$0xf]
      %v2058 = vld [vmem:[%s0 + $0x17c] sm:$0xf]
      %v2059 = vld [vmem:[%s1] sm:$0x1]
      %v2061 = vlaneseq
      %v2062 = vshrl.u32 %v2061, 7
      %v2063 = vsub.s32 0, %v2062
      %v2064 = vrot.slane %v2059, %v2063
      %v2114 = vunpack.c.l.b16 %v1915
      %v2115 = vunpack.c.h.b16 %v1915
      %v2116 = vunpack.c.l.b16 %v1916
      %v2117 = vunpack.c.h.b16 %v1916
      %v2118 = vunpack.c.l.b16 %v1917
      %v2119 = vunpack.c.h.b16 %v1917
      %v2120 = vunpack.c.l.b16 %v1918
      %v2121 = vunpack.c.h.b16 %v1918
      %v2122 = vunpack.c.l.b16 %v1919
      %v2123 = vunpack.c.h.b16 %v1919
      %v2124 = vunpack.c.l.b16 %v1920
      %v2125 = vunpack.c.h.b16 %v1920
      %v2126 = vunpack.c.l.b16 %v1921
      %v2127 = vunpack.c.h.b16 %v1921
      %v2128 = vunpack.c.l.b16 %v1922
      %v2129 = vunpack.c.h.b16 %v1922
      %v2130 = vunpack.c.l.b16 %v1923
      %v2131 = vunpack.c.h.b16 %v1923
      %v2132 = vunpack.c.l.b16 %v1924
      %v2133 = vunpack.c.h.b16 %v1924
      %v2134 = vunpack.c.l.b16 %v1925
      %v2135 = vunpack.c.h.b16 %v1925
      %v2136 = vunpack.c.l.b16 %v1926
      %v2137 = vunpack.c.h.b16 %v1926
      %v2138 = vunpack.c.l.b16 %v1927
      %v2139 = vunpack.c.h.b16 %v1927
      %v2140 = vunpack.c.l.b16 %v1928
      %v2141 = vunpack.c.h.b16 %v1928
      %v2142 = vunpack.c.l.b16 %v1929
      %v2143 = vunpack.c.h.b16 %v1929
      %v2144 = vunpack.c.l.b16 %v1930
      %v2145 = vunpack.c.h.b16 %v1930
      %v2146 = vunpack.c.l.b16 %v1931
      %v2147 = vunpack.c.h.b16 %v1931
      %v2148 = vunpack.c.l.b16 %v1932
      %v2149 = vunpack.c.h.b16 %v1932
      %v2150 = vunpack.c.l.b16 %v1933
      %v2151 = vunpack.c.h.b16 %v1933
      %v2152 = vunpack.c.l.b16 %v1934
      %v2153 = vunpack.c.h.b16 %v1934
      %v2154 = vunpack.c.l.b16 %v1935
      %v2155 = vunpack.c.h.b16 %v1935
      %v2156 = vunpack.c.l.b16 %v1936
      %v2157 = vunpack.c.h.b16 %v1936
      %v2158 = vunpack.c.l.b16 %v1937
      %v2159 = vunpack.c.h.b16 %v1937
      %v2160 = vunpack.c.l.b16 %v1938
      %v2161 = vunpack.c.h.b16 %v1938
      %v2162 = vunpack.c.l.b16 %v1939
      %v2163 = vunpack.c.h.b16 %v1939
      %v2164 = vunpack.c.l.b16 %v1940
      %v2165 = vunpack.c.h.b16 %v1940
      %v2166 = vunpack.c.l.b16 %v1941
      %v2167 = vunpack.c.h.b16 %v1941
      %v2168 = vunpack.c.l.b16 %v1942
      %v2169 = vunpack.c.h.b16 %v1942
      %v2170 = vunpack.c.l.b16 %v1943
      %v2171 = vunpack.c.h.b16 %v1943
      %v2172 = vunpack.c.l.b16 %v1944
      %v2173 = vunpack.c.h.b16 %v1944
      %v2174 = vunpack.c.l.b16 %v1945
      %v2175 = vunpack.c.h.b16 %v1945
      %v2176 = vunpack.c.l.b16 %v1946
      %v2177 = vunpack.c.h.b16 %v1946
      %v2178 = vunpack.c.l.b16 %v1947
      %v2179 = vunpack.c.h.b16 %v1947
      %v2180 = vunpack.c.l.b16 %v1948
      %v2181 = vunpack.c.h.b16 %v1948
      %v2182 = vunpack.c.l.b16 %v1949
      %v2183 = vunpack.c.h.b16 %v1949
      %v2184 = vunpack.c.l.b16 %v1950
      %v2185 = vunpack.c.h.b16 %v1950
      %v2186 = vunpack.c.l.b16 %v1951
      %v2187 = vunpack.c.h.b16 %v1951
      %v2188 = vunpack.c.l.b16 %v1952
      %v2189 = vunpack.c.h.b16 %v1952
      %v2190 = vunpack.c.l.b16 %v1953
      %v2191 = vunpack.c.h.b16 %v1953
      %v2192 = vunpack.c.l.b16 %v1954
      %v2193 = vunpack.c.h.b16 %v1954
      %v2194 = vunpack.c.l.b16 %v1955
      %v2195 = vunpack.c.h.b16 %v1955
      %v2196 = vunpack.c.l.b16 %v1956
      %v2197 = vunpack.c.h.b16 %v1956
      %v2198 = vunpack.c.l.b16 %v1957
      %v2199 = vunpack.c.h.b16 %v1957
      %v2200 = vunpack.c.l.b16 %v1958
      %v2201 = vunpack.c.h.b16 %v1958
      %v2202 = vunpack.c.l.b16 %v1959
      %v2203 = vunpack.c.h.b16 %v1959
      %v2204 = vunpack.c.l.b16 %v1960
      %v2205 = vunpack.c.h.b16 %v1960
      %v2206 = vunpack.c.l.b16 %v1961
      %v2207 = vunpack.c.h.b16 %v1961
      %v2208 = vunpack.c.l.b16 %v1962
      %v2209 = vunpack.c.h.b16 %v1962
      %v2210 = vpack.c.b16 %v2120, %v2114
      %v2211 = vpack.c.b16 %v2121, %v2115
      %v2212 = vpack.c.b16 %v2122, %v2116
      %v2213 = vpack.c.b16 %v2123, %v2117
      %v2214 = vpack.c.b16 %v2124, %v2118
      %v2215 = vpack.c.b16 %v2125, %v2119
      %v2216 = vpack.c.b16 %v2132, %v2126
      %v2217 = vpack.c.b16 %v2133, %v2127
      %v2218 = vpack.c.b16 %v2134, %v2128
      %v2219 = vpack.c.b16 %v2135, %v2129
      %v2220 = vpack.c.b16 %v2136, %v2130
      %v2221 = vpack.c.b16 %v2137, %v2131
      %v2222 = vpack.c.b16 %v2144, %v2138
      %v2223 = vpack.c.b16 %v2145, %v2139
      %v2224 = vpack.c.b16 %v2146, %v2140
      %v2225 = vpack.c.b16 %v2147, %v2141
      %v2226 = vpack.c.b16 %v2148, %v2142
      %v2227 = vpack.c.b16 %v2149, %v2143
      %v2228 = vpack.c.b16 %v2156, %v2150
      %v2229 = vpack.c.b16 %v2157, %v2151
      %v2230 = vpack.c.b16 %v2158, %v2152
      %v2231 = vpack.c.b16 %v2159, %v2153
      %v2232 = vpack.c.b16 %v2160, %v2154
      %v2233 = vpack.c.b16 %v2161, %v2155
      %v2234 = vpack.c.b16 %v2168, %v2162
      %v2235 = vpack.c.b16 %v2169, %v2163
      %v2236 = vpack.c.b16 %v2170, %v2164
      %v2237 = vpack.c.b16 %v2171, %v2165
      %v2238 = vpack.c.b16 %v2172, %v2166
      %v2239 = vpack.c.b16 %v2173, %v2167
      %v2240 = vpack.c.b16 %v2180, %v2174
      %v2241 = vpack.c.b16 %v2181, %v2175
      %v2242 = vpack.c.b16 %v2182, %v2176
      %v2243 = vpack.c.b16 %v2183, %v2177
      %v2244 = vpack.c.b16 %v2184, %v2178
      %v2245 = vpack.c.b16 %v2185, %v2179
      %v2246 = vpack.c.b16 %v2192, %v2186
      %v2247 = vpack.c.b16 %v2193, %v2187
      %v2248 = vpack.c.b16 %v2194, %v2188
      %v2249 = vpack.c.b16 %v2195, %v2189
      %v2250 = vpack.c.b16 %v2196, %v2190
      %v2251 = vpack.c.b16 %v2197, %v2191
      %v2252 = vpack.c.b16 %v2204, %v2198
      %v2253 = vpack.c.b16 %v2205, %v2199
      %v2254 = vpack.c.b16 %v2206, %v2200
      %v2255 = vpack.c.b16 %v2207, %v2201
      %v2256 = vpack.c.b16 %v2208, %v2202
      %v2257 = vpack.c.b16 %v2209, %v2203
      %v2402 = vunpack.c.l.b16 %v1963
      %v2403 = vunpack.c.l.b16 %v1964
      %v2404 = vunpack.c.l.b16 %v1965
      %v2405 = vunpack.c.l.b16 %v1966
      %v2406 = vunpack.c.l.b16 %v1967
      %v2407 = vunpack.c.l.b16 %v1968
      %v2408 = vunpack.c.l.b16 %v1969
      %v2409 = vunpack.c.l.b16 %v1970
      %v2410 = vunpack.c.l.b16 %v1971
      %v2411 = vunpack.c.l.b16 %v1972
      %v2412 = vunpack.c.l.b16 %v1973
      %v2413 = vunpack.c.l.b16 %v1974
      %v2414 = vunpack.c.l.b16 %v1975
      %v2415 = vunpack.c.l.b16 %v1976
      %v2416 = vunpack.c.l.b16 %v1977
      %v2417 = vunpack.c.l.b16 %v1978
      %v2418 = vunpack.c.l.b16 %v1979
      %v2419 = vunpack.c.l.b16 %v1980
      %v2420 = vunpack.c.l.b16 %v1981
      %v2421 = vunpack.c.l.b16 %v1982
      %v2422 = vunpack.c.l.b16 %v1983
      %v2423 = vunpack.c.l.b16 %v1984
      %v2424 = vunpack.c.l.b16 %v1985
      %v2425 = vunpack.c.l.b16 %v1986
      %v2426 = vunpack.c.l.b16 %v1987
      %v2427 = vunpack.c.l.b16 %v1988
      %v2428 = vunpack.c.l.b16 %v1989
      %v2429 = vunpack.c.l.b16 %v1990
      %v2430 = vunpack.c.l.b16 %v1991
      %v2431 = vunpack.c.l.b16 %v1992
      %v2432 = vunpack.c.l.b16 %v1993
      %v2433 = vunpack.c.l.b16 %v1994
      %v2434 = vunpack.c.l.b16 %v1995
      %v2435 = vunpack.c.l.b16 %v1996
      %v2436 = vunpack.c.l.b16 %v1997
      %v2437 = vunpack.c.l.b16 %v1998
      %v2438 = vunpack.c.l.b16 %v1999
      %v2439 = vunpack.c.l.b16 %v2000
      %v2440 = vunpack.c.l.b16 %v2001
      %v2441 = vunpack.c.l.b16 %v2002
      %v2442 = vunpack.c.l.b16 %v2003
      %v2443 = vunpack.c.l.b16 %v2004
      %v2444 = vunpack.c.l.b16 %v2005
      %v2445 = vunpack.c.l.b16 %v2006
      %v2446 = vunpack.c.l.b16 %v2007
      %v2447 = vunpack.c.l.b16 %v2008
      %v2448 = vunpack.c.l.b16 %v2009
      %v2449 = vunpack.c.l.b16 %v2010
      %v2450 = vunpack.c.l.b16 %v2011
      %v2451 = vunpack.c.l.b16 %v2012
      %v2452 = vunpack.c.l.b16 %v2013
      %v2453 = vunpack.c.l.b16 %v2014
      %v2454 = vunpack.c.l.b16 %v2015
      %v2455 = vunpack.c.l.b16 %v2016
      %v2456 = vunpack.c.l.b16 %v2017
      %v2457 = vunpack.c.l.b16 %v2018
      %v2458 = vunpack.c.l.b16 %v2019
      %v2459 = vunpack.c.l.b16 %v2020
      %v2460 = vunpack.c.l.b16 %v2021
      %v2461 = vunpack.c.l.b16 %v2022
      %v2462 = vunpack.c.l.b16 %v2023
      %v2463 = vunpack.c.l.b16 %v2024
      %v2464 = vunpack.c.l.b16 %v2025
      %v2465 = vunpack.c.l.b16 %v2026
      %v2466 = vunpack.c.l.b16 %v2027
      %v2467 = vunpack.c.l.b16 %v2028
      %v2468 = vunpack.c.l.b16 %v2029
      %v2469 = vunpack.c.l.b16 %v2030
      %v2470 = vunpack.c.l.b16 %v2031
      %v2471 = vunpack.c.l.b16 %v2032
      %v2472 = vunpack.c.l.b16 %v2033
      %v2473 = vunpack.c.l.b16 %v2034
      %v2474 = vunpack.c.l.b16 %v2035
      %v2475 = vunpack.c.l.b16 %v2036
      %v2476 = vunpack.c.l.b16 %v2037
      %v2477 = vunpack.c.l.b16 %v2038
      %v2478 = vunpack.c.l.b16 %v2039
      %v2479 = vunpack.c.l.b16 %v2040
      %v2480 = vunpack.c.l.b16 %v2041
      %v2481 = vunpack.c.l.b16 %v2042
      %v2482 = vunpack.c.l.b16 %v2043
      %v2483 = vunpack.c.l.b16 %v2044
      %v2484 = vunpack.c.l.b16 %v2045
      %v2485 = vunpack.c.l.b16 %v2046
      %v2486 = vunpack.c.l.b16 %v2047
      %v2487 = vunpack.c.l.b16 %v2048
      %v2488 = vunpack.c.l.b16 %v2049
      %v2489 = vunpack.c.l.b16 %v2050
      %v2490 = vunpack.c.l.b16 %v2051
      %v2491 = vunpack.c.l.b16 %v2052
      %v2492 = vunpack.c.l.b16 %v2053
      %v2493 = vunpack.c.l.b16 %v2054
      %v2494 = vunpack.c.l.b16 %v2055
      %v2495 = vunpack.c.l.b16 %v2056
      %v2496 = vunpack.c.l.b16 %v2057
      %v2497 = vunpack.c.l.b16 %v2058
      %v2498 = vpack.c.b16 %v2403, %v2402
      %v2499 = vpack.c.b16 %v2405, %v2404
      %v2500 = vpack.c.b16 %v2407, %v2406
      %v2501 = vpack.c.b16 %v2409, %v2408
      %v2502 = vpack.c.b16 %v2411, %v2410
      %v2503 = vpack.c.b16 %v2413, %v2412
      %v2504 = vpack.c.b16 %v2415, %v2414
      %v2505 = vpack.c.b16 %v2417, %v2416
      %v2506 = vpack.c.b16 %v2419, %v2418
      %v2507 = vpack.c.b16 %v2421, %v2420
      %v2508 = vpack.c.b16 %v2423, %v2422
      %v2509 = vpack.c.b16 %v2425, %v2424
      %v2510 = vpack.c.b16 %v2427, %v2426
      %v2511 = vpack.c.b16 %v2429, %v2428
      %v2512 = vpack.c.b16 %v2431, %v2430
      %v2513 = vpack.c.b16 %v2433, %v2432
      %v2514 = vpack.c.b16 %v2435, %v2434
      %v2515 = vpack.c.b16 %v2437, %v2436
      %v2516 = vpack.c.b16 %v2439, %v2438
      %v2517 = vpack.c.b16 %v2441, %v2440
      %v2518 = vpack.c.b16 %v2443, %v2442
      %v2519 = vpack.c.b16 %v2445, %v2444
      %v2520 = vpack.c.b16 %v2447, %v2446
      %v2521 = vpack.c.b16 %v2449, %v2448
      %v2522 = vpack.c.b16 %v2451, %v2450
      %v2523 = vpack.c.b16 %v2453, %v2452
      %v2524 = vpack.c.b16 %v2455, %v2454
      %v2525 = vpack.c.b16 %v2457, %v2456
      %v2526 = vpack.c.b16 %v2459, %v2458
      %v2527 = vpack.c.b16 %v2461, %v2460
      %v2528 = vpack.c.b16 %v2463, %v2462
      %v2529 = vpack.c.b16 %v2465, %v2464
      %v2530 = vpack.c.b16 %v2467, %v2466
      %v2531 = vpack.c.b16 %v2469, %v2468
      %v2532 = vpack.c.b16 %v2471, %v2470
      %v2533 = vpack.c.b16 %v2473, %v2472
      %v2534 = vpack.c.b16 %v2475, %v2474
      %v2535 = vpack.c.b16 %v2477, %v2476
      %v2536 = vpack.c.b16 %v2479, %v2478
      %v2537 = vpack.c.b16 %v2481, %v2480
      %v2538 = vpack.c.b16 %v2483, %v2482
      %v2539 = vpack.c.b16 %v2485, %v2484
      %v2540 = vpack.c.b16 %v2487, %v2486
      %v2541 = vpack.c.b16 %v2489, %v2488
      %v2542 = vpack.c.b16 %v2491, %v2490
      %v2543 = vpack.c.b16 %v2493, %v2492
      %v2544 = vpack.c.b16 %v2495, %v2494
      %v2545 = vpack.c.b16 %v2497, %v2496
      %2594 = vmatprep.subr.bf16.mxu0 0
      %2595 = vmatpush1.bf16.msra.mxu0 %v2505
      %2596 = vmatprep.subr.bf16.mxu0 0
      %2597 = vmatpush1.bf16.msra.mxu0 %v2504
      %2598 = vmatprep.subr.bf16.mxu0 0
      %2599 = vmatpush1.bf16.msra.mxu0 %v2503
      %2600 = vmatprep.subr.bf16.mxu0 0
      %2601 = vmatpush1.bf16.msra.mxu0 %v2502
      %2602 = vmatprep.subr.bf16.mxu0 0
      %2603 = vmatpush1.bf16.msra.mxu0 %v2501
      %2604 = vmatprep.subr.bf16.mxu0 0
      %2605 = vmatpush1.bf16.msra.mxu0 %v2500
      %2606 = vmatprep.subr.bf16.mxu0 0
      %2607 = vmatpush1.bf16.msra.mxu0 %v2499
      %2608 = vmatprep.subr.bf16.mxu0 0
      %2609 = vmatpush1.bf16.msra.mxu0 %v2498
      %2610 = vmatprep.subr.bf16.mxu0 0
      %2611 = vmatpush2.bf16.msra.mxu0 %v2513
      %2612 = vmatprep.subr.bf16.mxu0 0
      %2613 = vmatpush2.bf16.msra.mxu0 %v2512
      %2614 = vmatprep.subr.bf16.mxu0 0
      %2615 = vmatpush2.bf16.msra.mxu0 %v2511
      %2616 = vmatprep.subr.bf16.mxu0 0
      %2617 = vmatpush2.bf16.msra.mxu0 %v2510
      %2618 = vmatprep.subr.bf16.mxu0 0
      %2619 = vmatpush2.bf16.msra.mxu0 %v2509
      %2620 = vmatprep.subr.bf16.mxu0 0
      %2621 = vmatpush2.bf16.msra.mxu0 %v2508
      %2622 = vmatprep.subr.bf16.mxu0 0
      %2623 = vmatpush2.bf16.msra.mxu0 %v2507
      %2624 = vmatprep.subr.bf16.mxu0 0
      %2625 = vmatpush2.bf16.msra.mxu0 %v2506
      %2626 = vmatprep.mubr.bf16.mxu0 %v2211
      %2627 = vmatmul.mubr.bf16.gmra.mxu0 %v2210
      %v2628 = vpop.f32.mrf.mxu0
      %v2629 = vadd.f32 %v2064, %v2628
      %v2630 = vpop.f32.mrf.mxu0
      %v2631 = vpop.f32.mrf.mxu0
      %v2632 = vadd.f32 %v2064, %v2631
      %v2633 = vpop.f32.mrf.mxu0
      %2634 = vmatprep.mubr.bf16.mxu0 %v2217
      %2635 = vmatmul.mubr.bf16.gmra.mxu0 %v2216
      %v2636 = vpop.f32.mrf.mxu0
      %v2637 = vadd.f32 %v2064, %v2636
      %v2638 = vpop.f32.mrf.mxu0
      %v2639 = vpop.f32.mrf.mxu0
      %v2640 = vadd.f32 %v2064, %v2639
      %v2641 = vpop.f32.mrf.mxu0
      %2642 = vmatprep.mubr.bf16.mxu0 %v2223
      %2643 = vmatmul.mubr.bf16.gmra.mxu0 %v2222
      %v2644 = vpop.f32.mrf.mxu0
      %v2645 = vadd.f32 %v2064, %v2644
      %v2646 = vpop.f32.mrf.mxu0
      %v2647 = vpop.f32.mrf.mxu0
      %v2648 = vadd.f32 %v2064, %v2647
      %v2649 = vpop.f32.mrf.mxu0
      %2650 = vmatprep.mubr.bf16.mxu0 %v2229
      %2651 = vmatmul.mubr.bf16.gmra.mxu0 %v2228
      %v2652 = vpop.f32.mrf.mxu0
      %v2653 = vadd.f32 %v2064, %v2652
      %v2654 = vpop.f32.mrf.mxu0
      %v2655 = vpop.f32.mrf.mxu0
      %v2656 = vadd.f32 %v2064, %v2655
      %v2657 = vpop.f32.mrf.mxu0
      %2658 = vmatprep.mubr.bf16.mxu0 %v2235
      %2659 = vmatmul.mubr.bf16.gmra.mxu0 %v2234
      %v2660 = vpop.f32.mrf.mxu0
      %v2661 = vadd.f32 %v2064, %v2660
      %v2662 = vpop.f32.mrf.mxu0
      %v2663 = vpop.f32.mrf.mxu0
      %v2664 = vadd.f32 %v2064, %v2663
      %v2665 = vpop.f32.mrf.mxu0
      %2666 = vmatprep.mubr.bf16.mxu0 %v2241
      %2667 = vmatmul.mubr.bf16.gmra.mxu0 %v2240
      %v2668 = vpop.f32.mrf.mxu0
      %v2669 = vadd.f32 %v2064, %v2668
      %v2670 = vpop.f32.mrf.mxu0
      %v2671 = vpop.f32.mrf.mxu0
      %v2672 = vadd.f32 %v2064, %v2671
      %v2673 = vpop.f32.mrf.mxu0
      %2674 = vmatprep.mubr.bf16.mxu0 %v2247
      %2675 = vmatmul.mubr.bf16.gmra.mxu0 %v2246
      %v2676 = vpop.f32.mrf.mxu0
      %v2677 = vadd.f32 %v2064, %v2676
      %v2678 = vpop.f32.mrf.mxu0
      %v2679 = vpop.f32.mrf.mxu0
      %v2680 = vadd.f32 %v2064, %v2679
      %v2681 = vpop.f32.mrf.mxu0
      %2682 = vmatprep.mubr.bf16.mxu0 %v2253
      %2683 = vmatmul.mubr.bf16.gmra.mxu0 %v2252
      %v2684 = vpop.f32.mrf.mxu0
      %v2685 = vadd.f32 %v2064, %v2684
      %v2686 = vpop.f32.mrf.mxu0
      %v2687 = vpop.f32.mrf.mxu0
      %v2688 = vadd.f32 %v2064, %v2687
      %v2689 = vpop.f32.mrf.mxu0
      %2690 = vdwg.mxu0
      %2691 = vmatprep.subr.bf16.mxu0 0
      %2692 = vmatpush1.bf16.msra.mxu0 %v2521
      %2693 = vmatprep.subr.bf16.mxu0 0
      %2694 = vmatpush1.bf16.msra.mxu0 %v2520
      %2695 = vmatprep.subr.bf16.mxu0 0
      %2696 = vmatpush1.bf16.msra.mxu0 %v2519
      %2697 = vmatprep.subr.bf16.mxu0 0
      %2698 = vmatpush1.bf16.msra.mxu0 %v2518
      %2699 = vmatprep.subr.bf16.mxu0 0
      %2700 = vmatpush1.bf16.msra.mxu0 %v2517
      %2701 = vmatprep.subr.bf16.mxu0 0
      %2702 = vmatpush1.bf16.msra.mxu0 %v2516
      %2703 = vmatprep.subr.bf16.mxu0 0
      %2704 = vmatpush1.bf16.msra.mxu0 %v2515
      %2705 = vmatprep.subr.bf16.mxu0 0
      %2706 = vmatpush1.bf16.msra.mxu0 %v2514
      %2707 = vmatprep.subr.bf16.mxu0 0
      %2708 = vmatpush2.bf16.msra.mxu0 %v2529
      %2709 = vmatprep.subr.bf16.mxu0 0
      %2710 = vmatpush2.bf16.msra.mxu0 %v2528
      %2711 = vmatprep.subr.bf16.mxu0 0
      %2712 = vmatpush2.bf16.msra.mxu0 %v2527
      %2713 = vmatprep.subr.bf16.mxu0 0
      %2714 = vmatpush2.bf16.msra.mxu0 %v2526
      %2715 = vmatprep.subr.bf16.mxu0 0
      %2716 = vmatpush2.bf16.msra.mxu0 %v2525
      %2717 = vmatprep.subr.bf16.mxu0 0
      %2718 = vmatpush2.bf16.msra.mxu0 %v2524
      %2719 = vmatprep.subr.bf16.mxu0 0
      %2720 = vmatpush2.bf16.msra.mxu0 %v2523
      %2721 = vmatprep.subr.bf16.mxu0 0
      %2722 = vmatpush2.bf16.msra.mxu0 %v2522
      %2723 = vmatprep.mubr.bf16.mxu0 %v2213
      %2724 = vmatmul.mubr.bf16.gmra.mxu0 %v2212
      %v2725 = vpop.f32.mrf.mxu0
      %v2726 = vadd.f32 %v2629, %v2725
      %v2727 = vpop.f32.mrf.mxu0
      %v2728 = vpop.f32.mrf.mxu0
      %v2729 = vadd.f32 %v2632, %v2728
      %v2730 = vpop.f32.mrf.mxu0
      %2731 = vmatprep.mubr.bf16.mxu0 %v2219
      %2732 = vmatmul.mubr.bf16.gmra.mxu0 %v2218
      %v2733 = vpop.f32.mrf.mxu0
      %v2734 = vadd.f32 %v2637, %v2733
      %v2735 = vpop.f32.mrf.mxu0
      %v2736 = vpop.f32.mrf.mxu0
      %v2737 = vadd.f32 %v2640, %v2736
      %v2738 = vpop.f32.mrf.mxu0
      %2739 = vmatprep.mubr.bf16.mxu0 %v2225
      %2740 = vmatmul.mubr.bf16.gmra.mxu0 %v2224
      %v2741 = vpop.f32.mrf.mxu0
      %v2742 = vadd.f32 %v2645, %v2741
      %v2743 = vpop.f32.mrf.mxu0
      %v2744 = vpop.f32.mrf.mxu0
      %v2745 = vadd.f32 %v2648, %v2744
      %v2746 = vpop.f32.mrf.mxu0
      %2747 = vmatprep.mubr.bf16.mxu0 %v2231
      %2748 = vmatmul.mubr.bf16.gmra.mxu0 %v2230
      %v2749 = vpop.f32.mrf.mxu0
      %v2750 = vadd.f32 %v2653, %v2749
      %v2751 = vpop.f32.mrf.mxu0
      %v2752 = vpop.f32.mrf.mxu0
      %v2753 = vadd.f32 %v2656, %v2752
      %v2754 = vpop.f32.mrf.mxu0
      %2755 = vmatprep.mubr.bf16.mxu0 %v2237
      %2756 = vmatmul.mubr.bf16.gmra.mxu0 %v2236
      %v2757 = vpop.f32.mrf.mxu0
      %v2758 = vadd.f32 %v2661, %v2757
      %v2759 = vpop.f32.mrf.mxu0
      %v2760 = vpop.f32.mrf.mxu0
      %v2761 = vadd.f32 %v2664, %v2760
      %v2762 = vpop.f32.mrf.mxu0
      %2763 = vmatprep.mubr.bf16.mxu0 %v2243
      %2764 = vmatmul.mubr.bf16.gmra.mxu0 %v2242
      %v2765 = vpop.f32.mrf.mxu0
      %v2766 = vadd.f32 %v2669, %v2765
      %v2767 = vpop.f32.mrf.mxu0
      %v2768 = vpop.f32.mrf.mxu0
      %v2769 = vadd.f32 %v2672, %v2768
      %v2770 = vpop.f32.mrf.mxu0
      %2771 = vmatprep.mubr.bf16.mxu0 %v2249
      %2772 = vmatmul.mubr.bf16.gmra.mxu0 %v2248
      %v2773 = vpop.f32.mrf.mxu0
      %v2774 = vadd.f32 %v2677, %v2773
      %v2775 = vpop.f32.mrf.mxu0
      %v2776 = vpop.f32.mrf.mxu0
      %v2777 = vadd.f32 %v2680, %v2776
      %v2778 = vpop.f32.mrf.mxu0
      %2779 = vmatprep.mubr.bf16.mxu0 %v2255
      %2780 = vmatmul.mubr.bf16.gmra.mxu0 %v2254
      %v2781 = vpop.f32.mrf.mxu0
      %v2782 = vadd.f32 %v2685, %v2781
      %v2783 = vpop.f32.mrf.mxu0
      %v2784 = vpop.f32.mrf.mxu0
      %v2785 = vadd.f32 %v2688, %v2784
      %v2786 = vpop.f32.mrf.mxu0
      %2787 = vdwg.mxu0
      %2788 = vmatprep.subr.bf16.mxu0 0
      %2789 = vmatpush1.bf16.msra.mxu0 %v2537
      %2790 = vmatprep.subr.bf16.mxu0 0
      %2791 = vmatpush1.bf16.msra.mxu0 %v2536
      %2792 = vmatprep.subr.bf16.mxu0 0
      %2793 = vmatpush1.bf16.msra.mxu0 %v2535
      %2794 = vmatprep.subr.bf16.mxu0 0
      %2795 = vmatpush1.bf16.msra.mxu0 %v2534
      %2796 = vmatprep.subr.bf16.mxu0 0
      %2797 = vmatpush1.bf16.msra.mxu0 %v2533
      %2798 = vmatprep.subr.bf16.mxu0 0
      %2799 = vmatpush1.bf16.msra.mxu0 %v2532
      %2800 = vmatprep.subr.bf16.mxu0 0
      %2801 = vmatpush1.bf16.msra.mxu0 %v2531
      %2802 = vmatprep.subr.bf16.mxu0 0
      %2803 = vmatpush1.bf16.msra.mxu0 %v2530
      %2804 = vmatprep.subr.bf16.mxu0 0
      %2805 = vmatpush2.bf16.msra.mxu0 %v2545
      %2806 = vmatprep.subr.bf16.mxu0 0
      %2807 = vmatpush2.bf16.msra.mxu0 %v2544
      %2808 = vmatprep.subr.bf16.mxu0 0
      %2809 = vmatpush2.bf16.msra.mxu0 %v2543
      %2810 = vmatprep.subr.bf16.mxu0 0
      %2811 = vmatpush2.bf16.msra.mxu0 %v2542
      %2812 = vmatprep.subr.bf16.mxu0 0
      %2813 = vmatpush2.bf16.msra.mxu0 %v2541
      %2814 = vmatprep.subr.bf16.mxu0 0
      %2815 = vmatpush2.bf16.msra.mxu0 %v2540
      %2816 = vmatprep.subr.bf16.mxu0 0
      %2817 = vmatpush2.bf16.msra.mxu0 %v2539
      %2818 = vmatprep.subr.bf16.mxu0 0
      %2819 = vmatpush2.bf16.msra.mxu0 %v2538
      %2820 = vmatprep.mubr.bf16.mxu0 %v2215
      %2821 = vmatmul.mubr.bf16.gmra.mxu0 %v2214
      %v2822 = vpop.f32.mrf.mxu0
      %v2823 = vadd.f32 %v2726, %v2822
      %v2824 = vpop.f32.mrf.mxu0
      %v2825 = vpop.f32.mrf.mxu0
      %v2826 = vadd.f32 %v2729, %v2825
      %v2827 = vpop.f32.mrf.mxu0
      %2828 = vmatprep.mubr.bf16.mxu0 %v2221
      %2829 = vmatmul.mubr.bf16.gmra.mxu0 %v2220
      %v2830 = vpop.f32.mrf.mxu0
      %v2831 = vadd.f32 %v2734, %v2830
      %v2832 = vpop.f32.mrf.mxu0
      %v2833 = vpop.f32.mrf.mxu0
      %v2834 = vadd.f32 %v2737, %v2833
      %v2835 = vpop.f32.mrf.mxu0
      %2836 = vmatprep.mubr.bf16.mxu0 %v2227
      %2837 = vmatmul.mubr.bf16.gmra.mxu0 %v2226
      %v2838 = vpop.f32.mrf.mxu0
      %v2839 = vadd.f32 %v2742, %v2838
      %v2840 = vpop.f32.mrf.mxu0
      %v2841 = vpop.f32.mrf.mxu0
      %v2842 = vadd.f32 %v2745, %v2841
      %v2843 = vpop.f32.mrf.mxu0
      %2844 = vmatprep.mubr.bf16.mxu0 %v2233
      %2845 = vmatmul.mubr.bf16.gmra.mxu0 %v2232
      %v2846 = vpop.f32.mrf.mxu0
      %v2847 = vadd.f32 %v2750, %v2846
      %v2848 = vpop.f32.mrf.mxu0
      %v2849 = vpop.f32.mrf.mxu0
      %v2850 = vadd.f32 %v2753, %v2849
      %v2851 = vpop.f32.mrf.mxu0
      %2852 = vmatprep.mubr.bf16.mxu0 %v2239
      %2853 = vmatmul.mubr.bf16.gmra.mxu0 %v2238
      %v2854 = vpop.f32.mrf.mxu0
      %v2855 = vadd.f32 %v2758, %v2854
      %v2856 = vpop.f32.mrf.mxu0
      %v2857 = vpop.f32.mrf.mxu0
      %v2858 = vadd.f32 %v2761, %v2857
      %v2859 = vpop.f32.mrf.mxu0
      %2860 = vmatprep.mubr.bf16.mxu0 %v2245
      %2861 = vmatmul.mubr.bf16.gmra.mxu0 %v2244
      %v2862 = vpop.f32.mrf.mxu0
      %v2863 = vadd.f32 %v2766, %v2862
      %v2864 = vpop.f32.mrf.mxu0
      %v2865 = vpop.f32.mrf.mxu0
      %v2866 = vadd.f32 %v2769, %v2865
      %v2867 = vpop.f32.mrf.mxu0
      %2868 = vmatprep.mubr.bf16.mxu0 %v2251
      %2869 = vmatmul.mubr.bf16.gmra.mxu0 %v2250
      %v2870 = vpop.f32.mrf.mxu0
      %v2871 = vadd.f32 %v2774, %v2870
      %v2872 = vpop.f32.mrf.mxu0
      %v2873 = vpop.f32.mrf.mxu0
      %v2874 = vadd.f32 %v2777, %v2873
      %v2875 = vpop.f32.mrf.mxu0
      %2876 = vmatprep.mubr.bf16.mxu0 %v2257
      %2877 = vmatmul.mubr.bf16.gmra.mxu0 %v2256
      %v2878 = vpop.f32.mrf.mxu0
      %v2879 = vadd.f32 %v2782, %v2878
      %v2880 = vpop.f32.mrf.mxu0
      %v2881 = vpop.f32.mrf.mxu0
      %v2882 = vadd.f32 %v2785, %v2881
      %v2883 = vpop.f32.mrf.mxu0
      %2884 = vdwg.mxu0
      %v2885 = vmax.f32 %v2823, 0.0
      %v2886 = vmax.f32 %v2826, 0.0
      %v2887 = vmax.f32 %v2831, 0.0
      %v2888 = vmax.f32 %v2834, 0.0
      %v2889 = vmax.f32 %v2839, 0.0
      %v2890 = vmax.f32 %v2842, 0.0
      %v2891 = vmax.f32 %v2847, 0.0
      %v2892 = vmax.f32 %v2850, 0.0
      %v2893 = vmax.f32 %v2855, 0.0
      %v2894 = vmax.f32 %v2858, 0.0
      %v2895 = vmax.f32 %v2863, 0.0
      %v2896 = vmax.f32 %v2866, 0.0
      %v2897 = vmax.f32 %v2871, 0.0
      %v2898 = vmax.f32 %v2874, 0.0
      %v2899 = vmax.f32 %v2879, 0.0
      %v2900 = vmax.f32 %v2882, 0.0
      %v2901 = vpack.c.bf16 %v2886, %v2885
      %v2902 = vpack.c.bf16 %v2888, %v2887
      %v2903 = vpack.c.bf16 %v2890, %v2889
      %v2904 = vpack.c.bf16 %v2892, %v2891
      %v2905 = vpack.c.bf16 %v2894, %v2893
      %v2906 = vpack.c.bf16 %v2896, %v2895
      %v2907 = vpack.c.bf16 %v2898, %v2897
      %v2908 = vpack.c.bf16 %v2900, %v2899
      %v2909 = vld [vmem:[%s2] sm:$0xf]
      %v2910 = vld [vmem:[%s2 + $0x4] sm:$0xf]
      %v2911 = vld [vmem:[%s2 + $0x8] sm:$0xf]
      %v2912 = vld [vmem:[%s2 + $0xc] sm:$0xf]
      %v2913 = vld [vmem:[%s2 + $0x10] sm:$0xf]
      %v2914 = vld [vmem:[%s2 + $0x14] sm:$0xf]
      %v2915 = vld [vmem:[%s2 + $0x18] sm:$0xf]
      %v2916 = vld [vmem:[%s2 + $0x1c] sm:$0xf]
      %v2917 = vld [vmem:[%s2 + $0x20] sm:$0xf]
      %v2918 = vld [vmem:[%s2 + $0x24] sm:$0xf]
      %v2919 = vld [vmem:[%s2 + $0x28] sm:$0xf]
      %v2920 = vld [vmem:[%s2 + $0x2c] sm:$0xf]
      %v2921 = vld [vmem:[%s2 + $0x30] sm:$0xf]
      %v2922 = vld [vmem:[%s2 + $0x34] sm:$0xf]
      %v2923 = vld [vmem:[%s2 + $0x38] sm:$0xf]
      %v2924 = vld [vmem:[%s2 + $0x3c] sm:$0xf]
      %v2925 = vld [vmem:[%s3] sm:$0x1]
      %v2927 = vlaneseq
      %v2928 = vshrl.u32 %v2927, 7
      %v2929 = vsub.s32 0, %v2928
      %v2930 = vrot.slane %v2925, %v2929
      %v2948 = vunpack.c.l.b16 %v2909
      %v2949 = vunpack.c.l.b16 %v2910
      %v2950 = vunpack.c.l.b16 %v2911
      %v2951 = vunpack.c.l.b16 %v2912
      %v2952 = vunpack.c.l.b16 %v2913
      %v2953 = vunpack.c.l.b16 %v2914
      %v2954 = vunpack.c.l.b16 %v2915
      %v2955 = vunpack.c.l.b16 %v2916
      %v2956 = vunpack.c.l.b16 %v2917
      %v2957 = vunpack.c.l.b16 %v2918
      %v2958 = vunpack.c.l.b16 %v2919
      %v2959 = vunpack.c.l.b16 %v2920
      %v2960 = vunpack.c.l.b16 %v2921
      %v2961 = vunpack.c.l.b16 %v2922
      %v2962 = vunpack.c.l.b16 %v2923
      %v2963 = vunpack.c.l.b16 %v2924
      %v2964 = vpack.c.b16 %v2949, %v2948
      %v2965 = vpack.c.b16 %v2951, %v2950
      %v2966 = vpack.c.b16 %v2953, %v2952
      %v2967 = vpack.c.b16 %v2955, %v2954
      %v2968 = vpack.c.b16 %v2957, %v2956
      %v2969 = vpack.c.b16 %v2959, %v2958
      %v2970 = vpack.c.b16 %v2961, %v2960
      %v2971 = vpack.c.b16 %v2963, %v2962
      %2980 = vmatprep.subr.bf16.mxu0 0
      %2981 = vmatpush1.bf16.msra.mxu0 %v2971
      %2982 = vmatprep.subr.bf16.mxu0 0
      %2983 = vmatpush1.bf16.msra.mxu0 %v2970
      %2984 = vmatprep.subr.bf16.mxu0 0
      %2985 = vmatpush1.bf16.msra.mxu0 %v2969
      %2986 = vmatprep.subr.bf16.mxu0 0
      %2987 = vmatpush1.bf16.msra.mxu0 %v2968
      %2988 = vmatprep.subr.bf16.mxu0 0
      %2989 = vmatpush1.bf16.msra.mxu0 %v2967
      %2990 = vmatprep.subr.bf16.mxu0 0
      %2991 = vmatpush1.bf16.msra.mxu0 %v2966
      %2992 = vmatprep.subr.bf16.mxu0 0
      %2993 = vmatpush1.bf16.msra.mxu0 %v2965
      %2994 = vmatprep.subr.bf16.mxu0 0
      %2995 = vmatpush1.bf16.msra.mxu0 %v2964
      %2996 = vmatprep.subr.bf16.mxu0 0
      %2997 = vmatpush2.bf16.msra.mxu0 0
      %2998 = vmatprep.subr.bf16.mxu0 0
      %2999 = vmatpush2.bf16.msra.mxu0 0
      %3000 = vmatprep.subr.bf16.mxu0 0
      %3001 = vmatpush2.bf16.msra.mxu0 0
      %3002 = vmatprep.subr.bf16.mxu0 0
      %3003 = vmatpush2.bf16.msra.mxu0 0
      %3004 = vmatprep.subr.bf16.mxu0 0
      %3005 = vmatpush2.bf16.msra.mxu0 0
      %3006 = vmatprep.subr.bf16.mxu0 0
      %3007 = vmatpush2.bf16.msra.mxu0 0
      %3008 = vmatprep.subr.bf16.mxu0 0
      %3009 = vmatpush2.bf16.msra.mxu0 0
      %3010 = vmatprep.subr.bf16.mxu0 0
      %3011 = vmatpush2.bf16.msra.mxu0 0
      %3012 = vmatprep.mubr.bf16.mxu0 0
      %3013 = vmatmul.mubr.bf16.gmra.mxu0 %v2901
      %v3014 = vpop.f32.mrf.mxu0
      %v3015 = vadd.f32 %v2930, %v3014
      %v3016 = vpop.f32.mrf.mxu0
      %v3017 = vpop.f32.mrf.mxu0
      %v3018 = vadd.f32 %v2930, %v3017
      %v3019 = vpop.f32.mrf.mxu0
      %3020 = vmatprep.mubr.bf16.mxu0 0
      %3021 = vmatmul.mubr.bf16.gmra.mxu0 %v2902
      %v3022 = vpop.f32.mrf.mxu0
      %v3023 = vadd.f32 %v2930, %v3022
      %v3024 = vpop.f32.mrf.mxu0
      %v3025 = vpop.f32.mrf.mxu0
      %v3026 = vadd.f32 %v2930, %v3025
      %v3027 = vpop.f32.mrf.mxu0
      %3028 = vmatprep.mubr.bf16.mxu0 0
      %3029 = vmatmul.mubr.bf16.gmra.mxu0 %v2903
      %v3030 = vpop.f32.mrf.mxu0
      %v3031 = vadd.f32 %v2930, %v3030
      %v3032 = vpop.f32.mrf.mxu0
      %v3033 = vpop.f32.mrf.mxu0
      %v3034 = vadd.f32 %v2930, %v3033
      %v3035 = vpop.f32.mrf.mxu0
      %3036 = vmatprep.mubr.bf16.mxu0 0
      %3037 = vmatmul.mubr.bf16.gmra.mxu0 %v2904
      %v3038 = vpop.f32.mrf.mxu0
      %v3039 = vadd.f32 %v2930, %v3038
      %v3040 = vpop.f32.mrf.mxu0
      %v3041 = vpop.f32.mrf.mxu0
      %v3042 = vadd.f32 %v2930, %v3041
      %v3043 = vpop.f32.mrf.mxu0
      %3044 = vmatprep.mubr.bf16.mxu0 0
      %3045 = vmatmul.mubr.bf16.gmra.mxu0 %v2905
      %v3046 = vpop.f32.mrf.mxu0
      %v3047 = vadd.f32 %v2930, %v3046
      %v3048 = vpop.f32.mrf.mxu0
      %v3049 = vpop.f32.mrf.mxu0
      %v3050 = vadd.f32 %v2930, %v3049
      %v3051 = vpop.f32.mrf.mxu0
      %3052 = vmatprep.mubr.bf16.mxu0 0
      %3053 = vmatmul.mubr.bf16.gmra.mxu0 %v2906
      %v3054 = vpop.f32.mrf.mxu0
      %v3055 = vadd.f32 %v2930, %v3054
      %v3056 = vpop.f32.mrf.mxu0
      %v3057 = vpop.f32.mrf.mxu0
      %v3058 = vadd.f32 %v2930, %v3057
      %v3059 = vpop.f32.mrf.mxu0
      %3060 = vmatprep.mubr.bf16.mxu0 0
      %3061 = vmatmul.mubr.bf16.gmra.mxu0 %v2907
      %v3062 = vpop.f32.mrf.mxu0
      %v3063 = vadd.f32 %v2930, %v3062
      %v3064 = vpop.f32.mrf.mxu0
      %v3065 = vpop.f32.mrf.mxu0
      %v3066 = vadd.f32 %v2930, %v3065
      %v3067 = vpop.f32.mrf.mxu0
      %3068 = vmatprep.mubr.bf16.mxu0 0
      %3069 = vmatmul.mubr.bf16.gmra.mxu0 %v2908
      %v3070 = vpop.f32.mrf.mxu0
      %v3071 = vadd.f32 %v2930, %v3070
      %v3072 = vpop.f32.mrf.mxu0
      %v3073 = vpop.f32.mrf.mxu0
      %v3074 = vadd.f32 %v2930, %v3073
      %v3075 = vpop.f32.mrf.mxu0
      %3076 = vdwg.mxu0
      %v3077 = vmax.f32 %v3015, 0.0
      %v3078 = vmax.f32 %v3018, 0.0
      %v3079 = vmax.f32 %v3023, 0.0
      %v3080 = vmax.f32 %v3026, 0.0
      %v3081 = vmax.f32 %v3031, 0.0
      %v3082 = vmax.f32 %v3034, 0.0
      %v3083 = vmax.f32 %v3039, 0.0
      %v3084 = vmax.f32 %v3042, 0.0
      %v3085 = vmax.f32 %v3047, 0.0
      %v3086 = vmax.f32 %v3050, 0.0
      %v3087 = vmax.f32 %v3055, 0.0
      %v3088 = vmax.f32 %v3058, 0.0
      %v3089 = vmax.f32 %v3063, 0.0
      %v3090 = vmax.f32 %v3066, 0.0
      %v3091 = vmax.f32 %v3071, 0.0
      %v3092 = vmax.f32 %v3074, 0.0
      %v3093 = vpack.c.bf16 %v3078, %v3077
      %v3094 = vpack.c.bf16 %v3080, %v3079
      %v3095 = vpack.c.bf16 %v3082, %v3081
      %v3096 = vpack.c.bf16 %v3084, %v3083
      %v3097 = vpack.c.bf16 %v3086, %v3085
      %v3098 = vpack.c.bf16 %v3088, %v3087
      %v3099 = vpack.c.bf16 %v3090, %v3089
      %v3100 = vpack.c.bf16 %v3092, %v3091
      %v3101 = vld [vmem:[%s4] sm:$0xf]
      %v3102 = vld [vmem:[%s4 + $0x4] sm:$0xf]
      %v3103 = vld [vmem:[%s4 + $0x8] sm:$0xf]
      %v3104 = vld [vmem:[%s4 + $0xc] sm:$0xf]
      %v3105 = vld [vmem:[%s4 + $0x10] sm:$0xf]
      %v3106 = vld [vmem:[%s4 + $0x14] sm:$0xf]
      %v3107 = vld [vmem:[%s4 + $0x18] sm:$0xf]
      %v3108 = vld [vmem:[%s4 + $0x1c] sm:$0xf]
      %v3109 = vld [vmem:[%s4 + $0x20] sm:$0xf]
      %v3110 = vld [vmem:[%s4 + $0x24] sm:$0xf]
      %v3111 = vld [vmem:[%s4 + $0x28] sm:$0xf]
      %v3112 = vld [vmem:[%s4 + $0x2c] sm:$0xf]
      %v3113 = vld [vmem:[%s4 + $0x30] sm:$0xf]
      %v3114 = vld [vmem:[%s4 + $0x34] sm:$0xf]
      %v3115 = vld [vmem:[%s4 + $0x38] sm:$0xf]
      %v3116 = vld [vmem:[%s4 + $0x3c] sm:$0xf]
      %v3117 = vld [vmem:[%s5] sm:$0x1]
      %v3119 = vlaneseq
      %v3120 = vshrl.u32 %v3119, 7
      %v3121 = vsub.s32 0, %v3120
      %v3122 = vrot.slane %v3117, %v3121
      %v3140 = vunpack.c.l.b16 %v3101
      %v3141 = vunpack.c.l.b16 %v3102
      %v3142 = vunpack.c.l.b16 %v3103
      %v3143 = vunpack.c.l.b16 %v3104
      %v3144 = vunpack.c.l.b16 %v3105
      %v3145 = vunpack.c.l.b16 %v3106
      %v3146 = vunpack.c.l.b16 %v3107
      %v3147 = vunpack.c.l.b16 %v3108
      %v3148 = vunpack.c.l.b16 %v3109
      %v3149 = vunpack.c.l.b16 %v3110
      %v3150 = vunpack.c.l.b16 %v3111
      %v3151 = vunpack.c.l.b16 %v3112
      %v3152 = vunpack.c.l.b16 %v3113
      %v3153 = vunpack.c.l.b16 %v3114
      %v3154 = vunpack.c.l.b16 %v3115
      %v3155 = vunpack.c.l.b16 %v3116
      %v3156 = vpack.c.b16 %v3141, %v3140
      %v3157 = vpack.c.b16 %v3143, %v3142
      %v3158 = vpack.c.b16 %v3145, %v3144
      %v3159 = vpack.c.b16 %v3147, %v3146
      %v3160 = vpack.c.b16 %v3149, %v3148
      %v3161 = vpack.c.b16 %v3151, %v3150
      %v3162 = vpack.c.b16 %v3153, %v3152
      %v3163 = vpack.c.b16 %v3155, %v3154
      %3172 = vmatprep.subr.bf16.mxu0 0
      %3173 = vmatpush1.bf16.msra.mxu0 %v3163
      %3174 = vmatprep.subr.bf16.mxu0 0
      %3175 = vmatpush1.bf16.msra.mxu0 %v3162
      %3176 = vmatprep.subr.bf16.mxu0 0
      %3177 = vmatpush1.bf16.msra.mxu0 %v3161
      %3178 = vmatprep.subr.bf16.mxu0 0
      %3179 = vmatpush1.bf16.msra.mxu0 %v3160
      %3180 = vmatprep.subr.bf16.mxu0 0
      %3181 = vmatpush1.bf16.msra.mxu0 %v3159
      %3182 = vmatprep.subr.bf16.mxu0 0
      %3183 = vmatpush1.bf16.msra.mxu0 %v3158
      %3184 = vmatprep.subr.bf16.mxu0 0
      %3185 = vmatpush1.bf16.msra.mxu0 %v3157
      %3186 = vmatprep.subr.bf16.mxu0 0
      %3187 = vmatpush1.bf16.msra.mxu0 %v3156
      %3188 = vmatprep.subr.bf16.mxu0 0
      %3189 = vmatpush2.bf16.msra.mxu0 0
      %3190 = vmatprep.subr.bf16.mxu0 0
      %3191 = vmatpush2.bf16.msra.mxu0 0
      %3192 = vmatprep.subr.bf16.mxu0 0
      %3193 = vmatpush2.bf16.msra.mxu0 0
      %3194 = vmatprep.subr.bf16.mxu0 0
      %3195 = vmatpush2.bf16.msra.mxu0 0
      %3196 = vmatprep.subr.bf16.mxu0 0
      %3197 = vmatpush2.bf16.msra.mxu0 0
      %3198 = vmatprep.subr.bf16.mxu0 0
      %3199 = vmatpush2.bf16.msra.mxu0 0
      %3200 = vmatprep.subr.bf16.mxu0 0
      %3201 = vmatpush2.bf16.msra.mxu0 0
      %3202 = vmatprep.subr.bf16.mxu0 0
      %3203 = vmatpush2.bf16.msra.mxu0 0
      %3204 = vmatprep.mubr.bf16.mxu0 0
      %3205 = vmatmul.mubr.bf16.gmra.mxu0 %v3093
      %v3206 = vpop.f32.mrf.mxu0
      %v3207 = vadd.f32 %v3122, %v3206
      %v3208 = vpop.f32.mrf.mxu0
      %v3209 = vpop.f32.mrf.mxu0
      %v3210 = vadd.f32 %v3122, %v3209
      %v3211 = vpop.f32.mrf.mxu0
      %3212 = vmatprep.mubr.bf16.mxu0 0
      %3213 = vmatmul.mubr.bf16.gmra.mxu0 %v3094
      %v3214 = vpop.f32.mrf.mxu0
      %v3215 = vadd.f32 %v3122, %v3214
      %v3216 = vpop.f32.mrf.mxu0
      %v3217 = vpop.f32.mrf.mxu0
      %v3218 = vadd.f32 %v3122, %v3217
      %v3219 = vpop.f32.mrf.mxu0
      %3220 = vmatprep.mubr.bf16.mxu0 0
      %3221 = vmatmul.mubr.bf16.gmra.mxu0 %v3095
      %v3222 = vpop.f32.mrf.mxu0
      %v3223 = vadd.f32 %v3122, %v3222
      %v3224 = vpop.f32.mrf.mxu0
      %v3225 = vpop.f32.mrf.mxu0
      %v3226 = vadd.f32 %v3122, %v3225
      %v3227 = vpop.f32.mrf.mxu0
      %3228 = vmatprep.mubr.bf16.mxu0 0
      %3229 = vmatmul.mubr.bf16.gmra.mxu0 %v3096
      %v3230 = vpop.f32.mrf.mxu0
      %v3231 = vadd.f32 %v3122, %v3230
      %v3232 = vpop.f32.mrf.mxu0
      %v3233 = vpop.f32.mrf.mxu0
      %v3234 = vadd.f32 %v3122, %v3233
      %v3235 = vpop.f32.mrf.mxu0
      %3236 = vmatprep.mubr.bf16.mxu0 0
      %3237 = vmatmul.mubr.bf16.gmra.mxu0 %v3097
      %v3238 = vpop.f32.mrf.mxu0
      %v3239 = vadd.f32 %v3122, %v3238
      %v3240 = vpop.f32.mrf.mxu0
      %v3241 = vpop.f32.mrf.mxu0
      %v3242 = vadd.f32 %v3122, %v3241
      %v3243 = vpop.f32.mrf.mxu0
      %3244 = vmatprep.mubr.bf16.mxu0 0
      %3245 = vmatmul.mubr.bf16.gmra.mxu0 %v3098
      %v3246 = vpop.f32.mrf.mxu0
      %v3247 = vadd.f32 %v3122, %v3246
      %v3248 = vpop.f32.mrf.mxu0
      %v3249 = vpop.f32.mrf.mxu0
      %v3250 = vadd.f32 %v3122, %v3249
      %v3251 = vpop.f32.mrf.mxu0
      %3252 = vmatprep.mubr.bf16.mxu0 0
      %3253 = vmatmul.mubr.bf16.gmra.mxu0 %v3099
      %v3254 = vpop.f32.mrf.mxu0
      %v3255 = vadd.f32 %v3122, %v3254
      %v3256 = vpop.f32.mrf.mxu0
      %v3257 = vpop.f32.mrf.mxu0
      %v3258 = vadd.f32 %v3122, %v3257
      %v3259 = vpop.f32.mrf.mxu0
      %3260 = vmatprep.mubr.bf16.mxu0 0
      %3261 = vmatmul.mubr.bf16.gmra.mxu0 %v3100
      %v3262 = vpop.f32.mrf.mxu0
      %v3263 = vadd.f32 %v3122, %v3262
      %v3264 = vpop.f32.mrf.mxu0
      %v3265 = vpop.f32.mrf.mxu0
      %v3266 = vadd.f32 %v3122, %v3265
      %v3267 = vpop.f32.mrf.mxu0
      %3268 = vdwg.mxu0
      %v3269 = vmax.f32 %v3207, 0.0
      %v3270 = vmax.f32 %v3210, 0.0
      %v3271 = vmax.f32 %v3215, 0.0
      %v3272 = vmax.f32 %v3218, 0.0
      %v3273 = vmax.f32 %v3223, 0.0
      %v3274 = vmax.f32 %v3226, 0.0
      %v3275 = vmax.f32 %v3231, 0.0
      %v3276 = vmax.f32 %v3234, 0.0
      %v3277 = vmax.f32 %v3239, 0.0
      %v3278 = vmax.f32 %v3242, 0.0
      %v3279 = vmax.f32 %v3247, 0.0
      %v3280 = vmax.f32 %v3250, 0.0
      %v3281 = vmax.f32 %v3255, 0.0
      %v3282 = vmax.f32 %v3258, 0.0
      %v3283 = vmax.f32 %v3263, 0.0
      %v3284 = vmax.f32 %v3266, 0.0
      %v3285 = vpack.c.bf16 %v3270, %v3269
      %v3286 = vpack.c.bf16 %v3272, %v3271
      %v3287 = vpack.c.bf16 %v3274, %v3273
      %v3288 = vpack.c.bf16 %v3276, %v3275
      %v3289 = vpack.c.bf16 %v3278, %v3277
      %v3290 = vpack.c.bf16 %v3280, %v3279
      %v3291 = vpack.c.bf16 %v3282, %v3281
      %v3292 = vpack.c.bf16 %v3284, %v3283
      %v3293 = vld [vmem:[%s6] sm:$0xf]
      %v3294 = vld [vmem:[%s6 + $0x4] sm:$0xf]
      %v3295 = vld [vmem:[%s6 + $0x8] sm:$0xf]
      %v3296 = vld [vmem:[%s6 + $0xc] sm:$0xf]
      %v3297 = vld [vmem:[%s6 + $0x10] sm:$0xf]
      %v3298 = vld [vmem:[%s6 + $0x14] sm:$0xf]
      %v3299 = vld [vmem:[%s6 + $0x18] sm:$0xf]
      %v3300 = vld [vmem:[%s6 + $0x1c] sm:$0xf]
      %v3301 = vld [vmem:[%s6 + $0x20] sm:$0xf]
      %v3302 = vld [vmem:[%s6 + $0x24] sm:$0xf]
      %v3303 = vld [vmem:[%s6 + $0x28] sm:$0xf]
      %v3304 = vld [vmem:[%s6 + $0x2c] sm:$0xf]
      %v3305 = vld [vmem:[%s6 + $0x30] sm:$0xf]
      %v3306 = vld [vmem:[%s6 + $0x34] sm:$0xf]
      %v3307 = vld [vmem:[%s6 + $0x38] sm:$0xf]
      %v3308 = vld [vmem:[%s6 + $0x3c] sm:$0xf]
      %v3309 = vld [vmem:[%s7] sm:$0x1]
      %v3311 = vlaneseq
      %v3312 = vshrl.u32 %v3311, 7
      %v3313 = vsub.s32 0, %v3312
      %v3314 = vrot.slane %v3309, %v3313
      %v3332 = vunpack.c.l.b16 %v3293
      %v3333 = vunpack.c.l.b16 %v3294
      %v3334 = vunpack.c.l.b16 %v3295
      %v3335 = vunpack.c.l.b16 %v3296
      %v3336 = vunpack.c.l.b16 %v3297
      %v3337 = vunpack.c.l.b16 %v3298
      %v3338 = vunpack.c.l.b16 %v3299
      %v3339 = vunpack.c.l.b16 %v3300
      %v3340 = vunpack.c.l.b16 %v3301
      %v3341 = vunpack.c.l.b16 %v3302
      %v3342 = vunpack.c.l.b16 %v3303
      %v3343 = vunpack.c.l.b16 %v3304
      %v3344 = vunpack.c.l.b16 %v3305
      %v3345 = vunpack.c.l.b16 %v3306
      %v3346 = vunpack.c.l.b16 %v3307
      %v3347 = vunpack.c.l.b16 %v3308
      %v3348 = vpack.c.b16 %v3333, %v3332
      %v3349 = vpack.c.b16 %v3335, %v3334
      %v3350 = vpack.c.b16 %v3337, %v3336
      %v3351 = vpack.c.b16 %v3339, %v3338
      %v3352 = vpack.c.b16 %v3341, %v3340
      %v3353 = vpack.c.b16 %v3343, %v3342
      %v3354 = vpack.c.b16 %v3345, %v3344
      %v3355 = vpack.c.b16 %v3347, %v3346
      %3364 = vmatprep.subr.bf16.mxu0 0
      %3365 = vmatpush1.bf16.msra.mxu0 %v3355
      %3366 = vmatprep.subr.bf16.mxu0 0
      %3367 = vmatpush1.bf16.msra.mxu0 %v3354
      %3368 = vmatprep.subr.bf16.mxu0 0
      %3369 = vmatpush1.bf16.msra.mxu0 %v3353
      %3370 = vmatprep.subr.bf16.mxu0 0
      %3371 = vmatpush1.bf16.msra.mxu0 %v3352
      %3372 = vmatprep.subr.bf16.mxu0 0
      %3373 = vmatpush1.bf16.msra.mxu0 %v3351
      %3374 = vmatprep.subr.bf16.mxu0 0
      %3375 = vmatpush1.bf16.msra.mxu0 %v3350
      %3376 = vmatprep.subr.bf16.mxu0 0
      %3377 = vmatpush1.bf16.msra.mxu0 %v3349
      %3378 = vmatprep.subr.bf16.mxu0 0
      %3379 = vmatpush1.bf16.msra.mxu0 %v3348
      %3380 = vmatprep.subr.bf16.mxu0 0
      %3381 = vmatpush2.bf16.msra.mxu0 0
      %3382 = vmatprep.subr.bf16.mxu0 0
      %3383 = vmatpush2.bf16.msra.mxu0 0
      %3384 = vmatprep.subr.bf16.mxu0 0
      %3385 = vmatpush2.bf16.msra.mxu0 0
      %3386 = vmatprep.subr.bf16.mxu0 0
      %3387 = vmatpush2.bf16.msra.mxu0 0
      %3388 = vmatprep.subr.bf16.mxu0 0
      %3389 = vmatpush2.bf16.msra.mxu0 0
      %3390 = vmatprep.subr.bf16.mxu0 0
      %3391 = vmatpush2.bf16.msra.mxu0 0
      %3392 = vmatprep.subr.bf16.mxu0 0
      %3393 = vmatpush2.bf16.msra.mxu0 0
      %3394 = vmatprep.subr.bf16.mxu0 0
      %3395 = vmatpush2.bf16.msra.mxu0 0
      %3396 = vmatprep.mubr.bf16.mxu0 0
      %3397 = vmatmul.mubr.bf16.gmra.mxu0 %v3285
      %v3398 = vpop.f32.mrf.mxu0
      %v3399 = vadd.f32 %v3314, %v3398
      %v3400 = vpop.f32.mrf.mxu0
      %v3401 = vpop.f32.mrf.mxu0
      %v3402 = vadd.f32 %v3314, %v3401
      %v3403 = vpop.f32.mrf.mxu0
      %3404 = vmatprep.mubr.bf16.mxu0 0
      %3405 = vmatmul.mubr.bf16.gmra.mxu0 %v3286
      %v3406 = vpop.f32.mrf.mxu0
      %v3407 = vadd.f32 %v3314, %v3406
      %v3408 = vpop.f32.mrf.mxu0
      %v3409 = vpop.f32.mrf.mxu0
      %v3410 = vadd.f32 %v3314, %v3409
      %v3411 = vpop.f32.mrf.mxu0
      %3412 = vmatprep.mubr.bf16.mxu0 0
      %3413 = vmatmul.mubr.bf16.gmra.mxu0 %v3287
      %v3414 = vpop.f32.mrf.mxu0
      %v3415 = vadd.f32 %v3314, %v3414
      %v3416 = vpop.f32.mrf.mxu0
      %v3417 = vpop.f32.mrf.mxu0
      %v3418 = vadd.f32 %v3314, %v3417
      %v3419 = vpop.f32.mrf.mxu0
      %3420 = vmatprep.mubr.bf16.mxu0 0
      %3421 = vmatmul.mubr.bf16.gmra.mxu0 %v3288
      %v3422 = vpop.f32.mrf.mxu0
      %v3423 = vadd.f32 %v3314, %v3422
      %v3424 = vpop.f32.mrf.mxu0
      %v3425 = vpop.f32.mrf.mxu0
      %v3426 = vadd.f32 %v3314, %v3425
      %v3427 = vpop.f32.mrf.mxu0
      %3428 = vmatprep.mubr.bf16.mxu0 0
      %3429 = vmatmul.mubr.bf16.gmra.mxu0 %v3289
      %v3430 = vpop.f32.mrf.mxu0
      %v3431 = vadd.f32 %v3314, %v3430
      %v3432 = vpop.f32.mrf.mxu0
      %v3433 = vpop.f32.mrf.mxu0
      %v3434 = vadd.f32 %v3314, %v3433
      %v3435 = vpop.f32.mrf.mxu0
      %3436 = vmatprep.mubr.bf16.mxu0 0
      %3437 = vmatmul.mubr.bf16.gmra.mxu0 %v3290
      %v3438 = vpop.f32.mrf.mxu0
      %v3439 = vadd.f32 %v3314, %v3438
      %v3440 = vpop.f32.mrf.mxu0
      %v3441 = vpop.f32.mrf.mxu0
      %v3442 = vadd.f32 %v3314, %v3441
      %v3443 = vpop.f32.mrf.mxu0
      %3444 = vmatprep.mubr.bf16.mxu0 0
      %3445 = vmatmul.mubr.bf16.gmra.mxu0 %v3291
      %v3446 = vpop.f32.mrf.mxu0
      %v3447 = vadd.f32 %v3314, %v3446
      %v3448 = vpop.f32.mrf.mxu0
      %v3449 = vpop.f32.mrf.mxu0
      %v3450 = vadd.f32 %v3314, %v3449
      %v3451 = vpop.f32.mrf.mxu0
      %3452 = vmatprep.mubr.bf16.mxu0 0
      %3453 = vmatmul.mubr.bf16.gmra.mxu0 %v3292
      %v3454 = vpop.f32.mrf.mxu0
      %v3455 = vadd.f32 %v3314, %v3454
      %v3456 = vpop.f32.mrf.mxu0
      %v3457 = vpop.f32.mrf.mxu0
      %v3458 = vadd.f32 %v3314, %v3457
      %v3459 = vpop.f32.mrf.mxu0
      %3460 = vdwg.mxu0
      %v3461 = vmax.f32 %v3399, 0.0
      %v3462 = vmax.f32 %v3402, 0.0
      %v3463 = vmax.f32 %v3407, 0.0
      %v3464 = vmax.f32 %v3410, 0.0
      %v3465 = vmax.f32 %v3415, 0.0
      %v3466 = vmax.f32 %v3418, 0.0
      %v3467 = vmax.f32 %v3423, 0.0
      %v3468 = vmax.f32 %v3426, 0.0
      %v3469 = vmax.f32 %v3431, 0.0
      %v3470 = vmax.f32 %v3434, 0.0
      %v3471 = vmax.f32 %v3439, 0.0
      %v3472 = vmax.f32 %v3442, 0.0
      %v3473 = vmax.f32 %v3447, 0.0
      %v3474 = vmax.f32 %v3450, 0.0
      %v3475 = vmax.f32 %v3455, 0.0
      %v3476 = vmax.f32 %v3458, 0.0
      %v3477 = vpack.c.bf16 %v3462, %v3461
      %v3478 = vpack.c.bf16 %v3464, %v3463
      %v3479 = vpack.c.bf16 %v3466, %v3465
      %v3480 = vpack.c.bf16 %v3468, %v3467
      %v3481 = vpack.c.bf16 %v3470, %v3469
      %v3482 = vpack.c.bf16 %v3472, %v3471
      %v3483 = vpack.c.bf16 %v3474, %v3473
      %v3484 = vpack.c.bf16 %v3476, %v3475
      %v3485 = vld [vmem:[%s8] sm:$0xf]
      %v3486 = vld [vmem:[%s8 + $0x4] sm:$0xf]
      %v3487 = vld [vmem:[%s8 + $0x8] sm:$0xf]
      %v3488 = vld [vmem:[%s8 + $0xc] sm:$0xf]
      %v3489 = vld [vmem:[%s8 + $0x10] sm:$0xf]
      %v3490 = vld [vmem:[%s8 + $0x14] sm:$0xf]
      %v3491 = vld [vmem:[%s8 + $0x18] sm:$0xf]
      %v3492 = vld [vmem:[%s8 + $0x1c] sm:$0xf]
      %v3493 = vld [vmem:[%s8 + $0x20] sm:$0xf]
      %v3494 = vld [vmem:[%s8 + $0x24] sm:$0xf]
      %v3495 = vld [vmem:[%s8 + $0x28] sm:$0xf]
      %v3496 = vld [vmem:[%s8 + $0x2c] sm:$0xf]
      %v3497 = vld [vmem:[%s8 + $0x30] sm:$0xf]
      %v3498 = vld [vmem:[%s8 + $0x34] sm:$0xf]
      %v3499 = vld [vmem:[%s8 + $0x38] sm:$0xf]
      %v3500 = vld [vmem:[%s8 + $0x3c] sm:$0xf]
      %v3517 = vunpack.c.l.b16 %v3485
      %v3518 = vunpack.c.l.b16 %v3486
      %v3519 = vunpack.c.l.b16 %v3487
      %v3520 = vunpack.c.l.b16 %v3488
      %v3521 = vunpack.c.l.b16 %v3489
      %v3522 = vunpack.c.l.b16 %v3490
      %v3523 = vunpack.c.l.b16 %v3491
      %v3524 = vunpack.c.l.b16 %v3492
      %v3525 = vunpack.c.l.b16 %v3493
      %v3526 = vunpack.c.l.b16 %v3494
      %v3527 = vunpack.c.l.b16 %v3495
      %v3528 = vunpack.c.l.b16 %v3496
      %v3529 = vunpack.c.l.b16 %v3497
      %v3530 = vunpack.c.l.b16 %v3498
      %v3531 = vunpack.c.l.b16 %v3499
      %v3532 = vunpack.c.l.b16 %v3500
      %v3533 = vpack.c.b16 %v3518, %v3517
      %v3534 = vpack.c.b16 %v3520, %v3519
      %v3535 = vpack.c.b16 %v3522, %v3521
      %v3536 = vpack.c.b16 %v3524, %v3523
      %v3537 = vpack.c.b16 %v3526, %v3525
      %v3538 = vpack.c.b16 %v3528, %v3527
      %v3539 = vpack.c.b16 %v3530, %v3529
      %v3540 = vpack.c.b16 %v3532, %v3531
      %3549 = vmatprep.subr.bf16.mxu0 0
      %3550 = vmatpush1.bf16.msra.mxu0 %v3540
      %3551 = vmatprep.subr.bf16.mxu0 0
      %3552 = vmatpush1.bf16.msra.mxu0 %v3539
      %3553 = vmatprep.subr.bf16.mxu0 0
      %3554 = vmatpush1.bf16.msra.mxu0 %v3538
      %3555 = vmatprep.subr.bf16.mxu0 0
      %3556 = vmatpush1.bf16.msra.mxu0 %v3537
      %3557 = vmatprep.subr.bf16.mxu0 0
      %3558 = vmatpush1.bf16.msra.mxu0 %v3536
      %3559 = vmatprep.subr.bf16.mxu0 0
      %3560 = vmatpush1.bf16.msra.mxu0 %v3535
      %3561 = vmatprep.subr.bf16.mxu0 0
      %3562 = vmatpush1.bf16.msra.mxu0 %v3534
      %3563 = vmatprep.subr.bf16.mxu0 0
      %3564 = vmatpush1.bf16.msra.mxu0 %v3533
      %3565 = vmatprep.subr.bf16.mxu0 0
      %3566 = vmatpush2.bf16.msra.mxu0 0
      %3567 = vmatprep.subr.bf16.mxu0 0
      %3568 = vmatpush2.bf16.msra.mxu0 0
      %3569 = vmatprep.subr.bf16.mxu0 0
      %3570 = vmatpush2.bf16.msra.mxu0 0
      %3571 = vmatprep.subr.bf16.mxu0 0
      %3572 = vmatpush2.bf16.msra.mxu0 0
      %3573 = vmatprep.subr.bf16.mxu0 0
      %3574 = vmatpush2.bf16.msra.mxu0 0
      %3575 = vmatprep.subr.bf16.mxu0 0
      %3576 = vmatpush2.bf16.msra.mxu0 0
      %3577 = vmatprep.subr.bf16.mxu0 0
      %3578 = vmatpush2.bf16.msra.mxu0 0
      %3579 = vmatprep.subr.bf16.mxu0 0
      %3580 = vmatpush2.bf16.msra.mxu0 0
      %3581 = vmatprep.mubr.bf16.mxu0 0
      %3582 = vmatmul.mubr.bf16.gmra.mxu0 %v3477
      %v3583 = vpop.f32.mrf.mxu0
      %v3584 = vadd.f32 0.0, %v3583
      %v3585 = vpop.f32.mrf.mxu0
      %v3586 = vpop.f32.mrf.mxu0
      %v3587 = vadd.f32 0.0, %v3586
      %v3588 = vpop.f32.mrf.mxu0
      %3589 = vmatprep.mubr.bf16.mxu0 0
      %3590 = vmatmul.mubr.bf16.gmra.mxu0 %v3478
      %v3591 = vpop.f32.mrf.mxu0
      %v3592 = vadd.f32 0.0, %v3591
      %v3593 = vpop.f32.mrf.mxu0
      %v3594 = vpop.f32.mrf.mxu0
      %v3595 = vadd.f32 0.0, %v3594
      %v3596 = vpop.f32.mrf.mxu0
      %3597 = vmatprep.mubr.bf16.mxu0 0
      %3598 = vmatmul.mubr.bf16.gmra.mxu0 %v3479
      %v3599 = vpop.f32.mrf.mxu0
      %v3600 = vadd.f32 0.0, %v3599
      %v3601 = vpop.f32.mrf.mxu0
      %v3602 = vpop.f32.mrf.mxu0
      %v3603 = vadd.f32 0.0, %v3602
      %v3604 = vpop.f32.mrf.mxu0
      %3605 = vmatprep.mubr.bf16.mxu0 0
      %3606 = vmatmul.mubr.bf16.gmra.mxu0 %v3480
      %v3607 = vpop.f32.mrf.mxu0
      %v3608 = vadd.f32 0.0, %v3607
      %v3609 = vpop.f32.mrf.mxu0
      %v3610 = vpop.f32.mrf.mxu0
      %v3611 = vadd.f32 0.0, %v3610
      %v3612 = vpop.f32.mrf.mxu0
      %3613 = vmatprep.mubr.bf16.mxu0 0
      %3614 = vmatmul.mubr.bf16.gmra.mxu0 %v3481
      %v3615 = vpop.f32.mrf.mxu0
      %v3616 = vadd.f32 0.0, %v3615
      %v3617 = vpop.f32.mrf.mxu0
      %v3618 = vpop.f32.mrf.mxu0
      %v3619 = vadd.f32 0.0, %v3618
      %v3620 = vpop.f32.mrf.mxu0
      %3621 = vmatprep.mubr.bf16.mxu0 0
      %3622 = vmatmul.mubr.bf16.gmra.mxu0 %v3482
      %v3623 = vpop.f32.mrf.mxu0
      %v3624 = vadd.f32 0.0, %v3623
      %v3625 = vpop.f32.mrf.mxu0
      %v3626 = vpop.f32.mrf.mxu0
      %v3627 = vadd.f32 0.0, %v3626
      %v3628 = vpop.f32.mrf.mxu0
      %3629 = vmatprep.mubr.bf16.mxu0 0
      %3630 = vmatmul.mubr.bf16.gmra.mxu0 %v3483
      %v3631 = vpop.f32.mrf.mxu0
      %v3632 = vadd.f32 0.0, %v3631
      %v3633 = vpop.f32.mrf.mxu0
      %v3634 = vpop.f32.mrf.mxu0
      %v3635 = vadd.f32 0.0, %v3634
      %v3636 = vpop.f32.mrf.mxu0
      %3637 = vmatprep.mubr.bf16.mxu0 0
      %3638 = vmatmul.mubr.bf16.gmra.mxu0 %v3484
      %v3639 = vpop.f32.mrf.mxu0
      %v3640 = vadd.f32 0.0, %v3639
      %v3641 = vpop.f32.mrf.mxu0
      %v3642 = vpop.f32.mrf.mxu0
      %v3643 = vadd.f32 0.0, %v3642
      %v3644 = vpop.f32.mrf.mxu0
      %3645 = vdwg.mxu0
      %v3646 = vmax.f32 %v3584, 0.0
      %v3647 = vmax.f32 %v3587, 0.0
      %v3648 = vmax.f32 %v3592, 0.0
      %v3649 = vmax.f32 %v3595, 0.0
      %v3650 = vmax.f32 %v3600, 0.0
      %v3651 = vmax.f32 %v3603, 0.0
      %v3652 = vmax.f32 %v3608, 0.0
      %v3653 = vmax.f32 %v3611, 0.0
      %v3654 = vmax.f32 %v3616, 0.0
      %v3655 = vmax.f32 %v3619, 0.0
      %v3656 = vmax.f32 %v3624, 0.0
      %v3657 = vmax.f32 %v3627, 0.0
      %v3658 = vmax.f32 %v3632, 0.0
      %v3659 = vmax.f32 %v3635, 0.0
      %v3660 = vmax.f32 %v3640, 0.0
      %v3661 = vmax.f32 %v3643, 0.0
      %v3662 = vpack.c.bf16 %v3647, %v3646
      %v3663 = vpack.c.bf16 %v3649, %v3648
      %v3664 = vpack.c.bf16 %v3651, %v3650
      %v3665 = vpack.c.bf16 %v3653, %v3652
      %v3666 = vpack.c.bf16 %v3655, %v3654
      %v3667 = vpack.c.bf16 %v3657, %v3656
      %v3668 = vpack.c.bf16 %v3659, %v3658
      %v3669 = vpack.c.bf16 %v3661, %v3660
      %v3670 = vld [vmem:[%s9] sm:$0xff]
      %v3671 = vld [vmem:[%s9 + $0x8] sm:$0xff]
      %v3672 = vld [vmem:[%s9 + $0x10] sm:$0xff]
      %v3673 = vld [vmem:[%s9 + $0x18] sm:$0xf]
      %v3674 = vld [vmem:[%s9 + $0x1c] sm:$0xff]
      %v3675 = vld [vmem:[%s9 + $0x24] sm:$0xff]
      %v3676 = vld [vmem:[%s9 + $0x2c] sm:$0xff]
      %v3677 = vld [vmem:[%s9 + $0x34] sm:$0xf]
      %v3678 = vld [vmem:[%s9 + $0x38] sm:$0xff]
      %v3679 = vld [vmem:[%s9 + $0x40] sm:$0xff]
      %v3680 = vld [vmem:[%s9 + $0x48] sm:$0xff]
      %v3681 = vld [vmem:[%s9 + $0x50] sm:$0xf]
      %v3682 = vld [vmem:[%s9 + $0x54] sm:$0xff]
      %v3683 = vld [vmem:[%s9 + $0x5c] sm:$0xff]
      %v3684 = vld [vmem:[%s9 + $0x64] sm:$0xff]
      %v3685 = vld [vmem:[%s9 + $0x6c] sm:$0xf]
      %v3686 = vld [vmem:[%s9 + $0x70] sm:$0xff]
      %v3687 = vld [vmem:[%s9 + $0x78] sm:$0xff]
      %v3688 = vld [vmem:[%s9 + $0x80] sm:$0xff]
      %v3689 = vld [vmem:[%s9 + $0x88] sm:$0xf]
      %v3690 = vld [vmem:[%s9 + $0x8c] sm:$0xff]
      %v3691 = vld [vmem:[%s9 + $0x94] sm:$0xff]
      %v3692 = vld [vmem:[%s9 + $0x9c] sm:$0xff]
      %v3693 = vld [vmem:[%s9 + $0xa4] sm:$0xf]
      %v3694 = vld [vmem:[%s9 + $0xa8] sm:$0xff]
      %v3695 = vld [vmem:[%s9 + $0xb0] sm:$0xff]
      %v3696 = vld [vmem:[%s9 + $0xb8] sm:$0xff]
      %v3697 = vld [vmem:[%s9 + $0xc0] sm:$0xf]
      %v3698 = vld [vmem:[%s9 + $0xc4] sm:$0xff]
      %v3699 = vld [vmem:[%s9 + $0xcc] sm:$0xff]
      %v3700 = vld [vmem:[%s9 + $0xd4] sm:$0xff]
      %v3701 = vld [vmem:[%s9 + $0xdc] sm:$0xf]
      %v3702 = vld [vmem:[%s9 + $0xe0] sm:$0xff]
      %v3703 = vld [vmem:[%s9 + $0xe8] sm:$0xff]
      %v3704 = vld [vmem:[%s9 + $0xf0] sm:$0xff]
      %v3705 = vld [vmem:[%s9 + $0xf8] sm:$0xf]
      %v3706 = vld [vmem:[%s9 + $0xfc] sm:$0xff]
      %v3707 = vld [vmem:[%s9 + $0x104] sm:$0xff]
      %v3708 = vld [vmem:[%s9 + $0x10c] sm:$0xff]
      %v3709 = vld [vmem:[%s9 + $0x114] sm:$0xf]
      %v3710 = vld [vmem:[%s9 + $0x118] sm:$0xff]
      %v3711 = vld [vmem:[%s9 + $0x120] sm:$0xff]
      %v3712 = vld [vmem:[%s9 + $0x128] sm:$0xff]
      %v3713 = vld [vmem:[%s9 + $0x130] sm:$0xf]
      %v3714 = vld [vmem:[%s9 + $0x134] sm:$0xff]
      %v3715 = vld [vmem:[%s9 + $0x13c] sm:$0xff]
      %v3716 = vld [vmem:[%s9 + $0x144] sm:$0xff]
      %v3717 = vld [vmem:[%s9 + $0x14c] sm:$0xf]
      %v3718 = vld [vmem:[%s9 + $0x150] sm:$0xff]
      %v3719 = vld [vmem:[%s9 + $0x158] sm:$0xff]
      %v3720 = vld [vmem:[%s9 + $0x160] sm:$0xff]
      %v3721 = vld [vmem:[%s9 + $0x168] sm:$0xf]
      %v3722 = vld [vmem:[%s9 + $0x16c] sm:$0xff]
      %v3723 = vld [vmem:[%s9 + $0x174] sm:$0xff]
      %v3724 = vld [vmem:[%s9 + $0x17c] sm:$0xff]
      %v3725 = vld [vmem:[%s9 + $0x184] sm:$0xf]
      %v3726 = vld [vmem:[%s9 + $0x188] sm:$0xff]
      %v3727 = vld [vmem:[%s9 + $0x190] sm:$0xff]
      %v3728 = vld [vmem:[%s9 + $0x198] sm:$0xff]
      %v3729 = vld [vmem:[%s9 + $0x1a0] sm:$0xf]
      %v3730 = vld [vmem:[%s9 + $0x1a4] sm:$0xff]
      %v3731 = vld [vmem:[%s9 + $0x1ac] sm:$0xff]
      %v3732 = vld [vmem:[%s9 + $0x1b4] sm:$0xff]
      %v3733 = vld [vmem:[%s9 + $0x1bc] sm:$0xf]
      %v3734 = vld [vmem:[%s10] sm:$0xff]
      %v3736 = vlaneseq
      %v3737 = vshrl.u32 %v3736, 7
      %v3738 = vsub.s32 0, %v3737
      %v3739 = vrot.slane %v3734, %v3738
      %v3740 = vlaneseq
      %v3741 = vshrl.u32 %v3740, 7
      %v3742 = vsub.s32 1, %v3741
      %v3743 = vrot.slane %v3734, %v3742
      %v3744 = vlaneseq
      %v3745 = vshrl.u32 %v3744, 7
      %v3746 = vsub.s32 2, %v3745
      %v3747 = vrot.slane %v3734, %v3746
      %v3748 = vlaneseq
      %v3749 = vshrl.u32 %v3748, 7
      %v3750 = vsub.s32 3, %v3749
      %v3751 = vrot.slane %v3734, %v3750
      %v3752 = vlaneseq
      %v3753 = vshrl.u32 %v3752, 7
      %v3754 = vsub.s32 4, %v3753
      %v3755 = vrot.slane %v3734, %v3754
      %v3756 = vlaneseq
      %v3757 = vshrl.u32 %v3756, 7
      %v3758 = vsub.s32 5, %v3757
      %v3759 = vrot.slane %v3734, %v3758
      %v3760 = vlaneseq
      %v3761 = vshrl.u32 %v3760, 7
      %v3762 = vsub.s32 6, %v3761
      %v3763 = vrot.slane %v3734, %v3762
      %v3835 = vunpack.c.l.b16 %v3670
      %v3836 = vunpack.c.h.b16 %v3670
      %v3837 = vunpack.c.l.b16 %v3671
      %v3838 = vunpack.c.h.b16 %v3671
      %v3839 = vunpack.c.l.b16 %v3672
      %v3840 = vunpack.c.h.b16 %v3672
      %v3841 = vunpack.c.l.b16 %v3673
      %v3842 = vunpack.c.l.b16 %v3674
      %v3843 = vunpack.c.h.b16 %v3674
      %v3844 = vunpack.c.l.b16 %v3675
      %v3845 = vunpack.c.h.b16 %v3675
      %v3846 = vunpack.c.l.b16 %v3676
      %v3847 = vunpack.c.h.b16 %v3676
      %v3848 = vunpack.c.l.b16 %v3677
      %v3849 = vunpack.c.l.b16 %v3678
      %v3850 = vunpack.c.h.b16 %v3678
      %v3851 = vunpack.c.l.b16 %v3679
      %v3852 = vunpack.c.h.b16 %v3679
      %v3853 = vunpack.c.l.b16 %v3680
      %v3854 = vunpack.c.h.b16 %v3680
      %v3855 = vunpack.c.l.b16 %v3681
      %v3856 = vunpack.c.l.b16 %v3682
      %v3857 = vunpack.c.h.b16 %v3682
      %v3858 = vunpack.c.l.b16 %v3683
      %v3859 = vunpack.c.h.b16 %v3683
      %v3860 = vunpack.c.l.b16 %v3684
      %v3861 = vunpack.c.h.b16 %v3684
      %v3862 = vunpack.c.l.b16 %v3685
      %v3863 = vunpack.c.l.b16 %v3686
      %v3864 = vunpack.c.h.b16 %v3686
      %v3865 = vunpack.c.l.b16 %v3687
      %v3866 = vunpack.c.h.b16 %v3687
      %v3867 = vunpack.c.l.b16 %v3688
      %v3868 = vunpack.c.h.b16 %v3688
      %v3869 = vunpack.c.l.b16 %v3689
      %v3870 = vunpack.c.l.b16 %v3690
      %v3871 = vunpack.c.h.b16 %v3690
      %v3872 = vunpack.c.l.b16 %v3691
      %v3873 = vunpack.c.h.b16 %v3691
      %v3874 = vunpack.c.l.b16 %v3692
      %v3875 = vunpack.c.h.b16 %v3692
      %v3876 = vunpack.c.l.b16 %v3693
      %v3877 = vunpack.c.l.b16 %v3694
      %v3878 = vunpack.c.h.b16 %v3694
      %v3879 = vunpack.c.l.b16 %v3695
      %v3880 = vunpack.c.h.b16 %v3695
      %v3881 = vunpack.c.l.b16 %v3696
      %v3882 = vunpack.c.h.b16 %v3696
      %v3883 = vunpack.c.l.b16 %v3697
      %v3884 = vunpack.c.l.b16 %v3698
      %v3885 = vunpack.c.h.b16 %v3698
      %v3886 = vunpack.c.l.b16 %v3699
      %v3887 = vunpack.c.h.b16 %v3699
      %v3888 = vunpack.c.l.b16 %v3700
      %v3889 = vunpack.c.h.b16 %v3700
      %v3890 = vunpack.c.l.b16 %v3701
      %v3891 = vunpack.c.l.b16 %v3702
      %v3892 = vunpack.c.h.b16 %v3702
      %v3893 = vunpack.c.l.b16 %v3703
      %v3894 = vunpack.c.h.b16 %v3703
      %v3895 = vunpack.c.l.b16 %v3704
      %v3896 = vunpack.c.h.b16 %v3704
      %v3897 = vunpack.c.l.b16 %v3705
      %v3898 = vunpack.c.l.b16 %v3706
      %v3899 = vunpack.c.h.b16 %v3706
      %v3900 = vunpack.c.l.b16 %v3707
      %v3901 = vunpack.c.h.b16 %v3707
      %v3902 = vunpack.c.l.b16 %v3708
      %v3903 = vunpack.c.h.b16 %v3708
      %v3904 = vunpack.c.l.b16 %v3709
      %v3905 = vunpack.c.l.b16 %v3710
      %v3906 = vunpack.c.h.b16 %v3710
      %v3907 = vunpack.c.l.b16 %v3711
      %v3908 = vunpack.c.h.b16 %v3711
      %v3909 = vunpack.c.l.b16 %v3712
      %v3910 = vunpack.c.h.b16 %v3712
      %v3911 = vunpack.c.l.b16 %v3713
      %v3912 = vunpack.c.l.b16 %v3714
      %v3913 = vunpack.c.h.b16 %v3714
      %v3914 = vunpack.c.l.b16 %v3715
      %v3915 = vunpack.c.h.b16 %v3715
      %v3916 = vunpack.c.l.b16 %v3716
      %v3917 = vunpack.c.h.b16 %v3716
      %v3918 = vunpack.c.l.b16 %v3717
      %v3919 = vunpack.c.l.b16 %v3718
      %v3920 = vunpack.c.h.b16 %v3718
      %v3921 = vunpack.c.l.b16 %v3719
      %v3922 = vunpack.c.h.b16 %v3719
      %v3923 = vunpack.c.l.b16 %v3720
      %v3924 = vunpack.c.h.b16 %v3720
      %v3925 = vunpack.c.l.b16 %v3721
      %v3926 = vunpack.c.l.b16 %v3722
      %v3927 = vunpack.c.h.b16 %v3722
      %v3928 = vunpack.c.l.b16 %v3723
      %v3929 = vunpack.c.h.b16 %v3723
      %v3930 = vunpack.c.l.b16 %v3724
      %v3931 = vunpack.c.h.b16 %v3724
      %v3932 = vunpack.c.l.b16 %v3725
      %v3933 = vunpack.c.l.b16 %v3726
      %v3934 = vunpack.c.h.b16 %v3726
      %v3935 = vunpack.c.l.b16 %v3727
      %v3936 = vunpack.c.h.b16 %v3727
      %v3937 = vunpack.c.l.b16 %v3728
      %v3938 = vunpack.c.h.b16 %v3728
      %v3939 = vunpack.c.l.b16 %v3729
      %v3940 = vunpack.c.l.b16 %v3730
      %v3941 = vunpack.c.h.b16 %v3730
      %v3942 = vunpack.c.l.b16 %v3731
      %v3943 = vunpack.c.h.b16 %v3731
      %v3944 = vunpack.c.l.b16 %v3732
      %v3945 = vunpack.c.h.b16 %v3732
      %v3946 = vunpack.c.l.b16 %v3733
      %v3947 = vpack.c.b16 %v3842, %v3835
      %v3948 = vpack.c.b16 %v3843, %v3836
      %v3949 = vpack.c.b16 %v3844, %v3837
      %v3950 = vpack.c.b16 %v3845, %v3838
      %v3951 = vpack.c.b16 %v3846, %v3839
      %v3952 = vpack.c.b16 %v3847, %v3840
      %v3953 = vpack.c.b16 %v3848, %v3841
      %v3954 = vpack.c.b16 %v3856, %v3849
      %v3955 = vpack.c.b16 %v3857, %v3850
      %v3956 = vpack.c.b16 %v3858, %v3851
      %v3957 = vpack.c.b16 %v3859, %v3852
      %v3958 = vpack.c.b16 %v3860, %v3853
      %v3959 = vpack.c.b16 %v3861, %v3854
      %v3960 = vpack.c.b16 %v3862, %v3855
      %v3961 = vpack.c.b16 %v3870, %v3863
      %v3962 = vpack.c.b16 %v3871, %v3864
      %v3963 = vpack.c.b16 %v3872, %v3865
      %v3964 = vpack.c.b16 %v3873, %v3866
      %v3965 = vpack.c.b16 %v3874, %v3867
      %v3966 = vpack.c.b16 %v3875, %v3868
      %v3967 = vpack.c.b16 %v3876, %v3869
      %v3968 = vpack.c.b16 %v3884, %v3877
      %v3969 = vpack.c.b16 %v3885, %v3878
      %v3970 = vpack.c.b16 %v3886, %v3879
      %v3971 = vpack.c.b16 %v3887, %v3880
      %v3972 = vpack.c.b16 %v3888, %v3881
      %v3973 = vpack.c.b16 %v3889, %v3882
      %v3974 = vpack.c.b16 %v3890, %v3883
      %v3975 = vpack.c.b16 %v3898, %v3891
      %v3976 = vpack.c.b16 %v3899, %v3892
      %v3977 = vpack.c.b16 %v3900, %v3893
      %v3978 = vpack.c.b16 %v3901, %v3894
      %v3979 = vpack.c.b16 %v3902, %v3895
      %v3980 = vpack.c.b16 %v3903, %v3896
      %v3981 = vpack.c.b16 %v3904, %v3897
      %v3982 = vpack.c.b16 %v3912, %v3905
      %v3983 = vpack.c.b16 %v3913, %v3906
      %v3984 = vpack.c.b16 %v3914, %v3907
      %v3985 = vpack.c.b16 %v3915, %v3908
      %v3986 = vpack.c.b16 %v3916, %v3909
      %v3987 = vpack.c.b16 %v3917, %v3910
      %v3988 = vpack.c.b16 %v3918, %v3911
      %v3989 = vpack.c.b16 %v3926, %v3919
      %v3990 = vpack.c.b16 %v3927, %v3920
      %v3991 = vpack.c.b16 %v3928, %v3921
      %v3992 = vpack.c.b16 %v3929, %v3922
      %v3993 = vpack.c.b16 %v3930, %v3923
      %v3994 = vpack.c.b16 %v3931, %v3924
      %v3995 = vpack.c.b16 %v3932, %v3925
      %v3996 = vpack.c.b16 %v3940, %v3933
      %v3997 = vpack.c.b16 %v3941, %v3934
      %v3998 = vpack.c.b16 %v3942, %v3935
      %v3999 = vpack.c.b16 %v3943, %v3936
      %v4000 = vpack.c.b16 %v3944, %v3937
      %v4001 = vpack.c.b16 %v3945, %v3938
      %v4002 = vpack.c.b16 %v3946, %v3939
      %4059 = vmatprep.subr.bf16.mxu0 %v3997
      %4060 = vmatpush1.bf16.msra.mxu0 %v3996
      %4061 = vmatprep.subr.bf16.mxu0 %v3990
      %4062 = vmatpush1.bf16.msra.mxu0 %v3989
      %4063 = vmatprep.subr.bf16.mxu0 %v3983
      %4064 = vmatpush1.bf16.msra.mxu0 %v3982
      %4065 = vmatprep.subr.bf16.mxu0 %v3976
      %4066 = vmatpush1.bf16.msra.mxu0 %v3975
      %4067 = vmatprep.subr.bf16.mxu0 %v3969
      %4068 = vmatpush1.bf16.msra.mxu0 %v3968
      %4069 = vmatprep.subr.bf16.mxu0 %v3962
      %4070 = vmatpush1.bf16.msra.mxu0 %v3961
      %4071 = vmatprep.subr.bf16.mxu0 %v3955
      %4072 = vmatpush1.bf16.msra.mxu0 %v3954
      %4073 = vmatprep.subr.bf16.mxu0 %v3948
      %4074 = vmatpush1.bf16.msra.mxu0 %v3947
      %4075 = vmatprep.subr.bf16.mxu0 0
      %4076 = vmatpush2.bf16.msra.mxu0 0
      %4077 = vmatprep.subr.bf16.mxu0 0
      %4078 = vmatpush2.bf16.msra.mxu0 0
      %4079 = vmatprep.subr.bf16.mxu0 0
      %4080 = vmatpush2.bf16.msra.mxu0 0
      %4081 = vmatprep.subr.bf16.mxu0 0
      %4082 = vmatpush2.bf16.msra.mxu0 0
      %4083 = vmatprep.subr.bf16.mxu0 0
      %4084 = vmatpush2.bf16.msra.mxu0 0
      %4085 = vmatprep.subr.bf16.mxu0 0
      %4086 = vmatpush2.bf16.msra.mxu0 0
      %4087 = vmatprep.subr.bf16.mxu0 0
      %4088 = vmatpush2.bf16.msra.mxu0 0
      %4089 = vmatprep.subr.bf16.mxu0 0
      %4090 = vmatpush2.bf16.msra.mxu0 0
      %4091 = vmatprep.mubr.bf16.mxu0 0
      %4092 = vmatmul.mubr.bf16.gmra.mxu0 %v3662
      %v4093 = vpop.f32.mrf.mxu0
      %v4094 = vadd.f32 %v3739, %v4093
      %v4095 = vpop.f32.mrf.mxu0
      %v4096 = vadd.f32 %v3743, %v4095
      %v4097 = vpop.f32.mrf.mxu0
      %v4098 = vadd.f32 %v3739, %v4097
      %v4099 = vpop.f32.mrf.mxu0
      %v4100 = vadd.f32 %v3743, %v4099
      %4101 = vmatprep.mubr.bf16.mxu0 0
      %4102 = vmatmul.mubr.bf16.gmra.mxu0 %v3663
      %v4103 = vpop.f32.mrf.mxu0
      %v4104 = vadd.f32 %v3739, %v4103
      %v4105 = vpop.f32.mrf.mxu0
      %v4106 = vadd.f32 %v3743, %v4105
      %v4107 = vpop.f32.mrf.mxu0
      %v4108 = vadd.f32 %v3739, %v4107
      %v4109 = vpop.f32.mrf.mxu0
      %v4110 = vadd.f32 %v3743, %v4109
      %4111 = vmatprep.mubr.bf16.mxu0 0
      %4112 = vmatmul.mubr.bf16.gmra.mxu0 %v3664
      %v4113 = vpop.f32.mrf.mxu0
      %v4114 = vadd.f32 %v3739, %v4113
      %v4115 = vpop.f32.mrf.mxu0
      %v4116 = vadd.f32 %v3743, %v4115
      %v4117 = vpop.f32.mrf.mxu0
      %v4118 = vadd.f32 %v3739, %v4117
      %v4119 = vpop.f32.mrf.mxu0
      %v4120 = vadd.f32 %v3743, %v4119
      %4121 = vmatprep.mubr.bf16.mxu0 0
      %4122 = vmatmul.mubr.bf16.gmra.mxu0 %v3665
      %v4123 = vpop.f32.mrf.mxu0
      %v4124 = vadd.f32 %v3739, %v4123
      %v4125 = vpop.f32.mrf.mxu0
      %v4126 = vadd.f32 %v3743, %v4125
      %v4127 = vpop.f32.mrf.mxu0
      %v4128 = vadd.f32 %v3739, %v4127
      %v4129 = vpop.f32.mrf.mxu0
      %v4130 = vadd.f32 %v3743, %v4129
      %4131 = vmatprep.mubr.bf16.mxu0 0
      %4132 = vmatmul.mubr.bf16.gmra.mxu0 %v3666
      %v4133 = vpop.f32.mrf.mxu0
      %v4134 = vadd.f32 %v3739, %v4133
      %v4135 = vpop.f32.mrf.mxu0
      %v4136 = vadd.f32 %v3743, %v4135
      %v4137 = vpop.f32.mrf.mxu0
      %v4138 = vadd.f32 %v3739, %v4137
      %v4139 = vpop.f32.mrf.mxu0
      %v4140 = vadd.f32 %v3743, %v4139
      %4141 = vmatprep.mubr.bf16.mxu0 0
      %4142 = vmatmul.mubr.bf16.gmra.mxu0 %v3667
      %v4143 = vpop.f32.mrf.mxu0
      %v4144 = vadd.f32 %v3739, %v4143
      %v4145 = vpop.f32.mrf.mxu0
      %v4146 = vadd.f32 %v3743, %v4145
      %v4147 = vpop.f32.mrf.mxu0
      %v4148 = vadd.f32 %v3739, %v4147
      %v4149 = vpop.f32.mrf.mxu0
      %v4150 = vadd.f32 %v3743, %v4149
      %4151 = vmatprep.mubr.bf16.mxu0 0
      %4152 = vmatmul.mubr.bf16.gmra.mxu0 %v3668
      %v4153 = vpop.f32.mrf.mxu0
      %v4154 = vadd.f32 %v3739, %v4153
      %v4155 = vpop.f32.mrf.mxu0
      %v4156 = vadd.f32 %v3743, %v4155
      %v4157 = vpop.f32.mrf.mxu0
      %v4158 = vadd.f32 %v3739, %v4157
      %v4159 = vpop.f32.mrf.mxu0
      %v4160 = vadd.f32 %v3743, %v4159
      %4161 = vmatprep.mubr.bf16.mxu0 0
      %4162 = vmatmul.mubr.bf16.gmra.mxu0 %v3669
      %v4163 = vpop.f32.mrf.mxu0
      %v4164 = vadd.f32 %v3739, %v4163
      %v4165 = vpop.f32.mrf.mxu0
      %v4166 = vadd.f32 %v3743, %v4165
      %v4167 = vpop.f32.mrf.mxu0
      %v4168 = vadd.f32 %v3739, %v4167
      %v4169 = vpop.f32.mrf.mxu0
      %v4170 = vadd.f32 %v3743, %v4169
      %4171 = vdwg.mxu0
      %4172 = vmatprep.subr.bf16.mxu0 %v3999
      %4173 = vmatpush1.bf16.msra.mxu0 %v3998
      %4174 = vmatprep.subr.bf16.mxu0 %v3992
      %4175 = vmatpush1.bf16.msra.mxu0 %v3991
      %4176 = vmatprep.subr.bf16.mxu0 %v3985
      %4177 = vmatpush1.bf16.msra.mxu0 %v3984
      %4178 = vmatprep.subr.bf16.mxu0 %v3978
      %4179 = vmatpush1.bf16.msra.mxu0 %v3977
      %4180 = vmatprep.subr.bf16.mxu0 %v3971
      %4181 = vmatpush1.bf16.msra.mxu0 %v3970
      %4182 = vmatprep.subr.bf16.mxu0 %v3964
      %4183 = vmatpush1.bf16.msra.mxu0 %v3963
      %4184 = vmatprep.subr.bf16.mxu0 %v3957
      %4185 = vmatpush1.bf16.msra.mxu0 %v3956
      %4186 = vmatprep.subr.bf16.mxu0 %v3950
      %4187 = vmatpush1.bf16.msra.mxu0 %v3949
      %4188 = vmatprep.subr.bf16.mxu0 0
      %4189 = vmatpush2.bf16.msra.mxu0 0
      %4190 = vmatprep.subr.bf16.mxu0 0
      %4191 = vmatpush2.bf16.msra.mxu0 0
      %4192 = vmatprep.subr.bf16.mxu0 0
      %4193 = vmatpush2.bf16.msra.mxu0 0
      %4194 = vmatprep.subr.bf16.mxu0 0
      %4195 = vmatpush2.bf16.msra.mxu0 0
      %4196 = vmatprep.subr.bf16.mxu0 0
      %4197 = vmatpush2.bf16.msra.mxu0 0
      %4198 = vmatprep.subr.bf16.mxu0 0
      %4199 = vmatpush2.bf16.msra.mxu0 0
      %4200 = vmatprep.subr.bf16.mxu0 0
      %4201 = vmatpush2.bf16.msra.mxu0 0
      %4202 = vmatprep.subr.bf16.mxu0 0
      %4203 = vmatpush2.bf16.msra.mxu0 0
      %4204 = vmatprep.mubr.bf16.mxu0 0
      %4205 = vmatmul.mubr.bf16.gmra.mxu0 %v3662
      %v4206 = vpop.f32.mrf.mxu0
      %v4207 = vadd.f32 %v3747, %v4206
      %v4208 = vpop.f32.mrf.mxu0
      %v4209 = vadd.f32 %v3751, %v4208
      %v4210 = vpop.f32.mrf.mxu0
      %v4211 = vadd.f32 %v3747, %v4210
      %v4212 = vpop.f32.mrf.mxu0
      %v4213 = vadd.f32 %v3751, %v4212
      %4214 = vmatprep.mubr.bf16.mxu0 0
      %4215 = vmatmul.mubr.bf16.gmra.mxu0 %v3663
      %v4216 = vpop.f32.mrf.mxu0
      %v4217 = vadd.f32 %v3747, %v4216
      %v4218 = vpop.f32.mrf.mxu0
      %v4219 = vadd.f32 %v3751, %v4218
      %v4220 = vpop.f32.mrf.mxu0
      %v4221 = vadd.f32 %v3747, %v4220
      %v4222 = vpop.f32.mrf.mxu0
      %v4223 = vadd.f32 %v3751, %v4222
      %4224 = vmatprep.mubr.bf16.mxu0 0
      %4225 = vmatmul.mubr.bf16.gmra.mxu0 %v3664
      %v4226 = vpop.f32.mrf.mxu0
      %v4227 = vadd.f32 %v3747, %v4226
      %v4228 = vpop.f32.mrf.mxu0
      %v4229 = vadd.f32 %v3751, %v4228
      %v4230 = vpop.f32.mrf.mxu0
      %v4231 = vadd.f32 %v3747, %v4230
      %v4232 = vpop.f32.mrf.mxu0
      %v4233 = vadd.f32 %v3751, %v4232
      %4234 = vmatprep.mubr.bf16.mxu0 0
      %4235 = vmatmul.mubr.bf16.gmra.mxu0 %v3665
      %v4236 = vpop.f32.mrf.mxu0
      %v4237 = vadd.f32 %v3747, %v4236
      %v4238 = vpop.f32.mrf.mxu0
      %v4239 = vadd.f32 %v3751, %v4238
      %v4240 = vpop.f32.mrf.mxu0
      %v4241 = vadd.f32 %v3747, %v4240
      %v4242 = vpop.f32.mrf.mxu0
      %v4243 = vadd.f32 %v3751, %v4242
      %4244 = vmatprep.mubr.bf16.mxu0 0
      %4245 = vmatmul.mubr.bf16.gmra.mxu0 %v3666
      %v4246 = vpop.f32.mrf.mxu0
      %v4247 = vadd.f32 %v3747, %v4246
      %v4248 = vpop.f32.mrf.mxu0
      %v4249 = vadd.f32 %v3751, %v4248
      %v4250 = vpop.f32.mrf.mxu0
      %v4251 = vadd.f32 %v3747, %v4250
      %v4252 = vpop.f32.mrf.mxu0
      %v4253 = vadd.f32 %v3751, %v4252
      %4254 = vmatprep.mubr.bf16.mxu0 0
      %4255 = vmatmul.mubr.bf16.gmra.mxu0 %v3667
      %v4256 = vpop.f32.mrf.mxu0
      %v4257 = vadd.f32 %v3747, %v4256
      %v4258 = vpop.f32.mrf.mxu0
      %v4259 = vadd.f32 %v3751, %v4258
      %v4260 = vpop.f32.mrf.mxu0
      %v4261 = vadd.f32 %v3747, %v4260
      %v4262 = vpop.f32.mrf.mxu0
      %v4263 = vadd.f32 %v3751, %v4262
      %4264 = vmatprep.mubr.bf16.mxu0 0
      %4265 = vmatmul.mubr.bf16.gmra.mxu0 %v3668
      %v4266 = vpop.f32.mrf.mxu0
      %v4267 = vadd.f32 %v3747, %v4266
      %v4268 = vpop.f32.mrf.mxu0
      %v4269 = vadd.f32 %v3751, %v4268
      %v4270 = vpop.f32.mrf.mxu0
      %v4271 = vadd.f32 %v3747, %v4270
      %v4272 = vpop.f32.mrf.mxu0
      %v4273 = vadd.f32 %v3751, %v4272
      %4274 = vmatprep.mubr.bf16.mxu0 0
      %4275 = vmatmul.mubr.bf16.gmra.mxu0 %v3669
      %v4276 = vpop.f32.mrf.mxu0
      %v4277 = vadd.f32 %v3747, %v4276
      %v4278 = vpop.f32.mrf.mxu0
      %v4279 = vadd.f32 %v3751, %v4278
      %v4280 = vpop.f32.mrf.mxu0
      %v4281 = vadd.f32 %v3747, %v4280
      %v4282 = vpop.f32.mrf.mxu0
      %v4283 = vadd.f32 %v3751, %v4282
      %4284 = vdwg.mxu0
      %4285 = vmatprep.subr.bf16.mxu0 %v4001
      %4286 = vmatpush1.bf16.msra.mxu0 %v4000
      %4287 = vmatprep.subr.bf16.mxu0 %v3994
      %4288 = vmatpush1.bf16.msra.mxu0 %v3993
      %4289 = vmatprep.subr.bf16.mxu0 %v3987
      %4290 = vmatpush1.bf16.msra.mxu0 %v3986
      %4291 = vmatprep.subr.bf16.mxu0 %v3980
      %4292 = vmatpush1.bf16.msra.mxu0 %v3979
      %4293 = vmatprep.subr.bf16.mxu0 %v3973
      %4294 = vmatpush1.bf16.msra.mxu0 %v3972
      %4295 = vmatprep.subr.bf16.mxu0 %v3966
      %4296 = vmatpush1.bf16.msra.mxu0 %v3965
      %4297 = vmatprep.subr.bf16.mxu0 %v3959
      %4298 = vmatpush1.bf16.msra.mxu0 %v3958
      %4299 = vmatprep.subr.bf16.mxu0 %v3952
      %4300 = vmatpush1.bf16.msra.mxu0 %v3951
      %4301 = vmatprep.subr.bf16.mxu0 0
      %4302 = vmatpush2.bf16.msra.mxu0 0
      %4303 = vmatprep.subr.bf16.mxu0 0
      %4304 = vmatpush2.bf16.msra.mxu0 0
      %4305 = vmatprep.subr.bf16.mxu0 0
      %4306 = vmatpush2.bf16.msra.mxu0 0
      %4307 = vmatprep.subr.bf16.mxu0 0
      %4308 = vmatpush2.bf16.msra.mxu0 0
      %4309 = vmatprep.subr.bf16.mxu0 0
      %4310 = vmatpush2.bf16.msra.mxu0 0
      %4311 = vmatprep.subr.bf16.mxu0 0
      %4312 = vmatpush2.bf16.msra.mxu0 0
      %4313 = vmatprep.subr.bf16.mxu0 0
      %4314 = vmatpush2.bf16.msra.mxu0 0
      %4315 = vmatprep.subr.bf16.mxu0 0
      %4316 = vmatpush2.bf16.msra.mxu0 0
      %4317 = vmatprep.mubr.bf16.mxu0 0
      %4318 = vmatmul.mubr.bf16.gmra.mxu0 %v3662
      %v4319 = vpop.f32.mrf.mxu0
      %v4320 = vadd.f32 %v3755, %v4319
      %v4321 = vpop.f32.mrf.mxu0
      %v4322 = vadd.f32 %v3759, %v4321
      %v4323 = vpop.f32.mrf.mxu0
      %v4324 = vadd.f32 %v3755, %v4323
      %v4325 = vpop.f32.mrf.mxu0
      %v4326 = vadd.f32 %v3759, %v4325
      %4327 = vmatprep.mubr.bf16.mxu0 0
      %4328 = vmatmul.mubr.bf16.gmra.mxu0 %v3663
      %v4329 = vpop.f32.mrf.mxu0
      %v4330 = vadd.f32 %v3755, %v4329
      %v4331 = vpop.f32.mrf.mxu0
      %v4332 = vadd.f32 %v3759, %v4331
      %v4333 = vpop.f32.mrf.mxu0
      %v4334 = vadd.f32 %v3755, %v4333
      %v4335 = vpop.f32.mrf.mxu0
      %v4336 = vadd.f32 %v3759, %v4335
      %4337 = vmatprep.mubr.bf16.mxu0 0
      %4338 = vmatmul.mubr.bf16.gmra.mxu0 %v3664
      %v4339 = vpop.f32.mrf.mxu0
      %v4340 = vadd.f32 %v3755, %v4339
      %v4341 = vpop.f32.mrf.mxu0
      %v4342 = vadd.f32 %v3759, %v4341
      %v4343 = vpop.f32.mrf.mxu0
      %v4344 = vadd.f32 %v3755, %v4343
      %v4345 = vpop.f32.mrf.mxu0
      %v4346 = vadd.f32 %v3759, %v4345
      %4347 = vmatprep.mubr.bf16.mxu0 0
      %4348 = vmatmul.mubr.bf16.gmra.mxu0 %v3665
      %v4349 = vpop.f32.mrf.mxu0
      %v4350 = vadd.f32 %v3755, %v4349
      %v4351 = vpop.f32.mrf.mxu0
      %v4352 = vadd.f32 %v3759, %v4351
      %v4353 = vpop.f32.mrf.mxu0
      %v4354 = vadd.f32 %v3755, %v4353
      %v4355 = vpop.f32.mrf.mxu0
      %v4356 = vadd.f32 %v3759, %v4355
      %4357 = vmatprep.mubr.bf16.mxu0 0
      %4358 = vmatmul.mubr.bf16.gmra.mxu0 %v3666
      %v4359 = vpop.f32.mrf.mxu0
      %v4360 = vadd.f32 %v3755, %v4359
      %v4361 = vpop.f32.mrf.mxu0
      %v4362 = vadd.f32 %v3759, %v4361
      %v4363 = vpop.f32.mrf.mxu0
      %v4364 = vadd.f32 %v3755, %v4363
      %v4365 = vpop.f32.mrf.mxu0
      %v4366 = vadd.f32 %v3759, %v4365
      %4367 = vmatprep.mubr.bf16.mxu0 0
      %4368 = vmatmul.mubr.bf16.gmra.mxu0 %v3667
      %v4369 = vpop.f32.mrf.mxu0
      %v4370 = vadd.f32 %v3755, %v4369
      %v4371 = vpop.f32.mrf.mxu0
      %v4372 = vadd.f32 %v3759, %v4371
      %v4373 = vpop.f32.mrf.mxu0
      %v4374 = vadd.f32 %v3755, %v4373
      %v4375 = vpop.f32.mrf.mxu0
      %v4376 = vadd.f32 %v3759, %v4375
      %4377 = vmatprep.mubr.bf16.mxu0 0
      %4378 = vmatmul.mubr.bf16.gmra.mxu0 %v3668
      %v4379 = vpop.f32.mrf.mxu0
      %v4380 = vadd.f32 %v3755, %v4379
      %v4381 = vpop.f32.mrf.mxu0
      %v4382 = vadd.f32 %v3759, %v4381
      %v4383 = vpop.f32.mrf.mxu0
      %v4384 = vadd.f32 %v3755, %v4383
      %v4385 = vpop.f32.mrf.mxu0
      %v4386 = vadd.f32 %v3759, %v4385
      %4387 = vmatprep.mubr.bf16.mxu0 0
      %4388 = vmatmul.mubr.bf16.gmra.mxu0 %v3669
      %v4389 = vpop.f32.mrf.mxu0
      %v4390 = vadd.f32 %v3755, %v4389
      %v4391 = vpop.f32.mrf.mxu0
      %v4392 = vadd.f32 %v3759, %v4391
      %v4393 = vpop.f32.mrf.mxu0
      %v4394 = vadd.f32 %v3755, %v4393
      %v4395 = vpop.f32.mrf.mxu0
      %v4396 = vadd.f32 %v3759, %v4395
      %4397 = vdwg.mxu0
      %4398 = vmatprep.subr.bf16.mxu0 0
      %4399 = vmatpush1.bf16.msra.mxu0 %v4002
      %4400 = vmatprep.subr.bf16.mxu0 0
      %4401 = vmatpush1.bf16.msra.mxu0 %v3995
      %4402 = vmatprep.subr.bf16.mxu0 0
      %4403 = vmatpush1.bf16.msra.mxu0 %v3988
      %4404 = vmatprep.subr.bf16.mxu0 0
      %4405 = vmatpush1.bf16.msra.mxu0 %v3981
      %4406 = vmatprep.subr.bf16.mxu0 0
      %4407 = vmatpush1.bf16.msra.mxu0 %v3974
      %4408 = vmatprep.subr.bf16.mxu0 0
      %4409 = vmatpush1.bf16.msra.mxu0 %v3967
      %4410 = vmatprep.subr.bf16.mxu0 0
      %4411 = vmatpush1.bf16.msra.mxu0 %v3960
      %4412 = vmatprep.subr.bf16.mxu0 0
      %4413 = vmatpush1.bf16.msra.mxu0 %v3953
      %4414 = vmatprep.subr.bf16.mxu0 0
      %4415 = vmatpush2.bf16.msra.mxu0 0
      %4416 = vmatprep.subr.bf16.mxu0 0
      %4417 = vmatpush2.bf16.msra.mxu0 0
      %4418 = vmatprep.subr.bf16.mxu0 0
      %4419 = vmatpush2.bf16.msra.mxu0 0
      %4420 = vmatprep.subr.bf16.mxu0 0
      %4421 = vmatpush2.bf16.msra.mxu0 0
      %4422 = vmatprep.subr.bf16.mxu0 0
      %4423 = vmatpush2.bf16.msra.mxu0 0
      %4424 = vmatprep.subr.bf16.mxu0 0
      %4425 = vmatpush2.bf16.msra.mxu0 0
      %4426 = vmatprep.subr.bf16.mxu0 0
      %4427 = vmatpush2.bf16.msra.mxu0 0
      %4428 = vmatprep.subr.bf16.mxu0 0
      %4429 = vmatpush2.bf16.msra.mxu0 0
      %4430 = vmatprep.mubr.bf16.mxu0 0
      %4431 = vmatmul.mubr.bf16.gmra.mxu0 %v3662
      %v4432 = vpop.f32.mrf.mxu0
      %v4433 = vadd.f32 %v3763, %v4432
      %v4434 = vpop.f32.mrf.mxu0
      %v4435 = vpop.f32.mrf.mxu0
      %v4436 = vadd.f32 %v3763, %v4435
      %v4437 = vpop.f32.mrf.mxu0
      %4438 = vmatprep.mubr.bf16.mxu0 0
      %4439 = vmatmul.mubr.bf16.gmra.mxu0 %v3663
      %v4440 = vpop.f32.mrf.mxu0
      %v4441 = vadd.f32 %v3763, %v4440
      %v4442 = vpop.f32.mrf.mxu0
      %v4443 = vpop.f32.mrf.mxu0
      %v4444 = vadd.f32 %v3763, %v4443
      %v4445 = vpop.f32.mrf.mxu0
      %4446 = vmatprep.mubr.bf16.mxu0 0
      %4447 = vmatmul.mubr.bf16.gmra.mxu0 %v3664
      %v4448 = vpop.f32.mrf.mxu0
      %v4449 = vadd.f32 %v3763, %v4448
      %v4450 = vpop.f32.mrf.mxu0
      %v4451 = vpop.f32.mrf.mxu0
      %v4452 = vadd.f32 %v3763, %v4451
      %v4453 = vpop.f32.mrf.mxu0
      %4454 = vmatprep.mubr.bf16.mxu0 0
      %4455 = vmatmul.mubr.bf16.gmra.mxu0 %v3665
      %v4456 = vpop.f32.mrf.mxu0
      %v4457 = vadd.f32 %v3763, %v4456
      %v4458 = vpop.f32.mrf.mxu0
      %v4459 = vpop.f32.mrf.mxu0
      %v4460 = vadd.f32 %v3763, %v4459
      %v4461 = vpop.f32.mrf.mxu0
      %4462 = vmatprep.mubr.bf16.mxu0 0
      %4463 = vmatmul.mubr.bf16.gmra.mxu0 %v3666
      %v4464 = vpop.f32.mrf.mxu0
      %v4465 = vadd.f32 %v3763, %v4464
      %v4466 = vpop.f32.mrf.mxu0
      %v4467 = vpop.f32.mrf.mxu0
      %v4468 = vadd.f32 %v3763, %v4467
      %v4469 = vpop.f32.mrf.mxu0
      %4470 = vmatprep.mubr.bf16.mxu0 0
      %4471 = vmatmul.mubr.bf16.gmra.mxu0 %v3667
      %v4472 = vpop.f32.mrf.mxu0
      %v4473 = vadd.f32 %v3763, %v4472
      %v4474 = vpop.f32.mrf.mxu0
      %v4475 = vpop.f32.mrf.mxu0
      %v4476 = vadd.f32 %v3763, %v4475
      %v4477 = vpop.f32.mrf.mxu0
      %4478 = vmatprep.mubr.bf16.mxu0 0
      %4479 = vmatmul.mubr.bf16.gmra.mxu0 %v3668
      %v4480 = vpop.f32.mrf.mxu0
      %v4481 = vadd.f32 %v3763, %v4480
      %v4482 = vpop.f32.mrf.mxu0
      %v4483 = vpop.f32.mrf.mxu0
      %v4484 = vadd.f32 %v3763, %v4483
      %v4485 = vpop.f32.mrf.mxu0
      %4486 = vmatprep.mubr.bf16.mxu0 0
      %4487 = vmatmul.mubr.bf16.gmra.mxu0 %v3669
      %v4488 = vpop.f32.mrf.mxu0
      %v4489 = vadd.f32 %v3763, %v4488
      %v4490 = vpop.f32.mrf.mxu0
      %v4491 = vpop.f32.mrf.mxu0
      %v4492 = vadd.f32 %v3763, %v4491
      %v4493 = vpop.f32.mrf.mxu0
      %4494 = vdwg.mxu0
      %v4495 = vpack.c.bf16 %v4098, %v4094
      %v4496 = vpack.c.bf16 %v4100, %v4096
      %v4497 = vpack.c.bf16 %v4211, %v4207
      %v4498 = vpack.c.bf16 %v4213, %v4209
      %v4499 = vpack.c.bf16 %v4324, %v4320
      %v4500 = vpack.c.bf16 %v4326, %v4322
      %v4501 = vpack.c.bf16 %v4436, %v4433
      %v4502 = vpack.c.bf16 %v4108, %v4104
      %v4503 = vpack.c.bf16 %v4110, %v4106
      %v4504 = vpack.c.bf16 %v4221, %v4217
      %v4505 = vpack.c.bf16 %v4223, %v4219
      %v4506 = vpack.c.bf16 %v4334, %v4330
      %v4507 = vpack.c.bf16 %v4336, %v4332
      %v4508 = vpack.c.bf16 %v4444, %v4441
      %v4509 = vpack.c.bf16 %v4118, %v4114
      %v4510 = vpack.c.bf16 %v4120, %v4116
      %v4511 = vpack.c.bf16 %v4231, %v4227
      %v4512 = vpack.c.bf16 %v4233, %v4229
      %v4513 = vpack.c.bf16 %v4344, %v4340
      %v4514 = vpack.c.bf16 %v4346, %v4342
      %v4515 = vpack.c.bf16 %v4452, %v4449
      %v4516 = vpack.c.bf16 %v4128, %v4124
      %v4517 = vpack.c.bf16 %v4130, %v4126
      %v4518 = vpack.c.bf16 %v4241, %v4237
      %v4519 = vpack.c.bf16 %v4243, %v4239
      %v4520 = vpack.c.bf16 %v4354, %v4350
      %v4521 = vpack.c.bf16 %v4356, %v4352
      %v4522 = vpack.c.bf16 %v4460, %v4457
      %v4523 = vpack.c.bf16 %v4138, %v4134
      %v4524 = vpack.c.bf16 %v4140, %v4136
      %v4525 = vpack.c.bf16 %v4251, %v4247
      %v4526 = vpack.c.bf16 %v4253, %v4249
      %v4527 = vpack.c.bf16 %v4364, %v4360
      %v4528 = vpack.c.bf16 %v4366, %v4362
      %v4529 = vpack.c.bf16 %v4468, %v4465
      %v4530 = vpack.c.bf16 %v4148, %v4144
      %v4531 = vpack.c.bf16 %v4150, %v4146
      %v4532 = vpack.c.bf16 %v4261, %v4257
      %v4533 = vpack.c.bf16 %v4263, %v4259
      %v4534 = vpack.c.bf16 %v4374, %v4370
      %v4535 = vpack.c.bf16 %v4376, %v4372
      %v4536 = vpack.c.bf16 %v4476, %v4473
      %v4537 = vpack.c.bf16 %v4158, %v4154
      %v4538 = vpack.c.bf16 %v4160, %v4156
      %v4539 = vpack.c.bf16 %v4271, %v4267
      %v4540 = vpack.c.bf16 %v4273, %v4269
      %v4541 = vpack.c.bf16 %v4384, %v4380
      %v4542 = vpack.c.bf16 %v4386, %v4382
      %v4543 = vpack.c.bf16 %v4484, %v4481
      %v4544 = vpack.c.bf16 %v4168, %v4164
      %v4545 = vpack.c.bf16 %v4170, %v4166
      %v4546 = vpack.c.bf16 %v4281, %v4277
      %v4547 = vpack.c.bf16 %v4283, %v4279
      %v4548 = vpack.c.bf16 %v4394, %v4390
      %v4549 = vpack.c.bf16 %v4396, %v4392
      %v4550 = vpack.c.bf16 %v4492, %v4489
      %v4607 = vunpack.c.l.b16 %v4495
      %v4608 = vunpack.c.l.b16 %v4496
      %v4609 = vunpack.c.l.b16 %v4497
      %v4610 = vunpack.c.l.b16 %v4498
      %v4611 = vunpack.c.l.b16 %v4499
      %v4612 = vunpack.c.l.b16 %v4500
      %v4613 = vunpack.c.l.b16 %v4501
      %v4614 = vunpack.c.h.b16 %v4495
      %v4615 = vunpack.c.h.b16 %v4496
      %v4616 = vunpack.c.h.b16 %v4497
      %v4617 = vunpack.c.h.b16 %v4498
      %v4618 = vunpack.c.h.b16 %v4499
      %v4619 = vunpack.c.h.b16 %v4500
      %v4620 = vunpack.c.h.b16 %v4501
      %v4621 = vunpack.c.l.b16 %v4502
      %v4622 = vunpack.c.l.b16 %v4503
      %v4623 = vunpack.c.l.b16 %v4504
      %v4624 = vunpack.c.l.b16 %v4505
      %v4625 = vunpack.c.l.b16 %v4506
      %v4626 = vunpack.c.l.b16 %v4507
      %v4627 = vunpack.c.l.b16 %v4508
      %v4628 = vunpack.c.h.b16 %v4502
      %v4629 = vunpack.c.h.b16 %v4503
      %v4630 = vunpack.c.h.b16 %v4504
      %v4631 = vunpack.c.h.b16 %v4505
      %v4632 = vunpack.c.h.b16 %v4506
      %v4633 = vunpack.c.h.b16 %v4507
      %v4634 = vunpack.c.h.b16 %v4508
      %v4635 = vunpack.c.l.b16 %v4509
      %v4636 = vunpack.c.l.b16 %v4510
      %v4637 = vunpack.c.l.b16 %v4511
      %v4638 = vunpack.c.l.b16 %v4512
      %v4639 = vunpack.c.l.b16 %v4513
      %v4640 = vunpack.c.l.b16 %v4514
      %v4641 = vunpack.c.l.b16 %v4515
      %v4642 = vunpack.c.h.b16 %v4509
      %v4643 = vunpack.c.h.b16 %v4510
      %v4644 = vunpack.c.h.b16 %v4511
      %v4645 = vunpack.c.h.b16 %v4512
      %v4646 = vunpack.c.h.b16 %v4513
      %v4647 = vunpack.c.h.b16 %v4514
      %v4648 = vunpack.c.h.b16 %v4515
      %v4649 = vunpack.c.l.b16 %v4516
      %v4650 = vunpack.c.l.b16 %v4517
      %v4651 = vunpack.c.l.b16 %v4518
      %v4652 = vunpack.c.l.b16 %v4519
      %v4653 = vunpack.c.l.b16 %v4520
      %v4654 = vunpack.c.l.b16 %v4521
      %v4655 = vunpack.c.l.b16 %v4522
      %v4656 = vunpack.c.h.b16 %v4516
      %v4657 = vunpack.c.h.b16 %v4517
      %v4658 = vunpack.c.h.b16 %v4518
      %v4659 = vunpack.c.h.b16 %v4519
      %v4660 = vunpack.c.h.b16 %v4520
      %v4661 = vunpack.c.h.b16 %v4521
      %v4662 = vunpack.c.h.b16 %v4522
      %v4663 = vunpack.c.l.b16 %v4523
      %v4664 = vunpack.c.l.b16 %v4524
      %v4665 = vunpack.c.l.b16 %v4525
      %v4666 = vunpack.c.l.b16 %v4526
      %v4667 = vunpack.c.l.b16 %v4527
      %v4668 = vunpack.c.l.b16 %v4528
      %v4669 = vunpack.c.l.b16 %v4529
      %v4670 = vunpack.c.h.b16 %v4523
      %v4671 = vunpack.c.h.b16 %v4524
      %v4672 = vunpack.c.h.b16 %v4525
      %v4673 = vunpack.c.h.b16 %v4526
      %v4674 = vunpack.c.h.b16 %v4527
      %v4675 = vunpack.c.h.b16 %v4528
      %v4676 = vunpack.c.h.b16 %v4529
      %v4677 = vunpack.c.l.b16 %v4530
      %v4678 = vunpack.c.l.b16 %v4531
      %v4679 = vunpack.c.l.b16 %v4532
      %v4680 = vunpack.c.l.b16 %v4533
      %v4681 = vunpack.c.l.b16 %v4534
      %v4682 = vunpack.c.l.b16 %v4535
      %v4683 = vunpack.c.l.b16 %v4536
      %v4684 = vunpack.c.h.b16 %v4530
      %v4685 = vunpack.c.h.b16 %v4531
      %v4686 = vunpack.c.h.b16 %v4532
      %v4687 = vunpack.c.h.b16 %v4533
      %v4688 = vunpack.c.h.b16 %v4534
      %v4689 = vunpack.c.h.b16 %v4535
      %v4690 = vunpack.c.h.b16 %v4536
      %v4691 = vunpack.c.l.b16 %v4537
      %v4692 = vunpack.c.l.b16 %v4538
      %v4693 = vunpack.c.l.b16 %v4539
      %v4694 = vunpack.c.l.b16 %v4540
      %v4695 = vunpack.c.l.b16 %v4541
      %v4696 = vunpack.c.l.b16 %v4542
      %v4697 = vunpack.c.l.b16 %v4543
      %v4698 = vunpack.c.h.b16 %v4537
      %v4699 = vunpack.c.h.b16 %v4538
      %v4700 = vunpack.c.h.b16 %v4539
      %v4701 = vunpack.c.h.b16 %v4540
      %v4702 = vunpack.c.h.b16 %v4541
      %v4703 = vunpack.c.h.b16 %v4542
      %v4704 = vunpack.c.h.b16 %v4543
      %v4705 = vunpack.c.l.b16 %v4544
      %v4706 = vunpack.c.l.b16 %v4545
      %v4707 = vunpack.c.l.b16 %v4546
      %v4708 = vunpack.c.l.b16 %v4547
      %v4709 = vunpack.c.l.b16 %v4548
      %v4710 = vunpack.c.l.b16 %v4549
      %v4711 = vunpack.c.l.b16 %v4550
      %v4712 = vunpack.c.h.b16 %v4544
      %v4713 = vunpack.c.h.b16 %v4545
      %v4714 = vunpack.c.h.b16 %v4546
      %v4715 = vunpack.c.h.b16 %v4547
      %v4716 = vunpack.c.h.b16 %v4548
      %v4717 = vunpack.c.h.b16 %v4549
      %v4718 = vunpack.c.h.b16 %v4550
      %v4719 = vpack.c.b16 %v4608, %v4607
      %v4720 = vpack.c.b16 %v4610, %v4609
      %v4721 = vpack.c.b16 %v4612, %v4611
      %v4722 = vpack.c.b16 %v4613, %v4613
      %v4723 = vpack.c.b16 %v4615, %v4614
      %v4724 = vpack.c.b16 %v4617, %v4616
      %v4725 = vpack.c.b16 %v4619, %v4618
      %v4726 = vpack.c.b16 %v4620, %v4620
      %v4727 = vpack.c.b16 %v4622, %v4621
      %v4728 = vpack.c.b16 %v4624, %v4623
      %v4729 = vpack.c.b16 %v4626, %v4625
      %v4730 = vpack.c.b16 %v4627, %v4627
      %v4731 = vpack.c.b16 %v4629, %v4628
      %v4732 = vpack.c.b16 %v4631, %v4630
      %v4733 = vpack.c.b16 %v4633, %v4632
      %v4734 = vpack.c.b16 %v4634, %v4634
      %v4735 = vpack.c.b16 %v4636, %v4635
      %v4736 = vpack.c.b16 %v4638, %v4637
      %v4737 = vpack.c.b16 %v4640, %v4639
      %v4738 = vpack.c.b16 %v4641, %v4641
      %v4739 = vpack.c.b16 %v4643, %v4642
      %v4740 = vpack.c.b16 %v4645, %v4644
      %v4741 = vpack.c.b16 %v4647, %v4646
      %v4742 = vpack.c.b16 %v4648, %v4648
      %v4743 = vpack.c.b16 %v4650, %v4649
      %v4744 = vpack.c.b16 %v4652, %v4651
      %v4745 = vpack.c.b16 %v4654, %v4653
      %v4746 = vpack.c.b16 %v4655, %v4655
      %v4747 = vpack.c.b16 %v4657, %v4656
      %v4748 = vpack.c.b16 %v4659, %v4658
      %v4749 = vpack.c.b16 %v4661, %v4660
      %v4750 = vpack.c.b16 %v4662, %v4662
      %v4751 = vpack.c.b16 %v4664, %v4663
      %v4752 = vpack.c.b16 %v4666, %v4665
      %v4753 = vpack.c.b16 %v4668, %v4667
      %v4754 = vpack.c.b16 %v4669, %v4669
      %v4755 = vpack.c.b16 %v4671, %v4670
      %v4756 = vpack.c.b16 %v4673, %v4672
      %v4757 = vpack.c.b16 %v4675, %v4674
      %v4758 = vpack.c.b16 %v4676, %v4676
      %v4759 = vpack.c.b16 %v4678, %v4677
      %v4760 = vpack.c.b16 %v4680, %v4679
      %v4761 = vpack.c.b16 %v4682, %v4681
      %v4762 = vpack.c.b16 %v4683, %v4683
      %v4763 = vpack.c.b16 %v4685, %v4684
      %v4764 = vpack.c.b16 %v4687, %v4686
      %v4765 = vpack.c.b16 %v4689, %v4688
      %v4766 = vpack.c.b16 %v4690, %v4690
      %v4767 = vpack.c.b16 %v4692, %v4691
      %v4768 = vpack.c.b16 %v4694, %v4693
      %v4769 = vpack.c.b16 %v4696, %v4695
      %v4770 = vpack.c.b16 %v4697, %v4697
      %v4771 = vpack.c.b16 %v4699, %v4698
      %v4772 = vpack.c.b16 %v4701, %v4700
      %v4773 = vpack.c.b16 %v4703, %v4702
      %v4774 = vpack.c.b16 %v4704, %v4704
      %v4775 = vpack.c.b16 %v4706, %v4705
      %v4776 = vpack.c.b16 %v4708, %v4707
      %v4777 = vpack.c.b16 %v4710, %v4709
      %v4778 = vpack.c.b16 %v4711, %v4711
      %v4779 = vpack.c.b16 %v4713, %v4712
      %v4780 = vpack.c.b16 %v4715, %v4714
      %v4781 = vpack.c.b16 %v4717, %v4716
      %v4782 = vpack.c.b16 %v4718, %v4718
      %4847 = vst [vmem:[%s426] sm:$0xff] %v4719
      %4848 = vst [vmem:[%s426 + $0x8] sm:$0xff] %v4720
      %4849 = vst [vmem:[%s426 + $0x10] sm:$0xff] %v4721
      %4850 = vst [vmem:[%s426 + $0x18] sm:$0xf] %v4722
      %4851 = vst [vmem:[%s426 + $0x1c] sm:$0xff] %v4723
      %4852 = vst [vmem:[%s426 + $0x24] sm:$0xff] %v4724
      %4853 = vst [vmem:[%s426 + $0x2c] sm:$0xff] %v4725
      %4854 = vst [vmem:[%s426 + $0x34] sm:$0xf] %v4726
      %4855 = vst [vmem:[%s426 + $0x38] sm:$0xff] %v4727
      %4856 = vst [vmem:[%s426 + $0x40] sm:$0xff] %v4728
      %4857 = vst [vmem:[%s426 + $0x48] sm:$0xff] %v4729
      %4858 = vst [vmem:[%s426 + $0x50] sm:$0xf] %v4730
      %4859 = vst [vmem:[%s426 + $0x54] sm:$0xff] %v4731
      %4860 = vst [vmem:[%s426 + $0x5c] sm:$0xff] %v4732
      %4861 = vst [vmem:[%s426 + $0x64] sm:$0xff] %v4733
      %4862 = vst [vmem:[%s426 + $0x6c] sm:$0xf] %v4734
      %4863 = vst [vmem:[%s426 + $0x70] sm:$0xff] %v4735
      %4864 = vst [vmem:[%s426 + $0x78] sm:$0xff] %v4736
      %4865 = vst [vmem:[%s426 + $0x80] sm:$0xff] %v4737
      %4866 = vst [vmem:[%s426 + $0x88] sm:$0xf] %v4738
      %4867 = vst [vmem:[%s426 + $0x8c] sm:$0xff] %v4739
      %4868 = vst [vmem:[%s426 + $0x94] sm:$0xff] %v4740
      %4869 = vst [vmem:[%s426 + $0x9c] sm:$0xff] %v4741
      %4870 = vst [vmem:[%s426 + $0xa4] sm:$0xf] %v4742
      %4871 = vst [vmem:[%s426 + $0xa8] sm:$0xff] %v4743
      %4872 = vst [vmem:[%s426 + $0xb0] sm:$0xff] %v4744
      %4873 = vst [vmem:[%s426 + $0xb8] sm:$0xff] %v4745
      %4874 = vst [vmem:[%s426 + $0xc0] sm:$0xf] %v4746
      %4875 = vst [vmem:[%s426 + $0xc4] sm:$0xff] %v4747
      %4876 = vst [vmem:[%s426 + $0xcc] sm:$0xff] %v4748
      %4877 = vst [vmem:[%s426 + $0xd4] sm:$0xff] %v4749
      %4878 = vst [vmem:[%s426 + $0xdc] sm:$0xf] %v4750
      %4879 = vst [vmem:[%s426 + $0xe0] sm:$0xff] %v4751
      %4880 = vst [vmem:[%s426 + $0xe8] sm:$0xff] %v4752
      %4881 = vst [vmem:[%s426 + $0xf0] sm:$0xff] %v4753
      %4882 = vst [vmem:[%s426 + $0xf8] sm:$0xf] %v4754
      %4883 = vst [vmem:[%s426 + $0xfc] sm:$0xff] %v4755
      %4884 = vst [vmem:[%s426 + $0x104] sm:$0xff] %v4756
      %4885 = vst [vmem:[%s426 + $0x10c] sm:$0xff] %v4757
      %4886 = vst [vmem:[%s426 + $0x114] sm:$0xf] %v4758
      %4887 = vst [vmem:[%s426 + $0x118] sm:$0xff] %v4759
      %4888 = vst [vmem:[%s426 + $0x120] sm:$0xff] %v4760
      %4889 = vst [vmem:[%s426 + $0x128] sm:$0xff] %v4761
      %4890 = vst [vmem:[%s426 + $0x130] sm:$0xf] %v4762
      %4891 = vst [vmem:[%s426 + $0x134] sm:$0xff] %v4763
      %4892 = vst [vmem:[%s426 + $0x13c] sm:$0xff] %v4764
      %4893 = vst [vmem:[%s426 + $0x144] sm:$0xff] %v4765
      %4894 = vst [vmem:[%s426 + $0x14c] sm:$0xf] %v4766
      %4895 = vst [vmem:[%s426 + $0x150] sm:$0xff] %v4767
      %4896 = vst [vmem:[%s426 + $0x158] sm:$0xff] %v4768
      %4897 = vst [vmem:[%s426 + $0x160] sm:$0xff] %v4769
      %4898 = vst [vmem:[%s426 + $0x168] sm:$0xf] %v4770
      %4899 = vst [vmem:[%s426 + $0x16c] sm:$0xff] %v4771
      %4900 = vst [vmem:[%s426 + $0x174] sm:$0xff] %v4772
      %4901 = vst [vmem:[%s426 + $0x17c] sm:$0xff] %v4773
      %4902 = vst [vmem:[%s426 + $0x184] sm:$0xf] %v4774
      %4903 = vst [vmem:[%s426 + $0x188] sm:$0xff] %v4775
      %4904 = vst [vmem:[%s426 + $0x190] sm:$0xff] %v4776
      %4905 = vst [vmem:[%s426 + $0x198] sm:$0xff] %v4777
      %4906 = vst [vmem:[%s426 + $0x1a0] sm:$0xf] %v4778
      %4907 = vst [vmem:[%s426 + $0x1a4] sm:$0xff] %v4779
      %4908 = vst [vmem:[%s426 + $0x1ac] sm:$0xff] %v4780
      %4909 = vst [vmem:[%s426 + $0x1b4] sm:$0xff] %v4781
      %4910 = vst [vmem:[%s426 + $0x1bc] sm:$0xf] %v4782
      %s4911 = smul.u32 16, %s29
      %p4912 = scmp.lt.s32.totalorder %s4911, 63
      %s4913 = scalar_select %p4912, %s4911, 63
      %s4914 = smul.addr %s4913, 7
      %s4915 = smul.addr %s4914, 4
      %s4916 = scalar_lea.vmem %s13, %s4915
      // Predicated region
      $region69: #{generic_block_forward.2} parent=67 // pred_check
        %p4917 = pneg %p304
      $region70: #{generic_block_forward.2} parent=67 // pred_check_branch
        %4919 = sbr.rel (%p4917) target = $region72
      $region71: #{generic_block_forward.2} parent=67 // pred_region
        %s4920 = smul.u32 16, %s29
      $region72: #{generic_block_forward.2} parent=67 // pred_fallthru
        _
    $region68: #{generic_block_forward.2} parent=5 // pred_fallthru
      _
    %p4921 = scmp.le.s32.totalorder 2, %s24
    // Predicated region
    $region73: #{generic_block_forward.2} parent=5 // pred_check
      %p4922 = pneg %p4921
    $region74: #{generic_block_forward.2} parent=5 // pred_check_branch
      %4924 = sbr.rel (%p4922) target = $region76
    $region75: #{generic_block_forward.2} parent=5 // pred_region
      %s4925 = ssub.s32 %s24, 2
      // Predicated region
      $region77: #{generic_block_forward.2} parent=75 // pred_check
        %p4926 = pneg %p310
      $region78: #{generic_block_forward.2} parent=75 // pred_check_branch
        %4928 = sbr.rel (%p4926) target = $region80
      $region79: #{generic_block_forward.2} parent=75 // pred_region
        %s4929 = smul.u32 16, %s30
        %p4930 = scmp.lt.s32.totalorder %s4929, 63
        %s4931 = scalar_select %p4930, %s4929, 63
        %s4932 = smul.addr %s4931, 7
        %s4933 = smul.addr %s4932, 4
        %s4934 = scalar_lea.vmem %s13, %s4933
      $region80: #{generic_block_forward.2} parent=75 // pred_fallthru
        _
    $region76: #{generic_block_forward.2} parent=5 // pred_fallthru
      _
  $region6: #{generic_block_forward.2} parent=0 // loop_footer
    %s28 = sadd.s32 1, %s24
  $region7: #{generic_block_forward.2} parent=0 // loop_footer_branch
    %23 = sbr.rel target = $region3
  $region8: #{generic_block_forward.2} parent=0 // loop_exit
    _

</llo_original>
